<compile_context>
chip_gen: v5e
topology: v5e:2x2
jax: 0.10.0
libtpu: 0.0.40
codegen_flags: <defaults>
</compile_context>

<pallas_src>
from functools import partial

import numpy as np
import jax
import jax.numpy as jnp
from jax.experimental import pallas as pl
from jax.experimental.pallas import tpu as pltpu


# ----------------------------------------------------------------------------
# Pallas kernel: G cutouts per grid step; x resident in a VMEM scratch.
# ----------------------------------------------------------------------------
def cutout_pool_kernel(x_hbm, ay_ref, axt_ref, o_ref, x_vmem, copy_sem,
                       *, B, H, W, P, G):
    # x_hbm  : (B*H, W)    bf16, left in HBM (memory_space=pl.ANY)
    # ay_ref : (G, P, H)   bf16  row-averaging matrices for this step's cutouts
    # axt_ref: (G, W, P)   bf16  col-averaging matrices (transposed)
    # o_ref  : (G, B*P, P) f32
    # x_vmem : (B*H, W)    bf16 scratch — single-buffered resident copy of x
    # copy_sem: scalar DMA semaphore

    # Copy x HBM -> VMEM exactly once; scratch persists across grid steps.
    # (Requires the cutout grid axis to be "arbitrary", i.e. sequential.)
    @pl.when(pl.program_id(0) == 0)
    def _():
        cp = pltpu.make_async_copy(x_hbm, x_vmem, copy_sem)
        cp.start()
        cp.wait()

    xv = x_vmem[...]                                       # (B*H, W) bf16

    for g in range(G):                                     # static unroll
        axt = axt_ref[g]                                   # (W, P) bf16
        ay = ay_ref[g]                                     # (P, H) bf16

        # Stage 1 (dominant flops): one flat 2-D MXU matmul, B folded into M.
        # t[(b,h), q] = sum_w x[(b,h), w] * AxT[w, q]
        t = jnp.dot(xv, axt, preferred_element_type=jnp.float32)   # (B*H, P)
        t = t.reshape(B, H, P).astype(jnp.bfloat16)

        # Stage 2 (W/P-times fewer flops): per-b contraction over H.
        # out[b, p, q] = sum_h Ay[p, h] * t[b, h, q]
        out_g = jnp.einsum("ph,bhq->bpq", ay, t,
                           preferred_element_type=jnp.float32)     # (B, P, P)

        # Minor dim unchanged -> free reshape; rows folded for denser stores.
        o_ref[g] = out_g.reshape(B * P, P).astype(o_ref.dtype)


# ----------------------------------------------------------------------------
# Glue: build adaptive-avg-pool-of-crop matrices (deterministic randomness).
# ----------------------------------------------------------------------------
def _adaptive_matrix(size, offset, total, out_size):
    """Weights of adaptive_avg_pool1d over crop [offset, offset+size) of a
    length-`total` axis, producing `out_size` outputs.  Shape (out_size, total)."""
    size = jnp.maximum(size, 1)  # guard against degenerate crops
    i = jnp.arange(out_size)
    start = jnp.floor(i * size / out_size).astype(jnp.int32)
    end = jnp.ceil((i + 1) * size / out_size).astype(jnp.int32)
    pos = jnp.arange(total)
    mask = (pos[None, :] >= offset + start[:, None]) & (
        pos[None, :] < offset + end[:, None]
    )
    denom = jnp.maximum(end - start, 1).astype(jnp.float32)  # NaN guard
    return mask.astype(jnp.float32) / denom[:, None]


def build_pool_matrices(key, H, W, cut_size, cutn):
    """Mimics MakeCutouts' random crop sampling; returns Ay (cutn, P, H) and
    AxT (cutn, W, P)."""
    max_size = min(H, W)
    keys = jax.random.split(key, cutn * 3)
    ays, axts = [], []
    for cn in range(cutn):
        if cn > cutn - cutn // 4:
            # full-image cutout
            size_y, size_x = H, W
            oy = jnp.int32(0)
            ox = jnp.int32(0)
        else:
            k1, k2, k3 = keys[3 * cn], keys[3 * cn + 1], keys[3 * cn + 2]
            frac = jnp.clip(
                0.8 + 0.3 * jax.random.normal(k1, ()),
                cut_size / max_size,
                1.0,
            )
            size = jnp.floor(max_size * frac).astype(jnp.int32)
            size = jnp.clip(size, 1, max_size)
            oy = jax.random.randint(k2, (), 0, H - size + 1)
            ox = jax.random.randint(k3, (), 0, W - size + 1)
            size_y = size
            size_x = size
        ays.append(_adaptive_matrix(size_y, oy, H, cut_size))
        axts.append(_adaptive_matrix(size_x, ox, W, cut_size).T)
    return jnp.stack(ays), jnp.stack(axts)


# ----------------------------------------------------------------------------
# Wrapper calling pallas_call.
# ----------------------------------------------------------------------------
def make_cutouts(x, Ay, AxT, cut_size, cuts_per_step=5):
    N, C, H, W = x.shape
    cutn = Ay.shape[0]
    P = cut_size
    B = N * C
    G = cuts_per_step
    assert cutn % G == 0, "cuts_per_step must divide cutn"

    # bf16 at the kernel boundary; f32 accumulation inside.
    xf = x.reshape(B * H, W).astype(jnp.bfloat16)
    Ay16 = Ay.astype(jnp.bfloat16)     # (cutn, P, H)
    AxT16 = AxT.astype(jnp.bfloat16)   # (cutn, W, P)

    flops = 2 * cutn * B * H * P * (W + P)
    bytes_accessed = (xf.size * 2 + Ay16.size * 2 + AxT16.size * 2
                      + cutn * B * P * P * 4)

    out = pl.pallas_call(
        partial(cutout_pool_kernel, B=B, H=H, W=W, P=P, G=G),
        out_shape=jax.ShapeDtypeStruct((cutn, B * P, P), jnp.float32),
        grid_spec=pltpu.PrefetchScalarGridSpec(
            num_scalar_prefetch=0,
            grid=(cutn // G,),
            in_specs=[
                # x stays in HBM; copied once into a single VMEM buffer.
                pl.BlockSpec(memory_space=pl.ANY),
                pl.BlockSpec((G, P, H), lambda i: (i, 0, 0)),
                pl.BlockSpec((G, W, P), lambda i: (i, 0, 0)),
            ],
            out_specs=pl.BlockSpec((G, B * P, P), lambda i: (i, 0, 0)),
            scratch_shapes=[
                pltpu.VMEM((B * H, W), jnp.bfloat16),
                pltpu.SemaphoreType.DMA(()),
            ],
        ),
        compiler_params=pltpu.CompilerParams(
            dimension_semantics=("arbitrary",),
            vmem_limit_bytes=32 * 1024 * 1024,
        ),
        cost_estimate=pl.CostEstimate(
            flops=flops, transcendentals=0, bytes_accessed=bytes_accessed),
    )(xf, Ay16, AxT16)

    # (cutn, B*P, P) -> (cutn, N, C, P, P) -> (cutn*N, C, P, P)
    # == torch.cat(cutouts) on NCHW tensors.
    return out.reshape(cutn, N, C, P, P).reshape(cutn * N, C, P, P)


# ----------------------------------------------------------------------------
# Pure-JAX reference (same math + same bf16 casts, no Pallas).
# ----------------------------------------------------------------------------
def make_cutouts_ref(x, Ay, AxT, cut_size):
    N, C, H, W = x.shape
    P = cut_size
    cutn = Ay.shape[0]
    B = N * C
    xf = x.reshape(B, H, W).astype(jnp.bfloat16)
    t = jnp.einsum("bhw,kwq->kbhq", xf, AxT.astype(jnp.bfloat16),
                   preferred_element_type=jnp.float32).astype(jnp.bfloat16)
    out = jnp.einsum("kph,kbhq->kbpq", Ay.astype(jnp.bfloat16), t,
                     preferred_element_type=jnp.float32)
    return out.reshape(cutn * N, C, P, P)


if __name__ == "__main__":
    cutn = 10
    cut_size = 8
    N, C, H, W = 2, 4, 16, 16  # NCHW, square image (shear branch not taken)

    key = jax.random.PRNGKey(0)
    kx, kcrop = jax.random.split(key)
    x = jax.random.normal(kx, (N, C, H, W), dtype=jnp.float32)

    Ay, AxT = build_pool_matrices(kcrop, H, W, cut_size, cutn)

    out = make_cutouts(x, Ay, AxT, cut_size, cuts_per_step=5)
    out = jax.block_until_ready(out)

    ref = make_cutouts_ref(x, Ay, AxT, cut_size)
    assert out.shape == (cutn * N, C, cut_size, cut_size), out.shape
    # bf16 inputs / intermediate -> loosened tolerance vs. the f32-exact check.
    np.testing.assert_allclose(np.asarray(out), np.asarray(ref, dtype=np.float32),
                               rtol=2e-2, atol=2e-2)

    print("KERNEL_OK")
</pallas_src>

<mosaic_0001>
module attributes {stable_mosaic.version = 11 : i64} {
  func.func @cutout_pool_kernel(%arg0: i32, %arg1: memref<128x16xbf16, #tpu.memory_space<any>>, %arg2: memref<5x8x16xbf16, #tpu.memory_space<vmem>>, %arg3: memref<5x16x8xbf16, #tpu.memory_space<vmem>>, %arg4: memref<5x64x8xf32, #tpu.memory_space<vmem>>, %arg5: memref<128x16xbf16, #tpu.memory_space<vmem>>, %arg6: memref<!tpu.dma_semaphore, #tpu.memory_space<semaphore_mem>>) attributes {dimension_semantics = [#tpu.dimension_semantics<arbitrary>], iteration_bounds = array<i64: 2>, scalar_prefetch = 0 : i64, scratch_operands = 2 : i64, tpu.core_type = #tpu.core_type<tc>, window_params = [{}, {transform_indices = @transform_1, window_bounds = array<i64: 5, 8, 16>}, {transform_indices = @transform_2, window_bounds = array<i64: 5, 16, 8>}, {transform_indices = @transform_3, window_bounds = array<i64: 5, 64, 8>}]} {
    %c0_i32 = arith.constant 0 : i32
    %0 = arith.cmpi eq, %arg0, %c0_i32 : i32
    %1 = arith.extui %0 : i1 to i32
    %c0_i32_0 = arith.constant 0 : i32
    %2 = arith.cmpi ne, %1, %c0_i32_0 : i32
    scf.if %2 {
      tpu.enqueue_dma source(%arg1 : memref<128x16xbf16, #tpu.memory_space<any>>) target(%arg5 : memref<128x16xbf16, #tpu.memory_space<vmem>>) target_semaphore(%arg6 : memref<!tpu.dma_semaphore, #tpu.memory_space<semaphore_mem>>)
      tpu.wait_dma2 semaphore(%arg6 : memref<!tpu.dma_semaphore, #tpu.memory_space<semaphore_mem>>) src(%arg1 : memref<128x16xbf16, #tpu.memory_space<any>>) dst(%arg5 : memref<128x16xbf16, #tpu.memory_space<vmem>>)
    } else {
    }
    %c0 = arith.constant 0 : index
    %c0_1 = arith.constant 0 : index
    %3 = vector.load %arg5[%c0, %c0_1] : memref<128x16xbf16, #tpu.memory_space<vmem>>, vector<128x16xbf16>
    %c0_2 = arith.constant 0 : index
    %c0_3 = arith.constant 0 : index
    %c0_4 = arith.constant 0 : index
    %4 = vector.load %arg3[%c0_2, %c0_3, %c0_4] : memref<5x16x8xbf16, #tpu.memory_space<vmem>>, vector<1x16x8xbf16>
    %5 = vector.shape_cast %4 : vector<1x16x8xbf16> to vector<16x8xbf16>
    %c0_5 = arith.constant 0 : index
    %c0_6 = arith.constant 0 : index
    %c0_7 = arith.constant 0 : index
    %6 = vector.load %arg2[%c0_5, %c0_6, %c0_7] : memref<5x8x16xbf16, #tpu.memory_space<vmem>>, vector<1x8x16xbf16>
    %7 = vector.shape_cast %6 : vector<1x8x16xbf16> to vector<8x16xbf16>
    %cst = arith.constant dense<0.000000e+00> : vector<128x8xf32>
    %8 = tpu.matmul %3, %5, %cst {dimension_numbers = #tpu.dot_dimension_numbers<[1], [0], [0], [1], [0, 0, 1, 1], [], []>} : vector<128x16xbf16>, vector<16x8xbf16>, vector<128x8xf32> -> vector<128x8xf32>
    %9 = vector.shape_cast %8 : vector<128x8xf32> to vector<8x16x8xf32>
    %10 = arith.truncf %9 : vector<8x16x8xf32> to vector<8x16x8xbf16>
    "tpu.trace_start"() <{level = 10 : i32, message = "ph,bhq->bpq"}> : () -> ()
    %cst_8 = arith.constant dense<0.000000e+00> : vector<8x8x8xf32>
    %11 = tpu.matmul %10, %7, %cst_8 {dimension_numbers = #tpu.dot_dimension_numbers<[1], [1], [0, 2], [0], [0, 0, 0, 2, 1, 0], [], []>} : vector<8x16x8xbf16>, vector<8x16xbf16>, vector<8x8x8xf32> -> vector<8x8x8xf32>
    %12 = tpu.transpose %11, [0, 2, 1] : vector<8x8x8xf32> -> vector<8x8x8xf32>
    "tpu.trace_stop"() : () -> ()
    %13 = vector.shape_cast %12 : vector<8x8x8xf32> to vector<64x8xf32>
    %c0_9 = arith.constant 0 : index
    %c0_10 = arith.constant 0 : index
    %c0_11 = arith.constant 0 : index
    %14 = vector.load %arg4[%c0_9, %c0_10, %c0_11] : memref<5x64x8xf32, #tpu.memory_space<vmem>>, vector<1x64x8xf32>
    %15 = vector.shape_cast %14 : vector<1x64x8xf32> to vector<64x8xf32>
    %16 = vector.shape_cast %13 : vector<64x8xf32> to vector<1x64x8xf32>
    tpu.vector_store %arg4[%c0_9, %c0_10, %c0_11], %16 {strides = array<i32>} : memref<5x64x8xf32, #tpu.memory_space<vmem>>, vector<1x64x8xf32>,
    %c1 = arith.constant 1 : index
    %c0_12 = arith.constant 0 : index
    %c0_13 = arith.constant 0 : index
    %17 = vector.load %arg3[%c1, %c0_12, %c0_13] : memref<5x16x8xbf16, #tpu.memory_space<vmem>>, vector<1x16x8xbf16>
    %18 = vector.shape_cast %17 : vector<1x16x8xbf16> to vector<16x8xbf16>
    %c1_14 = arith.constant 1 : index
    %c0_15 = arith.constant 0 : index
    %c0_16 = arith.constant 0 : index
    %19 = vector.load %arg2[%c1_14, %c0_15, %c0_16] : memref<5x8x16xbf16, #tpu.memory_space<vmem>>, vector<1x8x16xbf16>
    %20 = vector.shape_cast %19 : vector<1x8x16xbf16> to vector<8x16xbf16>
    %cst_17 = arith.constant dense<0.000000e+00> : vector<128x8xf32>
    %21 = tpu.matmul %3, %18, %cst_17 {dimension_numbers = #tpu.dot_dimension_numbers<[1], [0], [0], [1], [0, 0, 1, 1], [], []>} : vector<128x16xbf16>, vector<16x8xbf16>, vector<128x8xf32> -> vector<128x8xf32>
    %22 = vector.shape_cast %21 : vector<128x8xf32> to vector<8x16x8xf32>
    %23 = arith.truncf %22 : vector<8x16x8xf32> to vector<8x16x8xbf16>
    "tpu.trace_start"() <{level = 10 : i32, message = "ph,bhq->bpq"}> : () -> ()
    %cst_18 = arith.constant dense<0.000000e+00> : vector<8x8x8xf32>
    %24 = tpu.matmul %23, %20, %cst_18 {dimension_numbers = #tpu.dot_dimension_numbers<[1], [1], [0, 2], [0], [0, 0, 0, 2, 1, 0], [], []>} : vector<8x16x8xbf16>, vector<8x16xbf16>, vector<8x8x8xf32> -> vector<8x8x8xf32>
    %25 = tpu.transpose %24, [0, 2, 1] : vector<8x8x8xf32> -> vector<8x8x8xf32>
    "tpu.trace_stop"() : () -> ()
    %26 = vector.shape_cast %25 : vector<8x8x8xf32> to vector<64x8xf32>
    %c1_19 = arith.constant 1 : index
    %c0_20 = arith.constant 0 : index
    %c0_21 = arith.constant 0 : index
    %27 = vector.load %arg4[%c1_19, %c0_20, %c0_21] : memref<5x64x8xf32, #tpu.memory_space<vmem>>, vector<1x64x8xf32>
    %28 = vector.shape_cast %27 : vector<1x64x8xf32> to vector<64x8xf32>
    %29 = vector.shape_cast %26 : vector<64x8xf32> to vector<1x64x8xf32>
    tpu.vector_store %arg4[%c1_19, %c0_20, %c0_21], %29 {strides = array<i32>} : memref<5x64x8xf32, #tpu.memory_space<vmem>>, vector<1x64x8xf32>,
    %c2 = arith.constant 2 : index
    %c0_22 = arith.constant 0 : index
    %c0_23 = arith.constant 0 : index
    %30 = vector.load %arg3[%c2, %c0_22, %c0_23] : memref<5x16x8xbf16, #tpu.memory_space<vmem>>, vector<1x16x8xbf16>
    %31 = vector.shape_cast %30 : vector<1x16x8xbf16> to vector<16x8xbf16>
    %c2_24 = arith.constant 2 : index
    %c0_25 = arith.constant 0 : index
    %c0_26 = arith.constant 0 : index
    %32 = vector.load %arg2[%c2_24, %c0_25, %c0_26] : memref<5x8x16xbf16, #tpu.memory_space<vmem>>, vector<1x8x16xbf16>
    %33 = vector.shape_cast %32 : vector<1x8x16xbf16> to vector<8x16xbf16>
    %cst_27 = arith.constant dense<0.000000e+00> : vector<128x8xf32>
    %34 = tpu.matmul %3, %31, %cst_27 {dimension_numbers = #tpu.dot_dimension_numbers<[1], [0], [0], [1], [0, 0, 1, 1], [], []>} : vector<128x16xbf16>, vector<16x8xbf16>, vector<128x8xf32> -> vector<128x8xf32>
    %35 = vector.shape_cast %34 : vector<128x8xf32> to vector<8x16x8xf32>
    %36 = arith.truncf %35 : vector<8x16x8xf32> to vector<8x16x8xbf16>
    "tpu.trace_start"() <{level = 10 : i32, message = "ph,bhq->bpq"}> : () -> ()
    %cst_28 = arith.constant dense<0.000000e+00> : vector<8x8x8xf32>
    %37 = tpu.matmul %36, %33, %cst_28 {dimension_numbers = #tpu.dot_dimension_numbers<[1], [1], [0, 2], [0], [0, 0, 0, 2, 1, 0], [], []>} : vector<8x16x8xbf16>, vector<8x16xbf16>, vector<8x8x8xf32> -> vector<8x8x8xf32>
    %38 = tpu.transpose %37, [0, 2, 1] : vector<8x8x8xf32> -> vector<8x8x8xf32>
    "tpu.trace_stop"() : () -> ()
    %39 = vector.shape_cast %38 : vector<8x8x8xf32> to vector<64x8xf32>
    %c2_29 = arith.constant 2 : index
    %c0_30 = arith.constant 0 : index
    %c0_31 = arith.constant 0 : index
    %40 = vector.load %arg4[%c2_29, %c0_30, %c0_31] : memref<5x64x8xf32, #tpu.memory_space<vmem>>, vector<1x64x8xf32>
    %41 = vector.shape_cast %40 : vector<1x64x8xf32> to vector<64x8xf32>
    %42 = vector.shape_cast %39 : vector<64x8xf32> to vector<1x64x8xf32>
    tpu.vector_store %arg4[%c2_29, %c0_30, %c0_31], %42 {strides = array<i32>} : memref<5x64x8xf32, #tpu.memory_space<vmem>>, vector<1x64x8xf32>,
    %c3 = arith.constant 3 : index
    %c0_32 = arith.constant 0 : index
    %c0_33 = arith.constant 0 : index
    %43 = vector.load %arg3[%c3, %c0_32, %c0_33] : memref<5x16x8xbf16, #tpu.memory_space<vmem>>, vector<1x16x8xbf16>
    %44 = vector.shape_cast %43 : vector<1x16x8xbf16> to vector<16x8xbf16>
    %c3_34 = arith.constant 3 : index
    %c0_35 = arith.constant 0 : index
    %c0_36 = arith.constant 0 : index
    %45 = vector.load %arg2[%c3_34, %c0_35, %c0_36] : memref<5x8x16xbf16, #tpu.memory_space<vmem>>, vector<1x8x16xbf16>
    %46 = vector.shape_cast %45 : vector<1x8x16xbf16> to vector<8x16xbf16>
    %cst_37 = arith.constant dense<0.000000e+00> : vector<128x8xf32>
    %47 = tpu.matmul %3, %44, %cst_37 {dimension_numbers = #tpu.dot_dimension_numbers<[1], [0], [0], [1], [0, 0, 1, 1], [], []>} : vector<128x16xbf16>, vector<16x8xbf16>, vector<128x8xf32> -> vector<128x8xf32>
    %48 = vector.shape_cast %47 : vector<128x8xf32> to vector<8x16x8xf32>
    %49 = arith.truncf %48 : vector<8x16x8xf32> to vector<8x16x8xbf16>
    "tpu.trace_start"() <{level = 10 : i32, message = "ph,bhq->bpq"}> : () -> ()
    %cst_38 = arith.constant dense<0.000000e+00> : vector<8x8x8xf32>
    %50 = tpu.matmul %49, %46, %cst_38 {dimension_numbers = #tpu.dot_dimension_numbers<[1], [1], [0, 2], [0], [0, 0, 0, 2, 1, 0], [], []>} : vector<8x16x8xbf16>, vector<8x16xbf16>, vector<8x8x8xf32> -> vector<8x8x8xf32>
    %51 = tpu.transpose %50, [0, 2, 1] : vector<8x8x8xf32> -> vector<8x8x8xf32>
    "tpu.trace_stop"() : () -> ()
    %52 = vector.shape_cast %51 : vector<8x8x8xf32> to vector<64x8xf32>
    %c3_39 = arith.constant 3 : index
    %c0_40 = arith.constant 0 : index
    %c0_41 = arith.constant 0 : index
    %53 = vector.load %arg4[%c3_39, %c0_40, %c0_41] : memref<5x64x8xf32, #tpu.memory_space<vmem>>, vector<1x64x8xf32>
    %54 = vector.shape_cast %53 : vector<1x64x8xf32> to vector<64x8xf32>
    %55 = vector.shape_cast %52 : vector<64x8xf32> to vector<1x64x8xf32>
    tpu.vector_store %arg4[%c3_39, %c0_40, %c0_41], %55 {strides = array<i32>} : memref<5x64x8xf32, #tpu.memory_space<vmem>>, vector<1x64x8xf32>,
    %c4 = arith.constant 4 : index
    %c0_42 = arith.constant 0 : index
    %c0_43 = arith.constant 0 : index
    %56 = vector.load %arg3[%c4, %c0_42, %c0_43] : memref<5x16x8xbf16, #tpu.memory_space<vmem>>, vector<1x16x8xbf16>
    %57 = vector.shape_cast %56 : vector<1x16x8xbf16> to vector<16x8xbf16>
    %c4_44 = arith.constant 4 : index
    %c0_45 = arith.constant 0 : index
    %c0_46 = arith.constant 0 : index
    %58 = vector.load %arg2[%c4_44, %c0_45, %c0_46] : memref<5x8x16xbf16, #tpu.memory_space<vmem>>, vector<1x8x16xbf16>
    %59 = vector.shape_cast %58 : vector<1x8x16xbf16> to vector<8x16xbf16>
    %cst_47 = arith.constant dense<0.000000e+00> : vector<128x8xf32>
    %60 = tpu.matmul %3, %57, %cst_47 {dimension_numbers = #tpu.dot_dimension_numbers<[1], [0], [0], [1], [0, 0, 1, 1], [], []>} : vector<128x16xbf16>, vector<16x8xbf16>, vector<128x8xf32> -> vector<128x8xf32>
    %61 = vector.shape_cast %60 : vector<128x8xf32> to vector<8x16x8xf32>
    %62 = arith.truncf %61 : vector<8x16x8xf32> to vector<8x16x8xbf16>
    "tpu.trace_start"() <{level = 10 : i32, message = "ph,bhq->bpq"}> : () -> ()
    %cst_48 = arith.constant dense<0.000000e+00> : vector<8x8x8xf32>
    %63 = tpu.matmul %62, %59, %cst_48 {dimension_numbers = #tpu.dot_dimension_numbers<[1], [1], [0, 2], [0], [0, 0, 0, 2, 1, 0], [], []>} : vector<8x16x8xbf16>, vector<8x16xbf16>, vector<8x8x8xf32> -> vector<8x8x8xf32>
    %64 = tpu.transpose %63, [0, 2, 1] : vector<8x8x8xf32> -> vector<8x8x8xf32>
    "tpu.trace_stop"() : () -> ()
    %65 = vector.shape_cast %64 : vector<8x8x8xf32> to vector<64x8xf32>
    %c4_49 = arith.constant 4 : index
    %c0_50 = arith.constant 0 : index
    %c0_51 = arith.constant 0 : index
    %66 = vector.load %arg4[%c4_49, %c0_50, %c0_51] : memref<5x64x8xf32, #tpu.memory_space<vmem>>, vector<1x64x8xf32>
    %67 = vector.shape_cast %66 : vector<1x64x8xf32> to vector<64x8xf32>
    %68 = vector.shape_cast %65 : vector<64x8xf32> to vector<1x64x8xf32>
    tpu.vector_store %arg4[%c4_49, %c0_50, %c0_51], %68 {strides = array<i32>} : memref<5x64x8xf32, #tpu.memory_space<vmem>>, vector<1x64x8xf32>,
    return
  }
  func.func @transform_1(%arg0: i32) -> (i32, i32, i32) {
    %c0_i32 = arith.constant 0 : i32
    %c0_i32_0 = arith.constant 0 : i32
    %c0_i32_1 = arith.constant 0 : i32
    return %arg0, %c0_i32, %c0_i32_0 : i32, i32, i32
  }
  func.func @transform_2(%arg0: i32) -> (i32, i32, i32) {
    %c0_i32 = arith.constant 0 : i32
    %c0_i32_0 = arith.constant 0 : i32
    %c0_i32_1 = arith.constant 0 : i32
    return %arg0, %c0_i32, %c0_i32_0 : i32, i32, i32
  }
  func.func @transform_3(%arg0: i32) -> (i32, i32, i32) {
    %c0_i32 = arith.constant 0 : i32
    %c0_i32_0 = arith.constant 0 : i32
    %c0_i32_1 = arith.constant 0 : i32
    return %arg0, %c0_i32, %c0_i32_0 : i32, i32, i32
  }
}

</mosaic_0001>

<llo_original>
// kernel: tpu_custom_call.1
$region0: #{tpu_custom_call.1}
  #allocation0 [shape = 'u32[]', space=smem, size = 0x4, offset = 0x4, fixed_abs, tag = 'smem constant byte address 0x4 - core index']
  #allocation1 [shape = 'u32[72,128]{1,0:T(1,128)}', space=vmem, size = 0x9000, scoped, tag = 'internal scratch']
  #allocation2 [shape = 'bf16[128,16]{1,0:T(8,128)(2,1)}', space=vmem, size = 0x8000, scoped, tag = 'scratch operand']
  #allocation3 [shape = 's32[1]{0}', space=sflag, size = 0x4, scoped, tag = 'scratch operand']
  #allocation4 [shape = 's32[]', space=sflag, size = 0x4, offset = 0, fixed_abs, tag = 'sflag constant byte address 0x0 - dummy sync flag']
  %s0 = inlined_call_operand.vmem [shape: bf16[128,16], index: 0, kind: input, shape index: {}]
  %s1 = inlined_call_operand.vmem [shape: bf16[10,8,16], index: 1, kind: input, shape index: {}]
  %s2 = inlined_call_operand.vmem [shape: bf16[10,16,8], index: 2, kind: input, shape index: {}]
  %s3 = inlined_call_operand.vmem [shape: f32[10,64,8], index: 3, kind: output, shape index: {}]
  %s4 = sld [smem:[#allocation0]]
  $region64: #{tpu_custom_call.1} parent=0
    _
  %s6 = ssub.s32 1, %s4
  %s7 = scalar_select 0, %s6, %s4
  loop: start=0, step=1, limit=4
  $region2: #{tpu_custom_call.1} parent=0 // loop_pre_header
    _
  $region3: #{tpu_custom_call.1} parent=0 // loop_header
    %s9 = sphi 0, %s13
    %p10 = scmp.ge.s32.totalorder %s9, 4
    %s19 = sphi 0, %s21
    %s22 = sphi 0, %s19
    %s23 = sphi 0, %s22
    %s39 = sphi 0, %s23
    %s45 = sphi 0, %s47
    %s48 = sphi 0, %s45
    %s49 = sphi 0, %s48
    %s65 = sphi 0, %s49
    %s71 = sphi 0, %s73
    %s74 = sphi 0, %s71
    %s75 = sphi 0, %s74
    %s91 = sphi 0, %s75
  $region4: #{tpu_custom_call.1} parent=0 // loop_header_branch
    %12 = sbr.rel (%p10) target = $region8
  $region5: #{tpu_custom_call.1} parent=0 // loop_body
    %s14 = ssub.s32 %s9, 1
    %s15 = ssub.s32 %s9, 2
    %s16 = sadd.s32 %s9, 1
    %s17 = ssub.s32 %s9, %s16
    %p18 = scmp.eq.s32.totalorder %s17, 0
    %s20 = sadd.s32 %s19, 1
    %s21 = scalar_select %p18, %s19, %s20
    %p24 = pneg %p18
    %p25 = scmp.eq.s32.totalorder %s9, 1
    %p26 = por %p24, %p25
    %p27 = scmp.ne.s32.totalorder %s19, %s22
    %p28 = scmp.eq.s32.totalorder %s9, 0
    %p29 = por %p27, %p28
    %p30 = scmp.ne.s32.totalorder %s19, %s22
    %p31 = scmp.eq.s32.totalorder %s14, 1
    %p32 = por %p30, %p31
    %p33 = scmp.ne.s32.totalorder %s22, %s23
    %p34 = scmp.eq.s32.totalorder %s14, 0
    %p35 = por %p33, %p34
    %p36 = scmp.ne.s32.totalorder %s22, %s23
    %p37 = scmp.eq.s32.totalorder %s15, 1
    %p38 = por %p36, %p37
    %p40 = scmp.ne.s32.totalorder %s23, %s39
    %p41 = scmp.eq.s32.totalorder %s15, 0
    %p42 = por %p40, %p41
    %s43 = ssub.s32 %s9, %s16
    %p44 = scmp.eq.s32.totalorder %s43, 0
    %s46 = sadd.s32 %s45, 1
    %s47 = scalar_select %p44, %s45, %s46
    %p50 = pneg %p44
    %p51 = scmp.eq.s32.totalorder %s9, 1
    %p52 = por %p50, %p51
    %p53 = scmp.ne.s32.totalorder %s45, %s48
    %p54 = scmp.eq.s32.totalorder %s9, 0
    %p55 = por %p53, %p54
    %p56 = scmp.ne.s32.totalorder %s45, %s48
    %p57 = scmp.eq.s32.totalorder %s14, 1
    %p58 = por %p56, %p57
    %p59 = scmp.ne.s32.totalorder %s48, %s49
    %p60 = scmp.eq.s32.totalorder %s14, 0
    %p61 = por %p59, %p60
    %p62 = scmp.ne.s32.totalorder %s48, %s49
    %p63 = scmp.eq.s32.totalorder %s15, 1
    %p64 = por %p62, %p63
    %p66 = scmp.ne.s32.totalorder %s49, %s65
    %p67 = scmp.eq.s32.totalorder %s15, 0
    %p68 = por %p66, %p67
    %s69 = ssub.s32 %s9, %s16
    %p70 = scmp.eq.s32.totalorder %s69, 0
    %s72 = sadd.s32 %s71, 1
    %s73 = scalar_select %p70, %s71, %s72
    %p76 = pneg %p70
    %p77 = scmp.eq.s32.totalorder %s9, 1
    %p78 = por %p76, %p77
    %p79 = scmp.ne.s32.totalorder %s71, %s74
    %p80 = scmp.eq.s32.totalorder %s9, 0
    %p81 = por %p79, %p80
    %p82 = scmp.ne.s32.totalorder %s71, %s74
    %p83 = scmp.eq.s32.totalorder %s14, 1
    %p84 = por %p82, %p83
    %p85 = scmp.ne.s32.totalorder %s74, %s75
    %p86 = scmp.eq.s32.totalorder %s14, 0
    %p87 = por %p85, %p86
    %p88 = scmp.ne.s32.totalorder %s74, %s75
    %p89 = scmp.eq.s32.totalorder %s15, 1
    %p90 = por %p88, %p89
    %p92 = scmp.ne.s32.totalorder %s75, %s91
    %p93 = scmp.eq.s32.totalorder %s15, 0
    %p94 = por %p92, %p93
    %p95 = scmp.le.s32.totalorder 1, %s9
    %p96 = scmp.lt.s32.totalorder %s9, 3
    %p97 = pnand %p95, %p96
    %p98 = pneg %p97
    // Predicated region
    $region9: #{tpu_custom_call.1} parent=5 // pred_check
      _
    $region10: #{tpu_custom_call.1} parent=5 // pred_check_branch
      %100 = sbr.rel (%p97) target = $region12
    $region11: #{tpu_custom_call.1} parent=5 // pred_region
      %s101 = ssub.s32 %s9, 1
    $region12: #{tpu_custom_call.1} parent=5 // pred_fallthru
      _
    %p102 = scmp.lt.s32.totalorder %s9, 2
    // Predicated region
    $region13: #{tpu_custom_call.1} parent=5 // pred_check
      %p103 = pneg %p102
    $region14: #{tpu_custom_call.1} parent=5 // pred_check_branch
      %105 = sbr.rel (%p103) target = $region16
    $region15: #{tpu_custom_call.1} parent=5 // pred_region
      // Predicated region
      $region17: #{tpu_custom_call.1} parent=15 // pred_check
        %p106 = pneg %p29
      $region18: #{tpu_custom_call.1} parent=15 // pred_check_branch
        %108 = sbr.rel (%p106) target = $region20
      $region19: #{tpu_custom_call.1} parent=15 // pred_region
        %s109 = smul.u32 5, %s9
        %p110 = scmp.lt.s32.totalorder %s109, 9
        %s111 = scalar_select %p110, %s109, 9
        %s112 = smul.addr %s111, 4
        %s113 = scalar_lea.vmem %s1, %s112
        %s114 = smul.u32 5, %s9
      $region20: #{tpu_custom_call.1} parent=15 // pred_fallthru
        _
      // Predicated region
      $region21: #{tpu_custom_call.1} parent=15 // pred_check
        %p115 = pneg %p55
      $region22: #{tpu_custom_call.1} parent=15 // pred_check_branch
        %117 = sbr.rel (%p115) target = $region24
      $region23: #{tpu_custom_call.1} parent=15 // pred_region
        %s118 = smul.u32 5, %s9
        %p119 = scmp.lt.s32.totalorder %s118, 9
        %s120 = scalar_select %p119, %s118, 9
        %s121 = smul.addr %s120, 2
        %s122 = smul.addr %s121, 4
        %s123 = scalar_lea.vmem %s2, %s122
        %s124 = smul.u32 5, %s9
      $region24: #{tpu_custom_call.1} parent=15 // pred_fallthru
        _
    $region16: #{tpu_custom_call.1} parent=5 // pred_fallthru
      _
    %p125 = scmp.le.s32.totalorder 1, %s9
    %p126 = scmp.lt.s32.totalorder %s9, 3
    %p127 = pnand %p125, %p126
    %p128 = pneg %p127
    // Predicated region
    $region25: #{tpu_custom_call.1} parent=5 // pred_check
      _
    $region26: #{tpu_custom_call.1} parent=5 // pred_check_branch
      %130 = sbr.rel (%p127) target = $region28
    $region27: #{tpu_custom_call.1} parent=5 // pred_region
      %s131 = ssub.s32 %s9, 1
      %s132 = smul.u32 5, %s14
      %p133 = scmp.lt.s32.totalorder %s132, 9
      %s134 = scalar_select %p133, %s132, 9
      %s135 = smul.addr %s134, 4
      %s136 = scalar_lea.vmem %s1, %s135
      %p137 = pneg %p35
      %p138 = pneg %p32
      %s139 = smul.u32 5, %s14
      %p140 = scmp.lt.s32.totalorder %s139, 9
      %s141 = scalar_select %p140, %s139, 9
      %s142 = smul.addr %s141, 2
      %s143 = smul.addr %s142, 4
      %s144 = scalar_lea.vmem %s2, %s143
      %p145 = pneg %p61
      %p146 = pneg %p58
      %p147 = pneg %p87
      %p148 = pneg %p84
      %s149 = smul.u32 5, %s14
      %p150 = scmp.lt.s32.totalorder %s149, 9
      %s151 = scalar_select %p150, %s149, 9
      %s152 = smul.addr %s151, 8
      %s153 = smul.addr %s152, 8
      %s154 = scalar_lea.vmem %s3, %s153
      %s155 = smul.u32 5, %s14
      %p156 = scmp.lt.s32.totalorder %s155, 9
      %s157 = scalar_select %p156, %s155, 9
      %s158 = smul.addr %s157, 4
      %s159 = scalar_lea.vmem %s1, %s158
      %s160 = smul.u32 5, %s14
      %s161 = smul.u32 5, %s14
      %p162 = scmp.lt.s32.totalorder %s161, 9
      %s163 = scalar_select %p162, %s161, 9
      %s164 = smul.addr %s163, 2
      %s165 = smul.addr %s164, 4
      %s166 = scalar_lea.vmem %s2, %s165
      %s167 = smul.u32 5, %s14
      %s168 = smul.u32 5, %s14
      %p169 = scmp.lt.s32.totalorder %s168, 9
      %s170 = scalar_select %p169, %s168, 9
      %s171 = smul.addr %s170, 8
      %s172 = smul.addr %s171, 8
      %s173 = scalar_lea.vmem %s3, %s172
      %s174 = smul.u32 5, %s14
      %p176 = scmp.eq.s32.totalorder %s14, 0
      // Predicated region
      $region29: #{tpu_custom_call.1} parent=27 // pred_check
        %p177 = pneg %p176
      $region30: #{tpu_custom_call.1} parent=27 // pred_check_branch
        %179 = sbr.rel (%p177) target = $region32
      $region31: #{tpu_custom_call.1} parent=27 // pred_region
        // Predicated region
        $region33: #{tpu_custom_call.1} parent=31 // pred_check
          _
        $region34: #{tpu_custom_call.1} parent=31 // pred_check_branch
          %181 = sbr.rel (0) target = $region36
        $region35: #{tpu_custom_call.1} parent=31 // pred_region
          loop: start=0, step=1, limit=1
          $region37: #{tpu_custom_call.1} parent=35 // loop_pre_header
            _
          $region38: #{tpu_custom_call.1} parent=35 // loop_header
            %s183 = sphi 0, %s187
            %p184 = scmp.ge.s32.totalorder %s183, 1
            %s188 = sphi %s0, %s0
            %s189 = sphi [#allocation2], [#allocation2]
          $region39: #{tpu_custom_call.1} parent=35 // loop_header_branch
            %186 = sbr.rel (%p184) target = $region43
          $region40: #{tpu_custom_call.1} parent=35 // loop_body
            %v190 = vld [vmem:[%s188] sm:$0xff]
            %191 = vst [vmem:[%s189] sm:$0xff] %v190
            %v192 = vld [vmem:[%s188 + $0x8] sm:$0xff]
            %193 = vst [vmem:[%s189 + $0x8] sm:$0xff] %v192
            %v194 = vld [vmem:[%s188 + $0x10] sm:$0xff]
            %195 = vst [vmem:[%s189 + $0x10] sm:$0xff] %v194
            %v196 = vld [vmem:[%s188 + $0x18] sm:$0xff]
            %197 = vst [vmem:[%s189 + $0x18] sm:$0xff] %v196
            %v198 = vld [vmem:[%s188 + $0x20] sm:$0xff]
            %199 = vst [vmem:[%s189 + $0x20] sm:$0xff] %v198
            %v200 = vld [vmem:[%s188 + $0x28] sm:$0xff]
            %201 = vst [vmem:[%s189 + $0x28] sm:$0xff] %v200
            %v202 = vld [vmem:[%s188 + $0x30] sm:$0xff]
            %203 = vst [vmem:[%s189 + $0x30] sm:$0xff] %v202
            %v204 = vld [vmem:[%s188 + $0x38] sm:$0xff]
            %205 = vst [vmem:[%s189 + $0x38] sm:$0xff] %v204
          $region41: #{tpu_custom_call.1} parent=35 // loop_footer
            %s187 = sadd.s32 1, %s183
          $region42: #{tpu_custom_call.1} parent=35 // loop_footer_branch
            %182 = sbr.rel target = $region38
          $region43: #{tpu_custom_call.1} parent=35 // loop_exit
            _
        $region36: #{tpu_custom_call.1} parent=31 // pred_fallthru
          _
        // Predicated region
        $region44: #{tpu_custom_call.1} parent=31 // pred_check
          _
        $region45: #{tpu_custom_call.1} parent=31 // pred_check_branch
          %207 = sbr.rel target = $region47
        $region46: #{tpu_custom_call.1} parent=31 // pred_region
          _
        $region47: #{tpu_custom_call.1} parent=31 // pred_fallthru
          _
        // Predicated region
        $region48: #{tpu_custom_call.1} parent=31 // pred_check
          _
        $region49: #{tpu_custom_call.1} parent=31 // pred_check_branch
          %210 = sbr.rel (0) target = $region51
        $region50: #{tpu_custom_call.1} parent=31 // pred_region
          %211 = vsyncadd [#allocation3], 1024
        $region51: #{tpu_custom_call.1} parent=31 // pred_fallthru
          _
        %s212 = smul.u32 4, 16
        %s213 = smul.u32 %s212, 1
        %s214 = sshll.u32 %s213, 4
        %215 = dma.done [#allocation3], %s214
      $region32: #{tpu_custom_call.1} parent=27 // pred_fallthru
        _
      %v216 = vld [vmem:[#allocation2] sm:$0xf]
      %v217 = vld [vmem:[#allocation2 + $0x4] sm:$0xf]
      %v218 = vld [vmem:[#allocation2 + $0x8] sm:$0xf]
      %v219 = vld [vmem:[#allocation2 + $0xc] sm:$0xf]
      %v220 = vld [vmem:[#allocation2 + $0x10] sm:$0xf]
      %v221 = vld [vmem:[#allocation2 + $0x14] sm:$0xf]
      %v222 = vld [vmem:[#allocation2 + $0x18] sm:$0xf]
      %v223 = vld [vmem:[#allocation2 + $0x1c] sm:$0xf]
      %v224 = vld [vmem:[#allocation2 + $0x20] sm:$0xf]
      %v225 = vld [vmem:[#allocation2 + $0x24] sm:$0xf]
      %v226 = vld [vmem:[#allocation2 + $0x28] sm:$0xf]
      %v227 = vld [vmem:[#allocation2 + $0x2c] sm:$0xf]
      %v228 = vld [vmem:[#allocation2 + $0x30] sm:$0xf]
      %v229 = vld [vmem:[#allocation2 + $0x34] sm:$0xf]
      %v230 = vld [vmem:[#allocation2 + $0x38] sm:$0xf]
      %v231 = vld [vmem:[#allocation2 + $0x3c] sm:$0xf]
      %v232 = vld [vmem:[%s166] sm:$0xf]
      %v233 = vld [vmem:[%s166 + $0x4] sm:$0xf]
      %v234 = vld [vmem:[%s159] sm:$0xf]
      %v251 = vunpack.c.l.b16 %v216
      %v252 = vunpack.c.l.b16 %v217
      %v253 = vunpack.c.l.b16 %v218
      %v254 = vunpack.c.l.b16 %v219
      %v255 = vunpack.c.l.b16 %v220
      %v256 = vunpack.c.l.b16 %v221
      %v257 = vunpack.c.l.b16 %v222
      %v258 = vunpack.c.l.b16 %v223
      %v259 = vunpack.c.l.b16 %v224
      %v260 = vunpack.c.l.b16 %v225
      %v261 = vunpack.c.l.b16 %v226
      %v262 = vunpack.c.l.b16 %v227
      %v263 = vunpack.c.l.b16 %v228
      %v264 = vunpack.c.l.b16 %v229
      %v265 = vunpack.c.l.b16 %v230
      %v266 = vunpack.c.l.b16 %v231
      %v267 = vpack.c.b16 %v252, %v251
      %v268 = vpack.c.b16 %v254, %v253
      %v269 = vpack.c.b16 %v256, %v255
      %v270 = vpack.c.b16 %v258, %v257
      %v271 = vpack.c.b16 %v260, %v259
      %v272 = vpack.c.b16 %v262, %v261
      %v273 = vpack.c.b16 %v264, %v263
      %v274 = vpack.c.b16 %v266, %v265
      %v277 = vunpack.c.l.b16 %v232
      %v278 = vunpack.c.l.b16 %v233
      %v279 = vpack.c.b16 %v278, %v277
      %vm281 = vcmask 130048
      %v283 = vsel %vm281, %v267, 0
      %v286 = vsel %vm281, %v268, 0
      %v289 = vsel %vm281, %v269, 0
      %v292 = vsel %vm281, %v270, 0
      %v295 = vsel %vm281, %v271, 0
      %v298 = vsel %vm281, %v272, 0
      %v301 = vsel %vm281, %v273, 0
      %v304 = vsel %vm281, %v274, 0
      %306 = vmatpush.bf16.msra.mxu0 0
      %307 = vmatpush.bf16.msra.mxu0 0
      %308 = vmatpush.bf16.msra.mxu0 0
      %309 = vmatpush.bf16.msra.mxu0 0
      %310 = vmatpush.bf16.msra.mxu0 0
      %311 = vmatpush.bf16.msra.mxu0 0
      %312 = vmatpush.bf16.msra.mxu0 0
      %313 = vmatpush.bf16.msra.mxu0 %v279
      %314 = vmatmul.bf16.gmra.mxu0 %v283
      %v315 = vpop.f32.mrf.mxu0
      %v316 = vadd.f32 0.0, %v315
      %v317 = vpop.f32.mrf.mxu0
      %v318 = vadd.f32 0.0, %v317
      %319 = vmatmul.bf16.gmra.mxu0 %v286
      %v320 = vpop.f32.mrf.mxu0
      %v321 = vadd.f32 0.0, %v320
      %v322 = vpop.f32.mrf.mxu0
      %v323 = vadd.f32 0.0, %v322
      %324 = vmatmul.bf16.gmra.mxu0 %v289
      %v325 = vpop.f32.mrf.mxu0
      %v326 = vadd.f32 0.0, %v325
      %v327 = vpop.f32.mrf.mxu0
      %v328 = vadd.f32 0.0, %v327
      %329 = vmatmul.bf16.gmra.mxu0 %v292
      %v330 = vpop.f32.mrf.mxu0
      %v331 = vadd.f32 0.0, %v330
      %v332 = vpop.f32.mrf.mxu0
      %v333 = vadd.f32 0.0, %v332
      %334 = vmatmul.bf16.gmra.mxu0 %v295
      %v335 = vpop.f32.mrf.mxu0
      %v336 = vadd.f32 0.0, %v335
      %v337 = vpop.f32.mrf.mxu0
      %v338 = vadd.f32 0.0, %v337
      %339 = vmatmul.bf16.gmra.mxu0 %v298
      %v340 = vpop.f32.mrf.mxu0
      %v341 = vadd.f32 0.0, %v340
      %v342 = vpop.f32.mrf.mxu0
      %v343 = vadd.f32 0.0, %v342
      %344 = vmatmul.bf16.gmra.mxu0 %v301
      %v345 = vpop.f32.mrf.mxu0
      %v346 = vadd.f32 0.0, %v345
      %v347 = vpop.f32.mrf.mxu0
      %v348 = vadd.f32 0.0, %v347
      %349 = vmatmul.bf16.gmra.mxu0 %v304
      %v350 = vpop.f32.mrf.mxu0
      %v351 = vadd.f32 0.0, %v350
      %v352 = vpop.f32.mrf.mxu0
      %v353 = vadd.f32 0.0, %v352
      %354 = vdwg.mxu0
      %v355 = vpack.c.bf16 %v318, %v316
      %v356 = vpack.c.bf16 %v323, %v321
      %v357 = vpack.c.bf16 %v328, %v326
      %v358 = vpack.c.bf16 %v333, %v331
      %v359 = vpack.c.bf16 %v338, %v336
      %v360 = vpack.c.bf16 %v343, %v341
      %v361 = vpack.c.bf16 %v348, %v346
      %v362 = vpack.c.bf16 %v353, %v351
      %363 = vxpose.xlu0.c.b16.start [1/8] %v355, 128
      %364 = vxpose.xlu0.c.b16.cont [2/8] 0, 128
      %365 = vxpose.xlu0.c.b16.cont [3/8] 0, 128
      %366 = vxpose.xlu0.c.b16.cont [4/8] 0, 128
      %367 = vxpose.xlu0.c.b16.cont [5/8] 0, 128
      %368 = vxpose.xlu0.c.b16.cont [6/8] 0, 128
      %369 = vxpose.xlu0.c.b16.cont [7/8] 0, 128
      %370 = vxpose.xlu0.c.b16.end [8/8] 0, 128
      %v371 = vpop.trf.xlu0
      %v372 = vpop.trf.xlu0
      %v373 = vpop.trf.xlu0
      %v374 = vpop.trf.xlu0
      %v375 = vpop.trf.xlu0
      %v376 = vpop.trf.xlu0
      %v377 = vpop.trf.xlu0
      %v378 = vpop.trf.xlu0
      %379 = vxpose.xlu0.c.b16.start [1/8] %v356, 128
      %380 = vxpose.xlu0.c.b16.cont [2/8] 0, 128
      %381 = vxpose.xlu0.c.b16.cont [3/8] 0, 128
      %382 = vxpose.xlu0.c.b16.cont [4/8] 0, 128
      %383 = vxpose.xlu0.c.b16.cont [5/8] 0, 128
      %384 = vxpose.xlu0.c.b16.cont [6/8] 0, 128
      %385 = vxpose.xlu0.c.b16.cont [7/8] 0, 128
      %386 = vxpose.xlu0.c.b16.end [8/8] 0, 128
      %v387 = vpop.trf.xlu0
      %v388 = vpop.trf.xlu0
      %v389 = vpop.trf.xlu0
      %v390 = vpop.trf.xlu0
      %v391 = vpop.trf.xlu0
      %v392 = vpop.trf.xlu0
      %v393 = vpop.trf.xlu0
      %v394 = vpop.trf.xlu0
      %395 = vxpose.xlu0.c.b16.start [1/8] %v357, 128
      %396 = vxpose.xlu0.c.b16.cont [2/8] 0, 128
      %397 = vxpose.xlu0.c.b16.cont [3/8] 0, 128
      %398 = vxpose.xlu0.c.b16.cont [4/8] 0, 128
      %399 = vxpose.xlu0.c.b16.cont [5/8] 0, 128
      %400 = vxpose.xlu0.c.b16.cont [6/8] 0, 128
      %401 = vxpose.xlu0.c.b16.cont [7/8] 0, 128
      %402 = vxpose.xlu0.c.b16.end [8/8] 0, 128
      %v403 = vpop.trf.xlu0
      %v404 = vpop.trf.xlu0
      %v405 = vpop.trf.xlu0
      %v406 = vpop.trf.xlu0
      %v407 = vpop.trf.xlu0
      %v408 = vpop.trf.xlu0
      %v409 = vpop.trf.xlu0
      %v410 = vpop.trf.xlu0
      %411 = vxpose.xlu0.c.b16.start [1/8] %v358, 128
      %412 = vxpose.xlu0.c.b16.cont [2/8] 0, 128
      %413 = vxpose.xlu0.c.b16.cont [3/8] 0, 128
      %414 = vxpose.xlu0.c.b16.cont [4/8] 0, 128
      %415 = vxpose.xlu0.c.b16.cont [5/8] 0, 128
      %416 = vxpose.xlu0.c.b16.cont [6/8] 0, 128
      %417 = vxpose.xlu0.c.b16.cont [7/8] 0, 128
      %418 = vxpose.xlu0.c.b16.end [8/8] 0, 128
      %v419 = vpop.trf.xlu0
      %v420 = vpop.trf.xlu0
      %v421 = vpop.trf.xlu0
      %v422 = vpop.trf.xlu0
      %v423 = vpop.trf.xlu0
      %v424 = vpop.trf.xlu0
      %v425 = vpop.trf.xlu0
      %v426 = vpop.trf.xlu0
      %427 = vxpose.xlu0.c.b16.start [1/8] %v359, 128
      %428 = vxpose.xlu0.c.b16.cont [2/8] 0, 128
      %429 = vxpose.xlu0.c.b16.cont [3/8] 0, 128
      %430 = vxpose.xlu0.c.b16.cont [4/8] 0, 128
      %431 = vxpose.xlu0.c.b16.cont [5/8] 0, 128
      %432 = vxpose.xlu0.c.b16.cont [6/8] 0, 128
      %433 = vxpose.xlu0.c.b16.cont [7/8] 0, 128
      %434 = vxpose.xlu0.c.b16.end [8/8] 0, 128
      %v435 = vpop.trf.xlu0
      %v436 = vpop.trf.xlu0
      %v437 = vpop.trf.xlu0
      %v438 = vpop.trf.xlu0
      %v439 = vpop.trf.xlu0
      %v440 = vpop.trf.xlu0
      %v441 = vpop.trf.xlu0
      %v442 = vpop.trf.xlu0
      %443 = vxpose.xlu0.c.b16.start [1/8] %v360, 128
      %444 = vxpose.xlu0.c.b16.cont [2/8] 0, 128
      %445 = vxpose.xlu0.c.b16.cont [3/8] 0, 128
      %446 = vxpose.xlu0.c.b16.cont [4/8] 0, 128
      %447 = vxpose.xlu0.c.b16.cont [5/8] 0, 128
      %448 = vxpose.xlu0.c.b16.cont [6/8] 0, 128
      %449 = vxpose.xlu0.c.b16.cont [7/8] 0, 128
      %450 = vxpose.xlu0.c.b16.end [8/8] 0, 128
      %v451 = vpop.trf.xlu0
      %v452 = vpop.trf.xlu0
      %v453 = vpop.trf.xlu0
      %v454 = vpop.trf.xlu0
      %v455 = vpop.trf.xlu0
      %v456 = vpop.trf.xlu0
      %v457 = vpop.trf.xlu0
      %v458 = vpop.trf.xlu0
      %459 = vxpose.xlu0.c.b16.start [1/8] %v361, 128
      %460 = vxpose.xlu0.c.b16.cont [2/8] 0, 128
      %461 = vxpose.xlu0.c.b16.cont [3/8] 0, 128
      %462 = vxpose.xlu0.c.b16.cont [4/8] 0, 128
      %463 = vxpose.xlu0.c.b16.cont [5/8] 0, 128
      %464 = vxpose.xlu0.c.b16.cont [6/8] 0, 128
      %465 = vxpose.xlu0.c.b16.cont [7/8] 0, 128
      %466 = vxpose.xlu0.c.b16.end [8/8] 0, 128
      %v467 = vpop.trf.xlu0
      %v468 = vpop.trf.xlu0
      %v469 = vpop.trf.xlu0
      %v470 = vpop.trf.xlu0
      %v471 = vpop.trf.xlu0
      %v472 = vpop.trf.xlu0
      %v473 = vpop.trf.xlu0
      %v474 = vpop.trf.xlu0
      %475 = vxpose.xlu0.c.b16.start [1/8] %v362, 128
      %476 = vxpose.xlu0.c.b16.cont [2/8] 0, 128
      %477 = vxpose.xlu0.c.b16.cont [3/8] 0, 128
      %478 = vxpose.xlu0.c.b16.cont [4/8] 0, 128
      %479 = vxpose.xlu0.c.b16.cont [5/8] 0, 128
      %480 = vxpose.xlu0.c.b16.cont [6/8] 0, 128
      %481 = vxpose.xlu0.c.b16.cont [7/8] 0, 128
      %482 = vxpose.xlu0.c.b16.end [8/8] 0, 128
      %v483 = vpop.trf.xlu0
      %v484 = vpop.trf.xlu0
      %v485 = vpop.trf.xlu0
      %v486 = vpop.trf.xlu0
      %v487 = vpop.trf.xlu0
      %v488 = vpop.trf.xlu0
      %v489 = vpop.trf.xlu0
      %v490 = vpop.trf.xlu0
      %v499 = vunpack.c.l.b16 %v371
      %v500 = vunpack.c.l.b16 %v387
      %v501 = vunpack.c.l.b16 %v403
      %v502 = vunpack.c.l.b16 %v419
      %v503 = vunpack.c.l.b16 %v435
      %v504 = vunpack.c.l.b16 %v451
      %v505 = vunpack.c.l.b16 %v467
      %v506 = vunpack.c.l.b16 %v483
      %v507 = vpack.c.b16 %v500, %v499
      %v508 = vpack.c.b16 %v502, %v501
      %v509 = vpack.c.b16 %v504, %v503
      %v510 = vpack.c.b16 %v506, %v505
      %v512 = vsel %vm281, %v507, 0
      %v515 = vsel %vm281, %v508, 0
      %v518 = vsel %vm281, %v509, 0
      %v521 = vsel %vm281, %v510, 0
      %v524 = vsel %vm281, %v234, 0
      %526 = vmatpush.bf16.xpose.msra.mxu0 0
      %527 = vmatpush.bf16.xpose.msra.mxu0 0
      %528 = vmatpush.bf16.xpose.msra.mxu0 0
      %529 = vmatpush.bf16.xpose.msra.mxu0 0
      %530 = vmatpush.bf16.xpose.msra.mxu0 0
      %531 = vmatpush.bf16.xpose.msra.mxu0 0
      %532 = vmatpush.bf16.xpose.msra.mxu0 0
      %533 = vmatpush.bf16.xpose.msra.mxu0 %v524
      %534 = vmatmul.bf16.gmra.mxu0 %v512
      %v535 = vpop.f32.mrf.mxu0
      %v536 = vadd.f32 0.0, %v535
      %v537 = vpop.f32.mrf.mxu0
      %v538 = vadd.f32 0.0, %v537
      %539 = vmatmul.bf16.gmra.mxu0 %v515
      %v540 = vpop.f32.mrf.mxu0
      %v541 = vadd.f32 0.0, %v540
      %v542 = vpop.f32.mrf.mxu0
      %v543 = vadd.f32 0.0, %v542
      %544 = vmatmul.bf16.gmra.mxu0 %v518
      %v545 = vpop.f32.mrf.mxu0
      %v546 = vadd.f32 0.0, %v545
      %v547 = vpop.f32.mrf.mxu0
      %v548 = vadd.f32 0.0, %v547
      %549 = vmatmul.bf16.gmra.mxu0 %v521
      %v550 = vpop.f32.mrf.mxu0
      %v551 = vadd.f32 0.0, %v550
      %v552 = vpop.f32.mrf.mxu0
      %v553 = vadd.f32 0.0, %v552
      %554 = vdwg.mxu0
      %555 = vxpose.xlu0.b32.start [1/16] %v536, 128
      %556 = vxpose.xlu0.b32.cont [2/16] 0.0, 128
      %557 = vxpose.xlu0.b32.cont [3/16] 0.0, 128
      %558 = vxpose.xlu0.b32.cont [4/16] 0.0, 128
      %559 = vxpose.xlu0.b32.cont [5/16] 0.0, 128
      %560 = vxpose.xlu0.b32.cont [6/16] 0.0, 128
      %561 = vxpose.xlu0.b32.cont [7/16] 0.0, 128
      %562 = vxpose.xlu0.b32.cont [8/16] 0.0, 128
      %563 = vxpose.xlu0.b32.cont [9/16] 0.0, 128
      %564 = vxpose.xlu0.b32.cont [10/16] 0.0, 128
      %565 = vxpose.xlu0.b32.cont [11/16] 0.0, 128
      %566 = vxpose.xlu0.b32.cont [12/16] 0.0, 128
      %567 = vxpose.xlu0.b32.cont [13/16] 0.0, 128
      %568 = vxpose.xlu0.b32.cont [14/16] 0.0, 128
      %569 = vxpose.xlu0.b32.cont [15/16] 0.0, 128
      %570 = vxpose.xlu0.b32.end [16/16] 0.0, 128
      %v571 = vpop.trf.xlu0
      %v572 = vpop.trf.xlu0
      %v573 = vpop.trf.xlu0
      %v574 = vpop.trf.xlu0
      %v575 = vpop.trf.xlu0
      %v576 = vpop.trf.xlu0
      %v577 = vpop.trf.xlu0
      %v578 = vpop.trf.xlu0
      %v579 = vpop.trf.xlu0
      %v580 = vpop.trf.xlu0
      %v581 = vpop.trf.xlu0
      %v582 = vpop.trf.xlu0
      %v583 = vpop.trf.xlu0
      %v584 = vpop.trf.xlu0
      %v585 = vpop.trf.xlu0
      %v586 = vpop.trf.xlu0
      %587 = vxpose.xlu0.b32.start [1/16] %v538, 128
      %588 = vxpose.xlu0.b32.cont [2/16] 0.0, 128
      %589 = vxpose.xlu0.b32.cont [3/16] 0.0, 128
      %590 = vxpose.xlu0.b32.cont [4/16] 0.0, 128
      %591 = vxpose.xlu0.b32.cont [5/16] 0.0, 128
      %592 = vxpose.xlu0.b32.cont [6/16] 0.0, 128
      %593 = vxpose.xlu0.b32.cont [7/16] 0.0, 128
      %594 = vxpose.xlu0.b32.cont [8/16] 0.0, 128
      %595 = vxpose.xlu0.b32.cont [9/16] 0.0, 128
      %596 = vxpose.xlu0.b32.cont [10/16] 0.0, 128
      %597 = vxpose.xlu0.b32.cont [11/16] 0.0, 128
      %598 = vxpose.xlu0.b32.cont [12/16] 0.0, 128
      %599 = vxpose.xlu0.b32.cont [13/16] 0.0, 128
      %600 = vxpose.xlu0.b32.cont [14/16] 0.0, 128
      %601 = vxpose.xlu0.b32.cont [15/16] 0.0, 128
      %602 = vxpose.xlu0.b32.end [16/16] 0.0, 128
      %v603 = vpop.trf.xlu0
      %v604 = vpop.trf.xlu0
      %v605 = vpop.trf.xlu0
      %v606 = vpop.trf.xlu0
      %v607 = vpop.trf.xlu0
      %v608 = vpop.trf.xlu0
      %v609 = vpop.trf.xlu0
      %v610 = vpop.trf.xlu0
      %v611 = vpop.trf.xlu0
      %v612 = vpop.trf.xlu0
      %v613 = vpop.trf.xlu0
      %v614 = vpop.trf.xlu0
      %v615 = vpop.trf.xlu0
      %v616 = vpop.trf.xlu0
      %v617 = vpop.trf.xlu0
      %v618 = vpop.trf.xlu0
      %619 = vxpose.xlu0.b32.start [1/16] %v541, 128
      %620 = vxpose.xlu0.b32.cont [2/16] 0.0, 128
      %621 = vxpose.xlu0.b32.cont [3/16] 0.0, 128
      %622 = vxpose.xlu0.b32.cont [4/16] 0.0, 128
      %623 = vxpose.xlu0.b32.cont [5/16] 0.0, 128
      %624 = vxpose.xlu0.b32.cont [6/16] 0.0, 128
      %625 = vxpose.xlu0.b32.cont [7/16] 0.0, 128
      %626 = vxpose.xlu0.b32.cont [8/16] 0.0, 128
      %627 = vxpose.xlu0.b32.cont [9/16] 0.0, 128
      %628 = vxpose.xlu0.b32.cont [10/16] 0.0, 128
      %629 = vxpose.xlu0.b32.cont [11/16] 0.0, 128
      %630 = vxpose.xlu0.b32.cont [12/16] 0.0, 128
      %631 = vxpose.xlu0.b32.cont [13/16] 0.0, 128
      %632 = vxpose.xlu0.b32.cont [14/16] 0.0, 128
      %633 = vxpose.xlu0.b32.cont [15/16] 0.0, 128
      %634 = vxpose.xlu0.b32.end [16/16] 0.0, 128
      %v635 = vpop.trf.xlu0
      %v636 = vpop.trf.xlu0
      %v637 = vpop.trf.xlu0
      %v638 = vpop.trf.xlu0
      %v639 = vpop.trf.xlu0
      %v640 = vpop.trf.xlu0
      %v641 = vpop.trf.xlu0
      %v642 = vpop.trf.xlu0
      %v643 = vpop.trf.xlu0
      %v644 = vpop.trf.xlu0
      %v645 = vpop.trf.xlu0
      %v646 = vpop.trf.xlu0
      %v647 = vpop.trf.xlu0
      %v648 = vpop.trf.xlu0
      %v649 = vpop.trf.xlu0
      %v650 = vpop.trf.xlu0
      %651 = vxpose.xlu0.b32.start [1/16] %v543, 128
      %652 = vxpose.xlu0.b32.cont [2/16] 0.0, 128
      %653 = vxpose.xlu0.b32.cont [3/16] 0.0, 128
      %654 = vxpose.xlu0.b32.cont [4/16] 0.0, 128
      %655 = vxpose.xlu0.b32.cont [5/16] 0.0, 128
      %656 = vxpose.xlu0.b32.cont [6/16] 0.0, 128
      %657 = vxpose.xlu0.b32.cont [7/16] 0.0, 128
      %658 = vxpose.xlu0.b32.cont [8/16] 0.0, 128
      %659 = vxpose.xlu0.b32.cont [9/16] 0.0, 128
      %660 = vxpose.xlu0.b32.cont [10/16] 0.0, 128
      %661 = vxpose.xlu0.b32.cont [11/16] 0.0, 128
      %662 = vxpose.xlu0.b32.cont [12/16] 0.0, 128
      %663 = vxpose.xlu0.b32.cont [13/16] 0.0, 128
      %664 = vxpose.xlu0.b32.cont [14/16] 0.0, 128
      %665 = vxpose.xlu0.b32.cont [15/16] 0.0, 128
      %666 = vxpose.xlu0.b32.end [16/16] 0.0, 128
      %v667 = vpop.trf.xlu0
      %v668 = vpop.trf.xlu0
      %v669 = vpop.trf.xlu0
      %v670 = vpop.trf.xlu0
      %v671 = vpop.trf.xlu0
      %v672 = vpop.trf.xlu0
      %v673 = vpop.trf.xlu0
      %v674 = vpop.trf.xlu0
      %v675 = vpop.trf.xlu0
      %v676 = vpop.trf.xlu0
      %v677 = vpop.trf.xlu0
      %v678 = vpop.trf.xlu0
      %v679 = vpop.trf.xlu0
      %v680 = vpop.trf.xlu0
      %v681 = vpop.trf.xlu0
      %v682 = vpop.trf.xlu0
      %683 = vxpose.xlu0.b32.start [1/16] %v546, 128
      %684 = vxpose.xlu0.b32.cont [2/16] 0.0, 128
      %685 = vxpose.xlu0.b32.cont [3/16] 0.0, 128
      %686 = vxpose.xlu0.b32.cont [4/16] 0.0, 128
      %687 = vxpose.xlu0.b32.cont [5/16] 0.0, 128
      %688 = vxpose.xlu0.b32.cont [6/16] 0.0, 128
      %689 = vxpose.xlu0.b32.cont [7/16] 0.0, 128
      %690 = vxpose.xlu0.b32.cont [8/16] 0.0, 128
      %691 = vxpose.xlu0.b32.cont [9/16] 0.0, 128
      %692 = vxpose.xlu0.b32.cont [10/16] 0.0, 128
      %693 = vxpose.xlu0.b32.cont [11/16] 0.0, 128
      %694 = vxpose.xlu0.b32.cont [12/16] 0.0, 128
      %695 = vxpose.xlu0.b32.cont [13/16] 0.0, 128
      %696 = vxpose.xlu0.b32.cont [14/16] 0.0, 128
      %697 = vxpose.xlu0.b32.cont [15/16] 0.0, 128
      %698 = vxpose.xlu0.b32.end [16/16] 0.0, 128
      %v699 = vpop.trf.xlu0
      %v700 = vpop.trf.xlu0
      %v701 = vpop.trf.xlu0
      %v702 = vpop.trf.xlu0
      %v703 = vpop.trf.xlu0
      %v704 = vpop.trf.xlu0
      %v705 = vpop.trf.xlu0
      %v706 = vpop.trf.xlu0
      %v707 = vpop.trf.xlu0
      %v708 = vpop.trf.xlu0
      %v709 = vpop.trf.xlu0
      %v710 = vpop.trf.xlu0
      %v711 = vpop.trf.xlu0
      %v712 = vpop.trf.xlu0
      %v713 = vpop.trf.xlu0
      %v714 = vpop.trf.xlu0
      %715 = vxpose.xlu0.b32.start [1/16] %v548, 128
      %716 = vxpose.xlu0.b32.cont [2/16] 0.0, 128
      %717 = vxpose.xlu0.b32.cont [3/16] 0.0, 128
      %718 = vxpose.xlu0.b32.cont [4/16] 0.0, 128
      %719 = vxpose.xlu0.b32.cont [5/16] 0.0, 128
      %720 = vxpose.xlu0.b32.cont [6/16] 0.0, 128
      %721 = vxpose.xlu0.b32.cont [7/16] 0.0, 128
      %722 = vxpose.xlu0.b32.cont [8/16] 0.0, 128
      %723 = vxpose.xlu0.b32.cont [9/16] 0.0, 128
      %724 = vxpose.xlu0.b32.cont [10/16] 0.0, 128
      %725 = vxpose.xlu0.b32.cont [11/16] 0.0, 128
      %726 = vxpose.xlu0.b32.cont [12/16] 0.0, 128
      %727 = vxpose.xlu0.b32.cont [13/16] 0.0, 128
      %728 = vxpose.xlu0.b32.cont [14/16] 0.0, 128
      %729 = vxpose.xlu0.b32.cont [15/16] 0.0, 128
      %730 = vxpose.xlu0.b32.end [16/16] 0.0, 128
      %v731 = vpop.trf.xlu0
      %v732 = vpop.trf.xlu0
      %v733 = vpop.trf.xlu0
      %v734 = vpop.trf.xlu0
      %v735 = vpop.trf.xlu0
      %v736 = vpop.trf.xlu0
      %v737 = vpop.trf.xlu0
      %v738 = vpop.trf.xlu0
      %v739 = vpop.trf.xlu0
      %v740 = vpop.trf.xlu0
      %v741 = vpop.trf.xlu0
      %v742 = vpop.trf.xlu0
      %v743 = vpop.trf.xlu0
      %v744 = vpop.trf.xlu0
      %v745 = vpop.trf.xlu0
      %v746 = vpop.trf.xlu0
      %747 = vxpose.xlu0.b32.start [1/16] %v551, 128
      %748 = vxpose.xlu0.b32.cont [2/16] 0.0, 128
      %749 = vxpose.xlu0.b32.cont [3/16] 0.0, 128
      %750 = vxpose.xlu0.b32.cont [4/16] 0.0, 128
      %751 = vxpose.xlu0.b32.cont [5/16] 0.0, 128
      %752 = vxpose.xlu0.b32.cont [6/16] 0.0, 128
      %753 = vxpose.xlu0.b32.cont [7/16] 0.0, 128
      %754 = vxpose.xlu0.b32.cont [8/16] 0.0, 128
      %755 = vxpose.xlu0.b32.cont [9/16] 0.0, 128
      %756 = vxpose.xlu0.b32.cont [10/16] 0.0, 128
      %757 = vxpose.xlu0.b32.cont [11/16] 0.0, 128
      %758 = vxpose.xlu0.b32.cont [12/16] 0.0, 128
      %759 = vxpose.xlu0.b32.cont [13/16] 0.0, 128
      %760 = vxpose.xlu0.b32.cont [14/16] 0.0, 128
      %761 = vxpose.xlu0.b32.cont [15/16] 0.0, 128
      %762 = vxpose.xlu0.b32.end [16/16] 0.0, 128
      %v763 = vpop.trf.xlu0
      %v764 = vpop.trf.xlu0
      %v765 = vpop.trf.xlu0
      %v766 = vpop.trf.xlu0
      %v767 = vpop.trf.xlu0
      %v768 = vpop.trf.xlu0
      %v769 = vpop.trf.xlu0
      %v770 = vpop.trf.xlu0
      %v771 = vpop.trf.xlu0
      %v772 = vpop.trf.xlu0
      %v773 = vpop.trf.xlu0
      %v774 = vpop.trf.xlu0
      %v775 = vpop.trf.xlu0
      %v776 = vpop.trf.xlu0
      %v777 = vpop.trf.xlu0
      %v778 = vpop.trf.xlu0
      %779 = vxpose.xlu0.b32.start [1/16] %v553, 128
      %780 = vxpose.xlu0.b32.cont [2/16] 0.0, 128
      %781 = vxpose.xlu0.b32.cont [3/16] 0.0, 128
      %782 = vxpose.xlu0.b32.cont [4/16] 0.0, 128
      %783 = vxpose.xlu0.b32.cont [5/16] 0.0, 128
      %784 = vxpose.xlu0.b32.cont [6/16] 0.0, 128
      %785 = vxpose.xlu0.b32.cont [7/16] 0.0, 128
      %786 = vxpose.xlu0.b32.cont [8/16] 0.0, 128
      %787 = vxpose.xlu0.b32.cont [9/16] 0.0, 128
      %788 = vxpose.xlu0.b32.cont [10/16] 0.0, 128
      %789 = vxpose.xlu0.b32.cont [11/16] 0.0, 128
      %790 = vxpose.xlu0.b32.cont [12/16] 0.0, 128
      %791 = vxpose.xlu0.b32.cont [13/16] 0.0, 128
      %792 = vxpose.xlu0.b32.cont [14/16] 0.0, 128
      %793 = vxpose.xlu0.b32.cont [15/16] 0.0, 128
      %794 = vxpose.xlu0.b32.end [16/16] 0.0, 128
      %v795 = vpop.trf.xlu0
      %v796 = vpop.trf.xlu0
      %v797 = vpop.trf.xlu0
      %v798 = vpop.trf.xlu0
      %v799 = vpop.trf.xlu0
      %v800 = vpop.trf.xlu0
      %v801 = vpop.trf.xlu0
      %v802 = vpop.trf.xlu0
      %v803 = vpop.trf.xlu0
      %v804 = vpop.trf.xlu0
      %v805 = vpop.trf.xlu0
      %v806 = vpop.trf.xlu0
      %v807 = vpop.trf.xlu0
      %v808 = vpop.trf.xlu0
      %v809 = vpop.trf.xlu0
      %v810 = vpop.trf.xlu0
      %vm811 = vcmask 64512
      %812 = vst.msk [vmem:[%s173] sm:$0xff] %vm811, %v571
      %813 = vst.msk [vmem:[%s173 + $0x8] sm:$0xff] %vm811, %v603
      %814 = vst.msk [vmem:[%s173 + $0x10] sm:$0xff] %vm811, %v635
      %815 = vst.msk [vmem:[%s173 + $0x18] sm:$0xff] %vm811, %v667
      %816 = vst.msk [vmem:[%s173 + $0x20] sm:$0xff] %vm811, %v699
      %817 = vst.msk [vmem:[%s173 + $0x28] sm:$0xff] %vm811, %v731
      %818 = vst.msk [vmem:[%s173 + $0x30] sm:$0xff] %vm811, %v763
      %819 = vst.msk [vmem:[%s173 + $0x38] sm:$0xff] %vm811, %v795
      %s820 = scalar_lea.vmem %s166, 8
      %v821 = vld [vmem:[%s820] sm:$0xf]
      %v822 = vld [vmem:[%s820 + $0x4] sm:$0xf]
      %s823 = scalar_lea.vmem %s159, 4
      %v824 = vld [vmem:[%s823] sm:$0xf]
      %v827 = vunpack.c.l.b16 %v821
      %v828 = vunpack.c.l.b16 %v822
      %v829 = vpack.c.b16 %v828, %v827
      %831 = vmatpush.bf16.msra.mxu0 0
      %832 = vmatpush.bf16.msra.mxu0 0
      %833 = vmatpush.bf16.msra.mxu0 0
      %834 = vmatpush.bf16.msra.mxu0 0
      %835 = vmatpush.bf16.msra.mxu0 0
      %836 = vmatpush.bf16.msra.mxu0 0
      %837 = vmatpush.bf16.msra.mxu0 0
      %838 = vmatpush.bf16.msra.mxu0 %v829
      %839 = vmatmul.bf16.gmra.mxu0 %v283
      %v840 = vpop.f32.mrf.mxu0
      %v841 = vadd.f32 0.0, %v840
      %v842 = vpop.f32.mrf.mxu0
      %v843 = vadd.f32 0.0, %v842
      %844 = vmatmul.bf16.gmra.mxu0 %v286
      %v845 = vpop.f32.mrf.mxu0
      %v846 = vadd.f32 0.0, %v845
      %v847 = vpop.f32.mrf.mxu0
      %v848 = vadd.f32 0.0, %v847
      %849 = vmatmul.bf16.gmra.mxu0 %v289
      %v850 = vpop.f32.mrf.mxu0
      %v851 = vadd.f32 0.0, %v850
      %v852 = vpop.f32.mrf.mxu0
      %v853 = vadd.f32 0.0, %v852
      %854 = vmatmul.bf16.gmra.mxu0 %v292
      %v855 = vpop.f32.mrf.mxu0
      %v856 = vadd.f32 0.0, %v855
      %v857 = vpop.f32.mrf.mxu0
      %v858 = vadd.f32 0.0, %v857
      %859 = vmatmul.bf16.gmra.mxu0 %v295
      %v860 = vpop.f32.mrf.mxu0
      %v861 = vadd.f32 0.0, %v860
      %v862 = vpop.f32.mrf.mxu0
      %v863 = vadd.f32 0.0, %v862
      %864 = vmatmul.bf16.gmra.mxu0 %v298
      %v865 = vpop.f32.mrf.mxu0
      %v866 = vadd.f32 0.0, %v865
      %v867 = vpop.f32.mrf.mxu0
      %v868 = vadd.f32 0.0, %v867
      %869 = vmatmul.bf16.gmra.mxu0 %v301
      %v870 = vpop.f32.mrf.mxu0
      %v871 = vadd.f32 0.0, %v870
      %v872 = vpop.f32.mrf.mxu0
      %v873 = vadd.f32 0.0, %v872
      %874 = vmatmul.bf16.gmra.mxu0 %v304
      %v875 = vpop.f32.mrf.mxu0
      %v876 = vadd.f32 0.0, %v875
      %v877 = vpop.f32.mrf.mxu0
      %v878 = vadd.f32 0.0, %v877
      %879 = vdwg.mxu0
      %v880 = vpack.c.bf16 %v843, %v841
      %v881 = vpack.c.bf16 %v848, %v846
      %v882 = vpack.c.bf16 %v853, %v851
      %v883 = vpack.c.bf16 %v858, %v856
      %v884 = vpack.c.bf16 %v863, %v861
      %v885 = vpack.c.bf16 %v868, %v866
      %v886 = vpack.c.bf16 %v873, %v871
      %v887 = vpack.c.bf16 %v878, %v876
      %888 = vxpose.xlu0.c.b16.start [1/8] %v880, 128
      %889 = vxpose.xlu0.c.b16.cont [2/8] 0, 128
      %890 = vxpose.xlu0.c.b16.cont [3/8] 0, 128
      %891 = vxpose.xlu0.c.b16.cont [4/8] 0, 128
      %892 = vxpose.xlu0.c.b16.cont [5/8] 0, 128
      %893 = vxpose.xlu0.c.b16.cont [6/8] 0, 128
      %894 = vxpose.xlu0.c.b16.cont [7/8] 0, 128
      %895 = vxpose.xlu0.c.b16.end [8/8] 0, 128
      %v896 = vpop.trf.xlu0
      %v897 = vpop.trf.xlu0
      %v898 = vpop.trf.xlu0
      %v899 = vpop.trf.xlu0
      %v900 = vpop.trf.xlu0
      %v901 = vpop.trf.xlu0
      %v902 = vpop.trf.xlu0
      %v903 = vpop.trf.xlu0
      %904 = vxpose.xlu0.c.b16.start [1/8] %v881, 128
      %905 = vxpose.xlu0.c.b16.cont [2/8] 0, 128
      %906 = vxpose.xlu0.c.b16.cont [3/8] 0, 128
      %907 = vxpose.xlu0.c.b16.cont [4/8] 0, 128
      %908 = vxpose.xlu0.c.b16.cont [5/8] 0, 128
      %909 = vxpose.xlu0.c.b16.cont [6/8] 0, 128
      %910 = vxpose.xlu0.c.b16.cont [7/8] 0, 128
      %911 = vxpose.xlu0.c.b16.end [8/8] 0, 128
      %v912 = vpop.trf.xlu0
      %v913 = vpop.trf.xlu0
      %v914 = vpop.trf.xlu0
      %v915 = vpop.trf.xlu0
      %v916 = vpop.trf.xlu0
      %v917 = vpop.trf.xlu0
      %v918 = vpop.trf.xlu0
      %v919 = vpop.trf.xlu0
      %920 = vxpose.xlu0.c.b16.start [1/8] %v882, 128
      %921 = vxpose.xlu0.c.b16.cont [2/8] 0, 128
      %922 = vxpose.xlu0.c.b16.cont [3/8] 0, 128
      %923 = vxpose.xlu0.c.b16.cont [4/8] 0, 128
      %924 = vxpose.xlu0.c.b16.cont [5/8] 0, 128
      %925 = vxpose.xlu0.c.b16.cont [6/8] 0, 128
      %926 = vxpose.xlu0.c.b16.cont [7/8] 0, 128
      %927 = vxpose.xlu0.c.b16.end [8/8] 0, 128
      %v928 = vpop.trf.xlu0
      %v929 = vpop.trf.xlu0
      %v930 = vpop.trf.xlu0
      %v931 = vpop.trf.xlu0
      %v932 = vpop.trf.xlu0
      %v933 = vpop.trf.xlu0
      %v934 = vpop.trf.xlu0
      %v935 = vpop.trf.xlu0
      %936 = vxpose.xlu0.c.b16.start [1/8] %v883, 128
      %937 = vxpose.xlu0.c.b16.cont [2/8] 0, 128
      %938 = vxpose.xlu0.c.b16.cont [3/8] 0, 128
      %939 = vxpose.xlu0.c.b16.cont [4/8] 0, 128
      %940 = vxpose.xlu0.c.b16.cont [5/8] 0, 128
      %941 = vxpose.xlu0.c.b16.cont [6/8] 0, 128
      %942 = vxpose.xlu0.c.b16.cont [7/8] 0, 128
      %943 = vxpose.xlu0.c.b16.end [8/8] 0, 128
      %v944 = vpop.trf.xlu0
      %v945 = vpop.trf.xlu0
      %v946 = vpop.trf.xlu0
      %v947 = vpop.trf.xlu0
      %v948 = vpop.trf.xlu0
      %v949 = vpop.trf.xlu0
      %v950 = vpop.trf.xlu0
      %v951 = vpop.trf.xlu0
      %952 = vxpose.xlu0.c.b16.start [1/8] %v884, 128
      %953 = vxpose.xlu0.c.b16.cont [2/8] 0, 128
      %954 = vxpose.xlu0.c.b16.cont [3/8] 0, 128
      %955 = vxpose.xlu0.c.b16.cont [4/8] 0, 128
      %956 = vxpose.xlu0.c.b16.cont [5/8] 0, 128
      %957 = vxpose.xlu0.c.b16.cont [6/8] 0, 128
      %958 = vxpose.xlu0.c.b16.cont [7/8] 0, 128
      %959 = vxpose.xlu0.c.b16.end [8/8] 0, 128
      %v960 = vpop.trf.xlu0
      %v961 = vpop.trf.xlu0
      %v962 = vpop.trf.xlu0
      %v963 = vpop.trf.xlu0
      %v964 = vpop.trf.xlu0
      %v965 = vpop.trf.xlu0
      %v966 = vpop.trf.xlu0
      %v967 = vpop.trf.xlu0
      %968 = vxpose.xlu0.c.b16.start [1/8] %v885, 128
      %969 = vxpose.xlu0.c.b16.cont [2/8] 0, 128
      %970 = vxpose.xlu0.c.b16.cont [3/8] 0, 128
      %971 = vxpose.xlu0.c.b16.cont [4/8] 0, 128
      %972 = vxpose.xlu0.c.b16.cont [5/8] 0, 128
      %973 = vxpose.xlu0.c.b16.cont [6/8] 0, 128
      %974 = vxpose.xlu0.c.b16.cont [7/8] 0, 128
      %975 = vxpose.xlu0.c.b16.end [8/8] 0, 128
      %v976 = vpop.trf.xlu0
      %v977 = vpop.trf.xlu0
      %v978 = vpop.trf.xlu0
      %v979 = vpop.trf.xlu0
      %v980 = vpop.trf.xlu0
      %v981 = vpop.trf.xlu0
      %v982 = vpop.trf.xlu0
      %v983 = vpop.trf.xlu0
      %984 = vxpose.xlu0.c.b16.start [1/8] %v886, 128
      %985 = vxpose.xlu0.c.b16.cont [2/8] 0, 128
      %986 = vxpose.xlu0.c.b16.cont [3/8] 0, 128
      %987 = vxpose.xlu0.c.b16.cont [4/8] 0, 128
      %988 = vxpose.xlu0.c.b16.cont [5/8] 0, 128
      %989 = vxpose.xlu0.c.b16.cont [6/8] 0, 128
      %990 = vxpose.xlu0.c.b16.cont [7/8] 0, 128
      %991 = vxpose.xlu0.c.b16.end [8/8] 0, 128
      %v992 = vpop.trf.xlu0
      %v993 = vpop.trf.xlu0
      %v994 = vpop.trf.xlu0
      %v995 = vpop.trf.xlu0
      %v996 = vpop.trf.xlu0
      %v997 = vpop.trf.xlu0
      %v998 = vpop.trf.xlu0
      %v999 = vpop.trf.xlu0
      %1000 = vxpose.xlu0.c.b16.start [1/8] %v887, 128
      %1001 = vxpose.xlu0.c.b16.cont [2/8] 0, 128
      %1002 = vxpose.xlu0.c.b16.cont [3/8] 0, 128
      %1003 = vxpose.xlu0.c.b16.cont [4/8] 0, 128
      %1004 = vxpose.xlu0.c.b16.cont [5/8] 0, 128
      %1005 = vxpose.xlu0.c.b16.cont [6/8] 0, 128
      %1006 = vxpose.xlu0.c.b16.cont [7/8] 0, 128
      %1007 = vxpose.xlu0.c.b16.end [8/8] 0, 128
      %v1008 = vpop.trf.xlu0
      %v1009 = vpop.trf.xlu0
      %v1010 = vpop.trf.xlu0
      %v1011 = vpop.trf.xlu0
      %v1012 = vpop.trf.xlu0
      %v1013 = vpop.trf.xlu0
      %v1014 = vpop.trf.xlu0
      %v1015 = vpop.trf.xlu0
      %v1024 = vunpack.c.l.b16 %v896
      %v1025 = vunpack.c.l.b16 %v912
      %v1026 = vunpack.c.l.b16 %v928
      %v1027 = vunpack.c.l.b16 %v944
      %v1028 = vunpack.c.l.b16 %v960
      %v1029 = vunpack.c.l.b16 %v976
      %v1030 = vunpack.c.l.b16 %v992
      %v1031 = vunpack.c.l.b16 %v1008
      %v1032 = vpack.c.b16 %v1025, %v1024
      %v1033 = vpack.c.b16 %v1027, %v1026
      %v1034 = vpack.c.b16 %v1029, %v1028
      %v1035 = vpack.c.b16 %v1031, %v1030
      %v1037 = vsel %vm281, %v1032, 0
      %v1040 = vsel %vm281, %v1033, 0
      %v1043 = vsel %vm281, %v1034, 0
      %v1046 = vsel %vm281, %v1035, 0
      %v1049 = vsel %vm281, %v824, 0
      %1051 = vmatpush.bf16.xpose.msra.mxu0 0
      %1052 = vmatpush.bf16.xpose.msra.mxu0 0
      %1053 = vmatpush.bf16.xpose.msra.mxu0 0
      %1054 = vmatpush.bf16.xpose.msra.mxu0 0
      %1055 = vmatpush.bf16.xpose.msra.mxu0 0
      %1056 = vmatpush.bf16.xpose.msra.mxu0 0
      %1057 = vmatpush.bf16.xpose.msra.mxu0 0
      %1058 = vmatpush.bf16.xpose.msra.mxu0 %v1049
      %1059 = vmatmul.bf16.gmra.mxu0 %v1037
      %v1060 = vpop.f32.mrf.mxu0
      %v1061 = vadd.f32 0.0, %v1060
      %v1062 = vpop.f32.mrf.mxu0
      %v1063 = vadd.f32 0.0, %v1062
      %1064 = vmatmul.bf16.gmra.mxu0 %v1040
      %v1065 = vpop.f32.mrf.mxu0
      %v1066 = vadd.f32 0.0, %v1065
      %v1067 = vpop.f32.mrf.mxu0
      %v1068 = vadd.f32 0.0, %v1067
      %1069 = vmatmul.bf16.gmra.mxu0 %v1043
      %v1070 = vpop.f32.mrf.mxu0
      %v1071 = vadd.f32 0.0, %v1070
      %v1072 = vpop.f32.mrf.mxu0
      %v1073 = vadd.f32 0.0, %v1072
      %1074 = vmatmul.bf16.gmra.mxu0 %v1046
      %v1075 = vpop.f32.mrf.mxu0
      %v1076 = vadd.f32 0.0, %v1075
      %v1077 = vpop.f32.mrf.mxu0
      %v1078 = vadd.f32 0.0, %v1077
      %1079 = vdwg.mxu0
      %1080 = vxpose.xlu0.b32.start [1/16] %v1061, 128
      %1081 = vxpose.xlu0.b32.cont [2/16] 0.0, 128
      %1082 = vxpose.xlu0.b32.cont [3/16] 0.0, 128
      %1083 = vxpose.xlu0.b32.cont [4/16] 0.0, 128
      %1084 = vxpose.xlu0.b32.cont [5/16] 0.0, 128
      %1085 = vxpose.xlu0.b32.cont [6/16] 0.0, 128
      %1086 = vxpose.xlu0.b32.cont [7/16] 0.0, 128
      %1087 = vxpose.xlu0.b32.cont [8/16] 0.0, 128
      %1088 = vxpose.xlu0.b32.cont [9/16] 0.0, 128
      %1089 = vxpose.xlu0.b32.cont [10/16] 0.0, 128
      %1090 = vxpose.xlu0.b32.cont [11/16] 0.0, 128
      %1091 = vxpose.xlu0.b32.cont [12/16] 0.0, 128
      %1092 = vxpose.xlu0.b32.cont [13/16] 0.0, 128
      %1093 = vxpose.xlu0.b32.cont [14/16] 0.0, 128
      %1094 = vxpose.xlu0.b32.cont [15/16] 0.0, 128
      %1095 = vxpose.xlu0.b32.end [16/16] 0.0, 128
      %v1096 = vpop.trf.xlu0
      %v1097 = vpop.trf.xlu0
      %v1098 = vpop.trf.xlu0
      %v1099 = vpop.trf.xlu0
      %v1100 = vpop.trf.xlu0
      %v1101 = vpop.trf.xlu0
      %v1102 = vpop.trf.xlu0
      %v1103 = vpop.trf.xlu0
      %v1104 = vpop.trf.xlu0
      %v1105 = vpop.trf.xlu0
      %v1106 = vpop.trf.xlu0
      %v1107 = vpop.trf.xlu0
      %v1108 = vpop.trf.xlu0
      %v1109 = vpop.trf.xlu0
      %v1110 = vpop.trf.xlu0
      %v1111 = vpop.trf.xlu0
      %1112 = vxpose.xlu0.b32.start [1/16] %v1063, 128
      %1113 = vxpose.xlu0.b32.cont [2/16] 0.0, 128
      %1114 = vxpose.xlu0.b32.cont [3/16] 0.0, 128
      %1115 = vxpose.xlu0.b32.cont [4/16] 0.0, 128
      %1116 = vxpose.xlu0.b32.cont [5/16] 0.0, 128
      %1117 = vxpose.xlu0.b32.cont [6/16] 0.0, 128
      %1118 = vxpose.xlu0.b32.cont [7/16] 0.0, 128
      %1119 = vxpose.xlu0.b32.cont [8/16] 0.0, 128
      %1120 = vxpose.xlu0.b32.cont [9/16] 0.0, 128
      %1121 = vxpose.xlu0.b32.cont [10/16] 0.0, 128
      %1122 = vxpose.xlu0.b32.cont [11/16] 0.0, 128
      %1123 = vxpose.xlu0.b32.cont [12/16] 0.0, 128
      %1124 = vxpose.xlu0.b32.cont [13/16] 0.0, 128
      %1125 = vxpose.xlu0.b32.cont [14/16] 0.0, 128
      %1126 = vxpose.xlu0.b32.cont [15/16] 0.0, 128
      %1127 = vxpose.xlu0.b32.end [16/16] 0.0, 128
      %v1128 = vpop.trf.xlu0
      %v1129 = vpop.trf.xlu0
      %v1130 = vpop.trf.xlu0
      %v1131 = vpop.trf.xlu0
      %v1132 = vpop.trf.xlu0
      %v1133 = vpop.trf.xlu0
      %v1134 = vpop.trf.xlu0
      %v1135 = vpop.trf.xlu0
      %v1136 = vpop.trf.xlu0
      %v1137 = vpop.trf.xlu0
      %v1138 = vpop.trf.xlu0
      %v1139 = vpop.trf.xlu0
      %v1140 = vpop.trf.xlu0
      %v1141 = vpop.trf.xlu0
      %v1142 = vpop.trf.xlu0
      %v1143 = vpop.trf.xlu0
      %1144 = vxpose.xlu0.b32.start [1/16] %v1066, 128
      %1145 = vxpose.xlu0.b32.cont [2/16] 0.0, 128
      %1146 = vxpose.xlu0.b32.cont [3/16] 0.0, 128
      %1147 = vxpose.xlu0.b32.cont [4/16] 0.0, 128
      %1148 = vxpose.xlu0.b32.cont [5/16] 0.0, 128
      %1149 = vxpose.xlu0.b32.cont [6/16] 0.0, 128
      %1150 = vxpose.xlu0.b32.cont [7/16] 0.0, 128
      %1151 = vxpose.xlu0.b32.cont [8/16] 0.0, 128
      %1152 = vxpose.xlu0.b32.cont [9/16] 0.0, 128
      %1153 = vxpose.xlu0.b32.cont [10/16] 0.0, 128
      %1154 = vxpose.xlu0.b32.cont [11/16] 0.0, 128
      %1155 = vxpose.xlu0.b32.cont [12/16] 0.0, 128
      %1156 = vxpose.xlu0.b32.cont [13/16] 0.0, 128
      %1157 = vxpose.xlu0.b32.cont [14/16] 0.0, 128
      %1158 = vxpose.xlu0.b32.cont [15/16] 0.0, 128
      %1159 = vxpose.xlu0.b32.end [16/16] 0.0, 128
      %v1160 = vpop.trf.xlu0
      %v1161 = vpop.trf.xlu0
      %v1162 = vpop.trf.xlu0
      %v1163 = vpop.trf.xlu0
      %v1164 = vpop.trf.xlu0
      %v1165 = vpop.trf.xlu0
      %v1166 = vpop.trf.xlu0
      %v1167 = vpop.trf.xlu0
      %v1168 = vpop.trf.xlu0
      %v1169 = vpop.trf.xlu0
      %v1170 = vpop.trf.xlu0
      %v1171 = vpop.trf.xlu0
      %v1172 = vpop.trf.xlu0
      %v1173 = vpop.trf.xlu0
      %v1174 = vpop.trf.xlu0
      %v1175 = vpop.trf.xlu0
      %1176 = vxpose.xlu0.b32.start [1/16] %v1068, 128
      %1177 = vxpose.xlu0.b32.cont [2/16] 0.0, 128
      %1178 = vxpose.xlu0.b32.cont [3/16] 0.0, 128
      %1179 = vxpose.xlu0.b32.cont [4/16] 0.0, 128
      %1180 = vxpose.xlu0.b32.cont [5/16] 0.0, 128
      %1181 = vxpose.xlu0.b32.cont [6/16] 0.0, 128
      %1182 = vxpose.xlu0.b32.cont [7/16] 0.0, 128
      %1183 = vxpose.xlu0.b32.cont [8/16] 0.0, 128
      %1184 = vxpose.xlu0.b32.cont [9/16] 0.0, 128
      %1185 = vxpose.xlu0.b32.cont [10/16] 0.0, 128
      %1186 = vxpose.xlu0.b32.cont [11/16] 0.0, 128
      %1187 = vxpose.xlu0.b32.cont [12/16] 0.0, 128
      %1188 = vxpose.xlu0.b32.cont [13/16] 0.0, 128
      %1189 = vxpose.xlu0.b32.cont [14/16] 0.0, 128
      %1190 = vxpose.xlu0.b32.cont [15/16] 0.0, 128
      %1191 = vxpose.xlu0.b32.end [16/16] 0.0, 128
      %v1192 = vpop.trf.xlu0
      %v1193 = vpop.trf.xlu0
      %v1194 = vpop.trf.xlu0
      %v1195 = vpop.trf.xlu0
      %v1196 = vpop.trf.xlu0
      %v1197 = vpop.trf.xlu0
      %v1198 = vpop.trf.xlu0
      %v1199 = vpop.trf.xlu0
      %v1200 = vpop.trf.xlu0
      %v1201 = vpop.trf.xlu0
      %v1202 = vpop.trf.xlu0
      %v1203 = vpop.trf.xlu0
      %v1204 = vpop.trf.xlu0
      %v1205 = vpop.trf.xlu0
      %v1206 = vpop.trf.xlu0
      %v1207 = vpop.trf.xlu0
      %1208 = vxpose.xlu0.b32.start [1/16] %v1071, 128
      %1209 = vxpose.xlu0.b32.cont [2/16] 0.0, 128
      %1210 = vxpose.xlu0.b32.cont [3/16] 0.0, 128
      %1211 = vxpose.xlu0.b32.cont [4/16] 0.0, 128
      %1212 = vxpose.xlu0.b32.cont [5/16] 0.0, 128
      %1213 = vxpose.xlu0.b32.cont [6/16] 0.0, 128
      %1214 = vxpose.xlu0.b32.cont [7/16] 0.0, 128
      %1215 = vxpose.xlu0.b32.cont [8/16] 0.0, 128
      %1216 = vxpose.xlu0.b32.cont [9/16] 0.0, 128
      %1217 = vxpose.xlu0.b32.cont [10/16] 0.0, 128
      %1218 = vxpose.xlu0.b32.cont [11/16] 0.0, 128
      %1219 = vxpose.xlu0.b32.cont [12/16] 0.0, 128
      %1220 = vxpose.xlu0.b32.cont [13/16] 0.0, 128
      %1221 = vxpose.xlu0.b32.cont [14/16] 0.0, 128
      %1222 = vxpose.xlu0.b32.cont [15/16] 0.0, 128
      %1223 = vxpose.xlu0.b32.end [16/16] 0.0, 128
      %v1224 = vpop.trf.xlu0
      %v1225 = vpop.trf.xlu0
      %v1226 = vpop.trf.xlu0
      %v1227 = vpop.trf.xlu0
      %v1228 = vpop.trf.xlu0
      %v1229 = vpop.trf.xlu0
      %v1230 = vpop.trf.xlu0
      %v1231 = vpop.trf.xlu0
      %v1232 = vpop.trf.xlu0
      %v1233 = vpop.trf.xlu0
      %v1234 = vpop.trf.xlu0
      %v1235 = vpop.trf.xlu0
      %v1236 = vpop.trf.xlu0
      %v1237 = vpop.trf.xlu0
      %v1238 = vpop.trf.xlu0
      %v1239 = vpop.trf.xlu0
      %1240 = vxpose.xlu0.b32.start [1/16] %v1073, 128
      %1241 = vxpose.xlu0.b32.cont [2/16] 0.0, 128
      %1242 = vxpose.xlu0.b32.cont [3/16] 0.0, 128
      %1243 = vxpose.xlu0.b32.cont [4/16] 0.0, 128
      %1244 = vxpose.xlu0.b32.cont [5/16] 0.0, 128
      %1245 = vxpose.xlu0.b32.cont [6/16] 0.0, 128
      %1246 = vxpose.xlu0.b32.cont [7/16] 0.0, 128
      %1247 = vxpose.xlu0.b32.cont [8/16] 0.0, 128
      %1248 = vxpose.xlu0.b32.cont [9/16] 0.0, 128
      %1249 = vxpose.xlu0.b32.cont [10/16] 0.0, 128
      %1250 = vxpose.xlu0.b32.cont [11/16] 0.0, 128
      %1251 = vxpose.xlu0.b32.cont [12/16] 0.0, 128
      %1252 = vxpose.xlu0.b32.cont [13/16] 0.0, 128
      %1253 = vxpose.xlu0.b32.cont [14/16] 0.0, 128
      %1254 = vxpose.xlu0.b32.cont [15/16] 0.0, 128
      %1255 = vxpose.xlu0.b32.end [16/16] 0.0, 128
      %v1256 = vpop.trf.xlu0
      %v1257 = vpop.trf.xlu0
      %v1258 = vpop.trf.xlu0
      %v1259 = vpop.trf.xlu0
      %v1260 = vpop.trf.xlu0
      %v1261 = vpop.trf.xlu0
      %v1262 = vpop.trf.xlu0
      %v1263 = vpop.trf.xlu0
      %v1264 = vpop.trf.xlu0
      %v1265 = vpop.trf.xlu0
      %v1266 = vpop.trf.xlu0
      %v1267 = vpop.trf.xlu0
      %v1268 = vpop.trf.xlu0
      %v1269 = vpop.trf.xlu0
      %v1270 = vpop.trf.xlu0
      %v1271 = vpop.trf.xlu0
      %1272 = vxpose.xlu0.b32.start [1/16] %v1076, 128
      %1273 = vxpose.xlu0.b32.cont [2/16] 0.0, 128
      %1274 = vxpose.xlu0.b32.cont [3/16] 0.0, 128
      %1275 = vxpose.xlu0.b32.cont [4/16] 0.0, 128
      %1276 = vxpose.xlu0.b32.cont [5/16] 0.0, 128
      %1277 = vxpose.xlu0.b32.cont [6/16] 0.0, 128
      %1278 = vxpose.xlu0.b32.cont [7/16] 0.0, 128
      %1279 = vxpose.xlu0.b32.cont [8/16] 0.0, 128
      %1280 = vxpose.xlu0.b32.cont [9/16] 0.0, 128
      %1281 = vxpose.xlu0.b32.cont [10/16] 0.0, 128
      %1282 = vxpose.xlu0.b32.cont [11/16] 0.0, 128
      %1283 = vxpose.xlu0.b32.cont [12/16] 0.0, 128
      %1284 = vxpose.xlu0.b32.cont [13/16] 0.0, 128
      %1285 = vxpose.xlu0.b32.cont [14/16] 0.0, 128
      %1286 = vxpose.xlu0.b32.cont [15/16] 0.0, 128
      %1287 = vxpose.xlu0.b32.end [16/16] 0.0, 128
      %v1288 = vpop.trf.xlu0
      %v1289 = vpop.trf.xlu0
      %v1290 = vpop.trf.xlu0
      %v1291 = vpop.trf.xlu0
      %v1292 = vpop.trf.xlu0
      %v1293 = vpop.trf.xlu0
      %v1294 = vpop.trf.xlu0
      %v1295 = vpop.trf.xlu0
      %v1296 = vpop.trf.xlu0
      %v1297 = vpop.trf.xlu0
      %v1298 = vpop.trf.xlu0
      %v1299 = vpop.trf.xlu0
      %v1300 = vpop.trf.xlu0
      %v1301 = vpop.trf.xlu0
      %v1302 = vpop.trf.xlu0
      %v1303 = vpop.trf.xlu0
      %1304 = vxpose.xlu0.b32.start [1/16] %v1078, 128
      %1305 = vxpose.xlu0.b32.cont [2/16] 0.0, 128
      %1306 = vxpose.xlu0.b32.cont [3/16] 0.0, 128
      %1307 = vxpose.xlu0.b32.cont [4/16] 0.0, 128
      %1308 = vxpose.xlu0.b32.cont [5/16] 0.0, 128
      %1309 = vxpose.xlu0.b32.cont [6/16] 0.0, 128
      %1310 = vxpose.xlu0.b32.cont [7/16] 0.0, 128
      %1311 = vxpose.xlu0.b32.cont [8/16] 0.0, 128
      %1312 = vxpose.xlu0.b32.cont [9/16] 0.0, 128
      %1313 = vxpose.xlu0.b32.cont [10/16] 0.0, 128
      %1314 = vxpose.xlu0.b32.cont [11/16] 0.0, 128
      %1315 = vxpose.xlu0.b32.cont [12/16] 0.0, 128
      %1316 = vxpose.xlu0.b32.cont [13/16] 0.0, 128
      %1317 = vxpose.xlu0.b32.cont [14/16] 0.0, 128
      %1318 = vxpose.xlu0.b32.cont [15/16] 0.0, 128
      %1319 = vxpose.xlu0.b32.end [16/16] 0.0, 128
      %v1320 = vpop.trf.xlu0
      %v1321 = vpop.trf.xlu0
      %v1322 = vpop.trf.xlu0
      %v1323 = vpop.trf.xlu0
      %v1324 = vpop.trf.xlu0
      %v1325 = vpop.trf.xlu0
      %v1326 = vpop.trf.xlu0
      %v1327 = vpop.trf.xlu0
      %v1328 = vpop.trf.xlu0
      %v1329 = vpop.trf.xlu0
      %v1330 = vpop.trf.xlu0
      %v1331 = vpop.trf.xlu0
      %v1332 = vpop.trf.xlu0
      %v1333 = vpop.trf.xlu0
      %v1334 = vpop.trf.xlu0
      %v1335 = vpop.trf.xlu0
      %s1336 = scalar_lea.vmem %s173, 64
      %1337 = vst.msk [vmem:[%s1336] sm:$0xff] %vm811, %v1096
      %1338 = vst.msk [vmem:[%s1336 + $0x8] sm:$0xff] %vm811, %v1128
      %1339 = vst.msk [vmem:[%s1336 + $0x10] sm:$0xff] %vm811, %v1160
      %1340 = vst.msk [vmem:[%s1336 + $0x18] sm:$0xff] %vm811, %v1192
      %1341 = vst.msk [vmem:[%s1336 + $0x20] sm:$0xff] %vm811, %v1224
      %1342 = vst.msk [vmem:[%s1336 + $0x28] sm:$0xff] %vm811, %v1256
      %1343 = vst.msk [vmem:[%s1336 + $0x30] sm:$0xff] %vm811, %v1288
      %1344 = vst.msk [vmem:[%s1336 + $0x38] sm:$0xff] %vm811, %v1320
      %s1345 = scalar_lea.vmem %s166, 16
      %v1346 = vld [vmem:[%s1345] sm:$0xf]
      %v1347 = vld [vmem:[%s1345 + $0x4] sm:$0xf]
      %s1348 = scalar_lea.vmem %s159, 8
      %v1349 = vld [vmem:[%s1348] sm:$0xf]
      %v1352 = vunpack.c.l.b16 %v1346
      %v1353 = vunpack.c.l.b16 %v1347
      %v1354 = vpack.c.b16 %v1353, %v1352
      %1356 = vmatpush.bf16.msra.mxu0 0
      %1357 = vmatpush.bf16.msra.mxu0 0
      %1358 = vmatpush.bf16.msra.mxu0 0
      %1359 = vmatpush.bf16.msra.mxu0 0
      %1360 = vmatpush.bf16.msra.mxu0 0
      %1361 = vmatpush.bf16.msra.mxu0 0
      %1362 = vmatpush.bf16.msra.mxu0 0
      %1363 = vmatpush.bf16.msra.mxu0 %v1354
      %1364 = vmatmul.bf16.gmra.mxu0 %v283
      %v1365 = vpop.f32.mrf.mxu0
      %v1366 = vadd.f32 0.0, %v1365
      %v1367 = vpop.f32.mrf.mxu0
      %v1368 = vadd.f32 0.0, %v1367
      %1369 = vmatmul.bf16.gmra.mxu0 %v286
      %v1370 = vpop.f32.mrf.mxu0
      %v1371 = vadd.f32 0.0, %v1370
      %v1372 = vpop.f32.mrf.mxu0
      %v1373 = vadd.f32 0.0, %v1372
      %1374 = vmatmul.bf16.gmra.mxu0 %v289
      %v1375 = vpop.f32.mrf.mxu0
      %v1376 = vadd.f32 0.0, %v1375
      %v1377 = vpop.f32.mrf.mxu0
      %v1378 = vadd.f32 0.0, %v1377
      %1379 = vmatmul.bf16.gmra.mxu0 %v292
      %v1380 = vpop.f32.mrf.mxu0
      %v1381 = vadd.f32 0.0, %v1380
      %v1382 = vpop.f32.mrf.mxu0
      %v1383 = vadd.f32 0.0, %v1382
      %1384 = vmatmul.bf16.gmra.mxu0 %v295
      %v1385 = vpop.f32.mrf.mxu0
      %v1386 = vadd.f32 0.0, %v1385
      %v1387 = vpop.f32.mrf.mxu0
      %v1388 = vadd.f32 0.0, %v1387
      %1389 = vmatmul.bf16.gmra.mxu0 %v298
      %v1390 = vpop.f32.mrf.mxu0
      %v1391 = vadd.f32 0.0, %v1390
      %v1392 = vpop.f32.mrf.mxu0
      %v1393 = vadd.f32 0.0, %v1392
      %1394 = vmatmul.bf16.gmra.mxu0 %v301
      %v1395 = vpop.f32.mrf.mxu0
      %v1396 = vadd.f32 0.0, %v1395
      %v1397 = vpop.f32.mrf.mxu0
      %v1398 = vadd.f32 0.0, %v1397
      %1399 = vmatmul.bf16.gmra.mxu0 %v304
      %v1400 = vpop.f32.mrf.mxu0
      %v1401 = vadd.f32 0.0, %v1400
      %v1402 = vpop.f32.mrf.mxu0
      %v1403 = vadd.f32 0.0, %v1402
      %1404 = vdwg.mxu0
      %v1405 = vpack.c.bf16 %v1368, %v1366
      %v1406 = vpack.c.bf16 %v1373, %v1371
      %v1407 = vpack.c.bf16 %v1378, %v1376
      %v1408 = vpack.c.bf16 %v1383, %v1381
      %v1409 = vpack.c.bf16 %v1388, %v1386
      %v1410 = vpack.c.bf16 %v1393, %v1391
      %v1411 = vpack.c.bf16 %v1398, %v1396
      %v1412 = vpack.c.bf16 %v1403, %v1401
      %1413 = vxpose.xlu0.c.b16.start [1/8] %v1405, 128
      %1414 = vxpose.xlu0.c.b16.cont [2/8] 0, 128
      %1415 = vxpose.xlu0.c.b16.cont [3/8] 0, 128
      %1416 = vxpose.xlu0.c.b16.cont [4/8] 0, 128
      %1417 = vxpose.xlu0.c.b16.cont [5/8] 0, 128
      %1418 = vxpose.xlu0.c.b16.cont [6/8] 0, 128
      %1419 = vxpose.xlu0.c.b16.cont [7/8] 0, 128
      %1420 = vxpose.xlu0.c.b16.end [8/8] 0, 128
      %v1421 = vpop.trf.xlu0
      %v1422 = vpop.trf.xlu0
      %v1423 = vpop.trf.xlu0
      %v1424 = vpop.trf.xlu0
      %v1425 = vpop.trf.xlu0
      %v1426 = vpop.trf.xlu0
      %v1427 = vpop.trf.xlu0
      %v1428 = vpop.trf.xlu0
      %1429 = vxpose.xlu0.c.b16.start [1/8] %v1406, 128
      %1430 = vxpose.xlu0.c.b16.cont [2/8] 0, 128
      %1431 = vxpose.xlu0.c.b16.cont [3/8] 0, 128
      %1432 = vxpose.xlu0.c.b16.cont [4/8] 0, 128
      %1433 = vxpose.xlu0.c.b16.cont [5/8] 0, 128
      %1434 = vxpose.xlu0.c.b16.cont [6/8] 0, 128
      %1435 = vxpose.xlu0.c.b16.cont [7/8] 0, 128
      %1436 = vxpose.xlu0.c.b16.end [8/8] 0, 128
      %v1437 = vpop.trf.xlu0
      %v1438 = vpop.trf.xlu0
      %v1439 = vpop.trf.xlu0
      %v1440 = vpop.trf.xlu0
      %v1441 = vpop.trf.xlu0
      %v1442 = vpop.trf.xlu0
      %v1443 = vpop.trf.xlu0
      %v1444 = vpop.trf.xlu0
      %1445 = vxpose.xlu0.c.b16.start [1/8] %v1407, 128
      %1446 = vxpose.xlu0.c.b16.cont [2/8] 0, 128
      %1447 = vxpose.xlu0.c.b16.cont [3/8] 0, 128
      %1448 = vxpose.xlu0.c.b16.cont [4/8] 0, 128
      %1449 = vxpose.xlu0.c.b16.cont [5/8] 0, 128
      %1450 = vxpose.xlu0.c.b16.cont [6/8] 0, 128
      %1451 = vxpose.xlu0.c.b16.cont [7/8] 0, 128
      %1452 = vxpose.xlu0.c.b16.end [8/8] 0, 128
      %v1453 = vpop.trf.xlu0
      %v1454 = vpop.trf.xlu0
      %v1455 = vpop.trf.xlu0
      %v1456 = vpop.trf.xlu0
      %v1457 = vpop.trf.xlu0
      %v1458 = vpop.trf.xlu0
      %v1459 = vpop.trf.xlu0
      %v1460 = vpop.trf.xlu0
      %1461 = vxpose.xlu0.c.b16.start [1/8] %v1408, 128
      %1462 = vxpose.xlu0.c.b16.cont [2/8] 0, 128
      %1463 = vxpose.xlu0.c.b16.cont [3/8] 0, 128
      %1464 = vxpose.xlu0.c.b16.cont [4/8] 0, 128
      %1465 = vxpose.xlu0.c.b16.cont [5/8] 0, 128
      %1466 = vxpose.xlu0.c.b16.cont [6/8] 0, 128
      %1467 = vxpose.xlu0.c.b16.cont [7/8] 0, 128
      %1468 = vxpose.xlu0.c.b16.end [8/8] 0, 128
      %v1469 = vpop.trf.xlu0
      %v1470 = vpop.trf.xlu0
      %v1471 = vpop.trf.xlu0
      %v1472 = vpop.trf.xlu0
      %v1473 = vpop.trf.xlu0
      %v1474 = vpop.trf.xlu0
      %v1475 = vpop.trf.xlu0
      %v1476 = vpop.trf.xlu0
      %1477 = vxpose.xlu0.c.b16.start [1/8] %v1409, 128
      %1478 = vxpose.xlu0.c.b16.cont [2/8] 0, 128
      %1479 = vxpose.xlu0.c.b16.cont [3/8] 0, 128
      %1480 = vxpose.xlu0.c.b16.cont [4/8] 0, 128
      %1481 = vxpose.xlu0.c.b16.cont [5/8] 0, 128
      %1482 = vxpose.xlu0.c.b16.cont [6/8] 0, 128
      %1483 = vxpose.xlu0.c.b16.cont [7/8] 0, 128
      %1484 = vxpose.xlu0.c.b16.end [8/8] 0, 128
      %v1485 = vpop.trf.xlu0
      %v1486 = vpop.trf.xlu0
      %v1487 = vpop.trf.xlu0
      %v1488 = vpop.trf.xlu0
      %v1489 = vpop.trf.xlu0
      %v1490 = vpop.trf.xlu0
      %v1491 = vpop.trf.xlu0
      %v1492 = vpop.trf.xlu0
      %1493 = vxpose.xlu0.c.b16.start [1/8] %v1410, 128
      %1494 = vxpose.xlu0.c.b16.cont [2/8] 0, 128
      %1495 = vxpose.xlu0.c.b16.cont [3/8] 0, 128
      %1496 = vxpose.xlu0.c.b16.cont [4/8] 0, 128
      %1497 = vxpose.xlu0.c.b16.cont [5/8] 0, 128
      %1498 = vxpose.xlu0.c.b16.cont [6/8] 0, 128
      %1499 = vxpose.xlu0.c.b16.cont [7/8] 0, 128
      %1500 = vxpose.xlu0.c.b16.end [8/8] 0, 128
      %v1501 = vpop.trf.xlu0
      %v1502 = vpop.trf.xlu0
      %v1503 = vpop.trf.xlu0
      %v1504 = vpop.trf.xlu0
      %v1505 = vpop.trf.xlu0
      %v1506 = vpop.trf.xlu0
      %v1507 = vpop.trf.xlu0
      %v1508 = vpop.trf.xlu0
      %1509 = vxpose.xlu0.c.b16.start [1/8] %v1411, 128
      %1510 = vxpose.xlu0.c.b16.cont [2/8] 0, 128
      %1511 = vxpose.xlu0.c.b16.cont [3/8] 0, 128
      %1512 = vxpose.xlu0.c.b16.cont [4/8] 0, 128
      %1513 = vxpose.xlu0.c.b16.cont [5/8] 0, 128
      %1514 = vxpose.xlu0.c.b16.cont [6/8] 0, 128
      %1515 = vxpose.xlu0.c.b16.cont [7/8] 0, 128
      %1516 = vxpose.xlu0.c.b16.end [8/8] 0, 128
      %v1517 = vpop.trf.xlu0
      %v1518 = vpop.trf.xlu0
      %v1519 = vpop.trf.xlu0
      %v1520 = vpop.trf.xlu0
      %v1521 = vpop.trf.xlu0
      %v1522 = vpop.trf.xlu0
      %v1523 = vpop.trf.xlu0
      %v1524 = vpop.trf.xlu0
      %1525 = vxpose.xlu0.c.b16.start [1/8] %v1412, 128
      %1526 = vxpose.xlu0.c.b16.cont [2/8] 0, 128
      %1527 = vxpose.xlu0.c.b16.cont [3/8] 0, 128
      %1528 = vxpose.xlu0.c.b16.cont [4/8] 0, 128
      %1529 = vxpose.xlu0.c.b16.cont [5/8] 0, 128
      %1530 = vxpose.xlu0.c.b16.cont [6/8] 0, 128
      %1531 = vxpose.xlu0.c.b16.cont [7/8] 0, 128
      %1532 = vxpose.xlu0.c.b16.end [8/8] 0, 128
      %v1533 = vpop.trf.xlu0
      %v1534 = vpop.trf.xlu0
      %v1535 = vpop.trf.xlu0
      %v1536 = vpop.trf.xlu0
      %v1537 = vpop.trf.xlu0
      %v1538 = vpop.trf.xlu0
      %v1539 = vpop.trf.xlu0
      %v1540 = vpop.trf.xlu0
      %v1549 = vunpack.c.l.b16 %v1421
      %v1550 = vunpack.c.l.b16 %v1437
      %v1551 = vunpack.c.l.b16 %v1453
      %v1552 = vunpack.c.l.b16 %v1469
      %v1553 = vunpack.c.l.b16 %v1485
      %v1554 = vunpack.c.l.b16 %v1501
      %v1555 = vunpack.c.l.b16 %v1517
      %v1556 = vunpack.c.l.b16 %v1533
      %v1557 = vpack.c.b16 %v1550, %v1549
      %v1558 = vpack.c.b16 %v1552, %v1551
      %v1559 = vpack.c.b16 %v1554, %v1553
      %v1560 = vpack.c.b16 %v1556, %v1555
      %v1562 = vsel %vm281, %v1557, 0
      %v1565 = vsel %vm281, %v1558, 0
      %v1568 = vsel %vm281, %v1559, 0
      %v1571 = vsel %vm281, %v1560, 0
      %v1574 = vsel %vm281, %v1349, 0
      %1576 = vmatpush.bf16.xpose.msra.mxu0 0
      %1577 = vmatpush.bf16.xpose.msra.mxu0 0
      %1578 = vmatpush.bf16.xpose.msra.mxu0 0
      %1579 = vmatpush.bf16.xpose.msra.mxu0 0
      %1580 = vmatpush.bf16.xpose.msra.mxu0 0
      %1581 = vmatpush.bf16.xpose.msra.mxu0 0
      %1582 = vmatpush.bf16.xpose.msra.mxu0 0
      %1583 = vmatpush.bf16.xpose.msra.mxu0 %v1574
      %1584 = vmatmul.bf16.gmra.mxu0 %v1562
      %v1585 = vpop.f32.mrf.mxu0
      %v1586 = vadd.f32 0.0, %v1585
      %v1587 = vpop.f32.mrf.mxu0
      %v1588 = vadd.f32 0.0, %v1587
      %1589 = vmatmul.bf16.gmra.mxu0 %v1565
      %v1590 = vpop.f32.mrf.mxu0
      %v1591 = vadd.f32 0.0, %v1590
      %v1592 = vpop.f32.mrf.mxu0
      %v1593 = vadd.f32 0.0, %v1592
      %1594 = vmatmul.bf16.gmra.mxu0 %v1568
      %v1595 = vpop.f32.mrf.mxu0
      %v1596 = vadd.f32 0.0, %v1595
      %v1597 = vpop.f32.mrf.mxu0
      %v1598 = vadd.f32 0.0, %v1597
      %1599 = vmatmul.bf16.gmra.mxu0 %v1571
      %v1600 = vpop.f32.mrf.mxu0
      %v1601 = vadd.f32 0.0, %v1600
      %v1602 = vpop.f32.mrf.mxu0
      %v1603 = vadd.f32 0.0, %v1602
      %1604 = vdwg.mxu0
      %1605 = vxpose.xlu0.b32.start [1/16] %v1586, 128
      %1606 = vxpose.xlu0.b32.cont [2/16] 0.0, 128
      %1607 = vxpose.xlu0.b32.cont [3/16] 0.0, 128
      %1608 = vxpose.xlu0.b32.cont [4/16] 0.0, 128
      %1609 = vxpose.xlu0.b32.cont [5/16] 0.0, 128
      %1610 = vxpose.xlu0.b32.cont [6/16] 0.0, 128
      %1611 = vxpose.xlu0.b32.cont [7/16] 0.0, 128
      %1612 = vxpose.xlu0.b32.cont [8/16] 0.0, 128
      %1613 = vxpose.xlu0.b32.cont [9/16] 0.0, 128
      %1614 = vxpose.xlu0.b32.cont [10/16] 0.0, 128
      %1615 = vxpose.xlu0.b32.cont [11/16] 0.0, 128
      %1616 = vxpose.xlu0.b32.cont [12/16] 0.0, 128
      %1617 = vxpose.xlu0.b32.cont [13/16] 0.0, 128
      %1618 = vxpose.xlu0.b32.cont [14/16] 0.0, 128
      %1619 = vxpose.xlu0.b32.cont [15/16] 0.0, 128
      %1620 = vxpose.xlu0.b32.end [16/16] 0.0, 128
      %v1621 = vpop.trf.xlu0
      %v1622 = vpop.trf.xlu0
      %v1623 = vpop.trf.xlu0
      %v1624 = vpop.trf.xlu0
      %v1625 = vpop.trf.xlu0
      %v1626 = vpop.trf.xlu0
      %v1627 = vpop.trf.xlu0
      %v1628 = vpop.trf.xlu0
      %v1629 = vpop.trf.xlu0
      %v1630 = vpop.trf.xlu0
      %v1631 = vpop.trf.xlu0
      %v1632 = vpop.trf.xlu0
      %v1633 = vpop.trf.xlu0
      %v1634 = vpop.trf.xlu0
      %v1635 = vpop.trf.xlu0
      %v1636 = vpop.trf.xlu0
      %1637 = vxpose.xlu0.b32.start [1/16] %v1588, 128
      %1638 = vxpose.xlu0.b32.cont [2/16] 0.0, 128
      %1639 = vxpose.xlu0.b32.cont [3/16] 0.0, 128
      %1640 = vxpose.xlu0.b32.cont [4/16] 0.0, 128
      %1641 = vxpose.xlu0.b32.cont [5/16] 0.0, 128
      %1642 = vxpose.xlu0.b32.cont [6/16] 0.0, 128
      %1643 = vxpose.xlu0.b32.cont [7/16] 0.0, 128
      %1644 = vxpose.xlu0.b32.cont [8/16] 0.0, 128
      %1645 = vxpose.xlu0.b32.cont [9/16] 0.0, 128
      %1646 = vxpose.xlu0.b32.cont [10/16] 0.0, 128
      %1647 = vxpose.xlu0.b32.cont [11/16] 0.0, 128
      %1648 = vxpose.xlu0.b32.cont [12/16] 0.0, 128
      %1649 = vxpose.xlu0.b32.cont [13/16] 0.0, 128
      %1650 = vxpose.xlu0.b32.cont [14/16] 0.0, 128
      %1651 = vxpose.xlu0.b32.cont [15/16] 0.0, 128
      %1652 = vxpose.xlu0.b32.end [16/16] 0.0, 128
      %v1653 = vpop.trf.xlu0
      %v1654 = vpop.trf.xlu0
      %v1655 = vpop.trf.xlu0
      %v1656 = vpop.trf.xlu0
      %v1657 = vpop.trf.xlu0
      %v1658 = vpop.trf.xlu0
      %v1659 = vpop.trf.xlu0
      %v1660 = vpop.trf.xlu0
      %v1661 = vpop.trf.xlu0
      %v1662 = vpop.trf.xlu0
      %v1663 = vpop.trf.xlu0
      %v1664 = vpop.trf.xlu0
      %v1665 = vpop.trf.xlu0
      %v1666 = vpop.trf.xlu0
      %v1667 = vpop.trf.xlu0
      %v1668 = vpop.trf.xlu0
      %1669 = vxpose.xlu0.b32.start [1/16] %v1591, 128
      %1670 = vxpose.xlu0.b32.cont [2/16] 0.0, 128
      %1671 = vxpose.xlu0.b32.cont [3/16] 0.0, 128
      %1672 = vxpose.xlu0.b32.cont [4/16] 0.0, 128
      %1673 = vxpose.xlu0.b32.cont [5/16] 0.0, 128
      %1674 = vxpose.xlu0.b32.cont [6/16] 0.0, 128
      %1675 = vxpose.xlu0.b32.cont [7/16] 0.0, 128
      %1676 = vxpose.xlu0.b32.cont [8/16] 0.0, 128
      %1677 = vxpose.xlu0.b32.cont [9/16] 0.0, 128
      %1678 = vxpose.xlu0.b32.cont [10/16] 0.0, 128
      %1679 = vxpose.xlu0.b32.cont [11/16] 0.0, 128
      %1680 = vxpose.xlu0.b32.cont [12/16] 0.0, 128
      %1681 = vxpose.xlu0.b32.cont [13/16] 0.0, 128
      %1682 = vxpose.xlu0.b32.cont [14/16] 0.0, 128
      %1683 = vxpose.xlu0.b32.cont [15/16] 0.0, 128
      %1684 = vxpose.xlu0.b32.end [16/16] 0.0, 128
      %v1685 = vpop.trf.xlu0
      %v1686 = vpop.trf.xlu0
      %v1687 = vpop.trf.xlu0
      %v1688 = vpop.trf.xlu0
      %v1689 = vpop.trf.xlu0
      %v1690 = vpop.trf.xlu0
      %v1691 = vpop.trf.xlu0
      %v1692 = vpop.trf.xlu0
      %v1693 = vpop.trf.xlu0
      %v1694 = vpop.trf.xlu0
      %v1695 = vpop.trf.xlu0
      %v1696 = vpop.trf.xlu0
      %v1697 = vpop.trf.xlu0
      %v1698 = vpop.trf.xlu0
      %v1699 = vpop.trf.xlu0
      %v1700 = vpop.trf.xlu0
      %1701 = vxpose.xlu0.b32.start [1/16] %v1593, 128
      %1702 = vxpose.xlu0.b32.cont [2/16] 0.0, 128
      %1703 = vxpose.xlu0.b32.cont [3/16] 0.0, 128
      %1704 = vxpose.xlu0.b32.cont [4/16] 0.0, 128
      %1705 = vxpose.xlu0.b32.cont [5/16] 0.0, 128
      %1706 = vxpose.xlu0.b32.cont [6/16] 0.0, 128
      %1707 = vxpose.xlu0.b32.cont [7/16] 0.0, 128
      %1708 = vxpose.xlu0.b32.cont [8/16] 0.0, 128
      %1709 = vxpose.xlu0.b32.cont [9/16] 0.0, 128
      %1710 = vxpose.xlu0.b32.cont [10/16] 0.0, 128
      %1711 = vxpose.xlu0.b32.cont [11/16] 0.0, 128
      %1712 = vxpose.xlu0.b32.cont [12/16] 0.0, 128
      %1713 = vxpose.xlu0.b32.cont [13/16] 0.0, 128
      %1714 = vxpose.xlu0.b32.cont [14/16] 0.0, 128
      %1715 = vxpose.xlu0.b32.cont [15/16] 0.0, 128
      %1716 = vxpose.xlu0.b32.end [16/16] 0.0, 128
      %v1717 = vpop.trf.xlu0
      %v1718 = vpop.trf.xlu0
      %v1719 = vpop.trf.xlu0
      %v1720 = vpop.trf.xlu0
      %v1721 = vpop.trf.xlu0
      %v1722 = vpop.trf.xlu0
      %v1723 = vpop.trf.xlu0
      %v1724 = vpop.trf.xlu0
      %v1725 = vpop.trf.xlu0
      %v1726 = vpop.trf.xlu0
      %v1727 = vpop.trf.xlu0
      %v1728 = vpop.trf.xlu0
      %v1729 = vpop.trf.xlu0
      %v1730 = vpop.trf.xlu0
      %v1731 = vpop.trf.xlu0
      %v1732 = vpop.trf.xlu0
      %1733 = vxpose.xlu0.b32.start [1/16] %v1596, 128
      %1734 = vxpose.xlu0.b32.cont [2/16] 0.0, 128
      %1735 = vxpose.xlu0.b32.cont [3/16] 0.0, 128
      %1736 = vxpose.xlu0.b32.cont [4/16] 0.0, 128
      %1737 = vxpose.xlu0.b32.cont [5/16] 0.0, 128
      %1738 = vxpose.xlu0.b32.cont [6/16] 0.0, 128
      %1739 = vxpose.xlu0.b32.cont [7/16] 0.0, 128
      %1740 = vxpose.xlu0.b32.cont [8/16] 0.0, 128
      %1741 = vxpose.xlu0.b32.cont [9/16] 0.0, 128
      %1742 = vxpose.xlu0.b32.cont [10/16] 0.0, 128
      %1743 = vxpose.xlu0.b32.cont [11/16] 0.0, 128
      %1744 = vxpose.xlu0.b32.cont [12/16] 0.0, 128
      %1745 = vxpose.xlu0.b32.cont [13/16] 0.0, 128
      %1746 = vxpose.xlu0.b32.cont [14/16] 0.0, 128
      %1747 = vxpose.xlu0.b32.cont [15/16] 0.0, 128
      %1748 = vxpose.xlu0.b32.end [16/16] 0.0, 128
      %v1749 = vpop.trf.xlu0
      %v1750 = vpop.trf.xlu0
      %v1751 = vpop.trf.xlu0
      %v1752 = vpop.trf.xlu0
      %v1753 = vpop.trf.xlu0
      %v1754 = vpop.trf.xlu0
      %v1755 = vpop.trf.xlu0
      %v1756 = vpop.trf.xlu0
      %v1757 = vpop.trf.xlu0
      %v1758 = vpop.trf.xlu0
      %v1759 = vpop.trf.xlu0
      %v1760 = vpop.trf.xlu0
      %v1761 = vpop.trf.xlu0
      %v1762 = vpop.trf.xlu0
      %v1763 = vpop.trf.xlu0
      %v1764 = vpop.trf.xlu0
      %1765 = vxpose.xlu0.b32.start [1/16] %v1598, 128
      %1766 = vxpose.xlu0.b32.cont [2/16] 0.0, 128
      %1767 = vxpose.xlu0.b32.cont [3/16] 0.0, 128
      %1768 = vxpose.xlu0.b32.cont [4/16] 0.0, 128
      %1769 = vxpose.xlu0.b32.cont [5/16] 0.0, 128
      %1770 = vxpose.xlu0.b32.cont [6/16] 0.0, 128
      %1771 = vxpose.xlu0.b32.cont [7/16] 0.0, 128
      %1772 = vxpose.xlu0.b32.cont [8/16] 0.0, 128
      %1773 = vxpose.xlu0.b32.cont [9/16] 0.0, 128
      %1774 = vxpose.xlu0.b32.cont [10/16] 0.0, 128
      %1775 = vxpose.xlu0.b32.cont [11/16] 0.0, 128
      %1776 = vxpose.xlu0.b32.cont [12/16] 0.0, 128
      %1777 = vxpose.xlu0.b32.cont [13/16] 0.0, 128
      %1778 = vxpose.xlu0.b32.cont [14/16] 0.0, 128
      %1779 = vxpose.xlu0.b32.cont [15/16] 0.0, 128
      %1780 = vxpose.xlu0.b32.end [16/16] 0.0, 128
      %v1781 = vpop.trf.xlu0
      %v1782 = vpop.trf.xlu0
      %v1783 = vpop.trf.xlu0
      %v1784 = vpop.trf.xlu0
      %v1785 = vpop.trf.xlu0
      %v1786 = vpop.trf.xlu0
      %v1787 = vpop.trf.xlu0
      %v1788 = vpop.trf.xlu0
      %v1789 = vpop.trf.xlu0
      %v1790 = vpop.trf.xlu0
      %v1791 = vpop.trf.xlu0
      %v1792 = vpop.trf.xlu0
      %v1793 = vpop.trf.xlu0
      %v1794 = vpop.trf.xlu0
      %v1795 = vpop.trf.xlu0
      %v1796 = vpop.trf.xlu0
      %1797 = vxpose.xlu0.b32.start [1/16] %v1601, 128
      %1798 = vxpose.xlu0.b32.cont [2/16] 0.0, 128
      %1799 = vxpose.xlu0.b32.cont [3/16] 0.0, 128
      %1800 = vxpose.xlu0.b32.cont [4/16] 0.0, 128
      %1801 = vxpose.xlu0.b32.cont [5/16] 0.0, 128
      %1802 = vxpose.xlu0.b32.cont [6/16] 0.0, 128
      %1803 = vxpose.xlu0.b32.cont [7/16] 0.0, 128
      %1804 = vxpose.xlu0.b32.cont [8/16] 0.0, 128
      %1805 = vxpose.xlu0.b32.cont [9/16] 0.0, 128
      %1806 = vxpose.xlu0.b32.cont [10/16] 0.0, 128
      %1807 = vxpose.xlu0.b32.cont [11/16] 0.0, 128
      %1808 = vxpose.xlu0.b32.cont [12/16] 0.0, 128
      %1809 = vxpose.xlu0.b32.cont [13/16] 0.0, 128
      %1810 = vxpose.xlu0.b32.cont [14/16] 0.0, 128
      %1811 = vxpose.xlu0.b32.cont [15/16] 0.0, 128
      %1812 = vxpose.xlu0.b32.end [16/16] 0.0, 128
      %v1813 = vpop.trf.xlu0
      %v1814 = vpop.trf.xlu0
      %v1815 = vpop.trf.xlu0
      %v1816 = vpop.trf.xlu0
      %v1817 = vpop.trf.xlu0
      %v1818 = vpop.trf.xlu0
      %v1819 = vpop.trf.xlu0
      %v1820 = vpop.trf.xlu0
      %v1821 = vpop.trf.xlu0
      %v1822 = vpop.trf.xlu0
      %v1823 = vpop.trf.xlu0
      %v1824 = vpop.trf.xlu0
      %v1825 = vpop.trf.xlu0
      %v1826 = vpop.trf.xlu0
      %v1827 = vpop.trf.xlu0
      %v1828 = vpop.trf.xlu0
      %1829 = vxpose.xlu0.b32.start [1/16] %v1603, 128
      %1830 = vxpose.xlu0.b32.cont [2/16] 0.0, 128
      %1831 = vxpose.xlu0.b32.cont [3/16] 0.0, 128
      %1832 = vxpose.xlu0.b32.cont [4/16] 0.0, 128
      %1833 = vxpose.xlu0.b32.cont [5/16] 0.0, 128
      %1834 = vxpose.xlu0.b32.cont [6/16] 0.0, 128
      %1835 = vxpose.xlu0.b32.cont [7/16] 0.0, 128
      %1836 = vxpose.xlu0.b32.cont [8/16] 0.0, 128
      %1837 = vxpose.xlu0.b32.cont [9/16] 0.0, 128
      %1838 = vxpose.xlu0.b32.cont [10/16] 0.0, 128
      %1839 = vxpose.xlu0.b32.cont [11/16] 0.0, 128
      %1840 = vxpose.xlu0.b32.cont [12/16] 0.0, 128
      %1841 = vxpose.xlu0.b32.cont [13/16] 0.0, 128
      %1842 = vxpose.xlu0.b32.cont [14/16] 0.0, 128
      %1843 = vxpose.xlu0.b32.cont [15/16] 0.0, 128
      %1844 = vxpose.xlu0.b32.end [16/16] 0.0, 128
      %v1845 = vpop.trf.xlu0
      %v1846 = vpop.trf.xlu0
      %v1847 = vpop.trf.xlu0
      %v1848 = vpop.trf.xlu0
      %v1849 = vpop.trf.xlu0
      %v1850 = vpop.trf.xlu0
      %v1851 = vpop.trf.xlu0
      %v1852 = vpop.trf.xlu0
      %v1853 = vpop.trf.xlu0
      %v1854 = vpop.trf.xlu0
      %v1855 = vpop.trf.xlu0
      %v1856 = vpop.trf.xlu0
      %v1857 = vpop.trf.xlu0
      %v1858 = vpop.trf.xlu0
      %v1859 = vpop.trf.xlu0
      %v1860 = vpop.trf.xlu0
      %s1861 = scalar_lea.vmem %s173, 128
      %1862 = vst.msk [vmem:[%s1861] sm:$0xff] %vm811, %v1621
      %1863 = vst.msk [vmem:[%s1861 + $0x8] sm:$0xff] %vm811, %v1653
      %1864 = vst.msk [vmem:[%s1861 + $0x10] sm:$0xff] %vm811, %v1685
      %1865 = vst.msk [vmem:[%s1861 + $0x18] sm:$0xff] %vm811, %v1717
      %1866 = vst.msk [vmem:[%s1861 + $0x20] sm:$0xff] %vm811, %v1749
      %1867 = vst.msk [vmem:[%s1861 + $0x28] sm:$0xff] %vm811, %v1781
      %1868 = vst.msk [vmem:[%s1861 + $0x30] sm:$0xff] %vm811, %v1813
      %1869 = vst.msk [vmem:[%s1861 + $0x38] sm:$0xff] %vm811, %v1845
      %s1870 = scalar_lea.vmem %s166, 24
      %v1871 = vld [vmem:[%s1870] sm:$0xf]
      %v1872 = vld [vmem:[%s1870 + $0x4] sm:$0xf]
      %s1873 = scalar_lea.vmem %s159, 12
      %v1874 = vld [vmem:[%s1873] sm:$0xf]
      %v1877 = vunpack.c.l.b16 %v1871
      %v1878 = vunpack.c.l.b16 %v1872
      %v1879 = vpack.c.b16 %v1878, %v1877
      %1881 = vmatpush.bf16.msra.mxu0 0
      %1882 = vmatpush.bf16.msra.mxu0 0
      %1883 = vmatpush.bf16.msra.mxu0 0
      %1884 = vmatpush.bf16.msra.mxu0 0
      %1885 = vmatpush.bf16.msra.mxu0 0
      %1886 = vmatpush.bf16.msra.mxu0 0
      %1887 = vmatpush.bf16.msra.mxu0 0
      %1888 = vmatpush.bf16.msra.mxu0 %v1879
      %1889 = vmatmul.bf16.gmra.mxu0 %v283
      %v1890 = vpop.f32.mrf.mxu0
      %v1891 = vadd.f32 0.0, %v1890
      %v1892 = vpop.f32.mrf.mxu0
      %v1893 = vadd.f32 0.0, %v1892
      %1894 = vmatmul.bf16.gmra.mxu0 %v286
      %v1895 = vpop.f32.mrf.mxu0
      %v1896 = vadd.f32 0.0, %v1895
      %v1897 = vpop.f32.mrf.mxu0
      %v1898 = vadd.f32 0.0, %v1897
      %1899 = vmatmul.bf16.gmra.mxu0 %v289
      %v1900 = vpop.f32.mrf.mxu0
      %v1901 = vadd.f32 0.0, %v1900
      %v1902 = vpop.f32.mrf.mxu0
      %v1903 = vadd.f32 0.0, %v1902
      %1904 = vmatmul.bf16.gmra.mxu0 %v292
      %v1905 = vpop.f32.mrf.mxu0
      %v1906 = vadd.f32 0.0, %v1905
      %v1907 = vpop.f32.mrf.mxu0
      %v1908 = vadd.f32 0.0, %v1907
      %1909 = vmatmul.bf16.gmra.mxu0 %v295
      %v1910 = vpop.f32.mrf.mxu0
      %v1911 = vadd.f32 0.0, %v1910
      %v1912 = vpop.f32.mrf.mxu0
      %v1913 = vadd.f32 0.0, %v1912
      %1914 = vmatmul.bf16.gmra.mxu0 %v298
      %v1915 = vpop.f32.mrf.mxu0
      %v1916 = vadd.f32 0.0, %v1915
      %v1917 = vpop.f32.mrf.mxu0
      %v1918 = vadd.f32 0.0, %v1917
      %1919 = vmatmul.bf16.gmra.mxu0 %v301
      %v1920 = vpop.f32.mrf.mxu0
      %v1921 = vadd.f32 0.0, %v1920
      %v1922 = vpop.f32.mrf.mxu0
      %v1923 = vadd.f32 0.0, %v1922
      %1924 = vmatmul.bf16.gmra.mxu0 %v304
      %v1925 = vpop.f32.mrf.mxu0
      %v1926 = vadd.f32 0.0, %v1925
      %v1927 = vpop.f32.mrf.mxu0
      %v1928 = vadd.f32 0.0, %v1927
      %1929 = vdwg.mxu0
      %v1930 = vpack.c.bf16 %v1893, %v1891
      %v1931 = vpack.c.bf16 %v1898, %v1896
      %v1932 = vpack.c.bf16 %v1903, %v1901
      %v1933 = vpack.c.bf16 %v1908, %v1906
      %v1934 = vpack.c.bf16 %v1913, %v1911
      %v1935 = vpack.c.bf16 %v1918, %v1916
      %v1936 = vpack.c.bf16 %v1923, %v1921
      %v1937 = vpack.c.bf16 %v1928, %v1926
      %1938 = vxpose.xlu0.c.b16.start [1/8] %v1930, 128
      %1939 = vxpose.xlu0.c.b16.cont [2/8] 0, 128
      %1940 = vxpose.xlu0.c.b16.cont [3/8] 0, 128
      %1941 = vxpose.xlu0.c.b16.cont [4/8] 0, 128
      %1942 = vxpose.xlu0.c.b16.cont [5/8] 0, 128
      %1943 = vxpose.xlu0.c.b16.cont [6/8] 0, 128
      %1944 = vxpose.xlu0.c.b16.cont [7/8] 0, 128
      %1945 = vxpose.xlu0.c.b16.end [8/8] 0, 128
      %v1946 = vpop.trf.xlu0
      %v1947 = vpop.trf.xlu0
      %v1948 = vpop.trf.xlu0
      %v1949 = vpop.trf.xlu0
      %v1950 = vpop.trf.xlu0
      %v1951 = vpop.trf.xlu0
      %v1952 = vpop.trf.xlu0
      %v1953 = vpop.trf.xlu0
      %1954 = vxpose.xlu0.c.b16.start [1/8] %v1931, 128
      %1955 = vxpose.xlu0.c.b16.cont [2/8] 0, 128
      %1956 = vxpose.xlu0.c.b16.cont [3/8] 0, 128
      %1957 = vxpose.xlu0.c.b16.cont [4/8] 0, 128
      %1958 = vxpose.xlu0.c.b16.cont [5/8] 0, 128
      %1959 = vxpose.xlu0.c.b16.cont [6/8] 0, 128
      %1960 = vxpose.xlu0.c.b16.cont [7/8] 0, 128
      %1961 = vxpose.xlu0.c.b16.end [8/8] 0, 128
      %v1962 = vpop.trf.xlu0
      %v1963 = vpop.trf.xlu0
      %v1964 = vpop.trf.xlu0
      %v1965 = vpop.trf.xlu0
      %v1966 = vpop.trf.xlu0
      %v1967 = vpop.trf.xlu0
      %v1968 = vpop.trf.xlu0
      %v1969 = vpop.trf.xlu0
      %1970 = vxpose.xlu0.c.b16.start [1/8] %v1932, 128
      %1971 = vxpose.xlu0.c.b16.cont [2/8] 0, 128
      %1972 = vxpose.xlu0.c.b16.cont [3/8] 0, 128
      %1973 = vxpose.xlu0.c.b16.cont [4/8] 0, 128
      %1974 = vxpose.xlu0.c.b16.cont [5/8] 0, 128
      %1975 = vxpose.xlu0.c.b16.cont [6/8] 0, 128
      %1976 = vxpose.xlu0.c.b16.cont [7/8] 0, 128
      %1977 = vxpose.xlu0.c.b16.end [8/8] 0, 128
      %v1978 = vpop.trf.xlu0
      %v1979 = vpop.trf.xlu0
      %v1980 = vpop.trf.xlu0
      %v1981 = vpop.trf.xlu0
      %v1982 = vpop.trf.xlu0
      %v1983 = vpop.trf.xlu0
      %v1984 = vpop.trf.xlu0
      %v1985 = vpop.trf.xlu0
      %1986 = vxpose.xlu0.c.b16.start [1/8] %v1933, 128
      %1987 = vxpose.xlu0.c.b16.cont [2/8] 0, 128
      %1988 = vxpose.xlu0.c.b16.cont [3/8] 0, 128
      %1989 = vxpose.xlu0.c.b16.cont [4/8] 0, 128
      %1990 = vxpose.xlu0.c.b16.cont [5/8] 0, 128
      %1991 = vxpose.xlu0.c.b16.cont [6/8] 0, 128
      %1992 = vxpose.xlu0.c.b16.cont [7/8] 0, 128
      %1993 = vxpose.xlu0.c.b16.end [8/8] 0, 128
      %v1994 = vpop.trf.xlu0
      %v1995 = vpop.trf.xlu0
      %v1996 = vpop.trf.xlu0
      %v1997 = vpop.trf.xlu0
      %v1998 = vpop.trf.xlu0
      %v1999 = vpop.trf.xlu0
      %v2000 = vpop.trf.xlu0
      %v2001 = vpop.trf.xlu0
      %2002 = vxpose.xlu0.c.b16.start [1/8] %v1934, 128
      %2003 = vxpose.xlu0.c.b16.cont [2/8] 0, 128
      %2004 = vxpose.xlu0.c.b16.cont [3/8] 0, 128
      %2005 = vxpose.xlu0.c.b16.cont [4/8] 0, 128
      %2006 = vxpose.xlu0.c.b16.cont [5/8] 0, 128
      %2007 = vxpose.xlu0.c.b16.cont [6/8] 0, 128
      %2008 = vxpose.xlu0.c.b16.cont [7/8] 0, 128
      %2009 = vxpose.xlu0.c.b16.end [8/8] 0, 128
      %v2010 = vpop.trf.xlu0
      %v2011 = vpop.trf.xlu0
      %v2012 = vpop.trf.xlu0
      %v2013 = vpop.trf.xlu0
      %v2014 = vpop.trf.xlu0
      %v2015 = vpop.trf.xlu0
      %v2016 = vpop.trf.xlu0
      %v2017 = vpop.trf.xlu0
      %2018 = vxpose.xlu0.c.b16.start [1/8] %v1935, 128
      %2019 = vxpose.xlu0.c.b16.cont [2/8] 0, 128
      %2020 = vxpose.xlu0.c.b16.cont [3/8] 0, 128
      %2021 = vxpose.xlu0.c.b16.cont [4/8] 0, 128
      %2022 = vxpose.xlu0.c.b16.cont [5/8] 0, 128
      %2023 = vxpose.xlu0.c.b16.cont [6/8] 0, 128
      %2024 = vxpose.xlu0.c.b16.cont [7/8] 0, 128
      %2025 = vxpose.xlu0.c.b16.end [8/8] 0, 128
      %v2026 = vpop.trf.xlu0
      %v2027 = vpop.trf.xlu0
      %v2028 = vpop.trf.xlu0
      %v2029 = vpop.trf.xlu0
      %v2030 = vpop.trf.xlu0
      %v2031 = vpop.trf.xlu0
      %v2032 = vpop.trf.xlu0
      %v2033 = vpop.trf.xlu0
      %2034 = vxpose.xlu0.c.b16.start [1/8] %v1936, 128
      %2035 = vxpose.xlu0.c.b16.cont [2/8] 0, 128
      %2036 = vxpose.xlu0.c.b16.cont [3/8] 0, 128
      %2037 = vxpose.xlu0.c.b16.cont [4/8] 0, 128
      %2038 = vxpose.xlu0.c.b16.cont [5/8] 0, 128
      %2039 = vxpose.xlu0.c.b16.cont [6/8] 0, 128
      %2040 = vxpose.xlu0.c.b16.cont [7/8] 0, 128
      %2041 = vxpose.xlu0.c.b16.end [8/8] 0, 128
      %v2042 = vpop.trf.xlu0
      %v2043 = vpop.trf.xlu0
      %v2044 = vpop.trf.xlu0
      %v2045 = vpop.trf.xlu0
      %v2046 = vpop.trf.xlu0
      %v2047 = vpop.trf.xlu0
      %v2048 = vpop.trf.xlu0
      %v2049 = vpop.trf.xlu0
      %2050 = vxpose.xlu0.c.b16.start [1/8] %v1937, 128
      %2051 = vxpose.xlu0.c.b16.cont [2/8] 0, 128
      %2052 = vxpose.xlu0.c.b16.cont [3/8] 0, 128
      %2053 = vxpose.xlu0.c.b16.cont [4/8] 0, 128
      %2054 = vxpose.xlu0.c.b16.cont [5/8] 0, 128
      %2055 = vxpose.xlu0.c.b16.cont [6/8] 0, 128
      %2056 = vxpose.xlu0.c.b16.cont [7/8] 0, 128
      %2057 = vxpose.xlu0.c.b16.end [8/8] 0, 128
      %v2058 = vpop.trf.xlu0
      %v2059 = vpop.trf.xlu0
      %v2060 = vpop.trf.xlu0
      %v2061 = vpop.trf.xlu0
      %v2062 = vpop.trf.xlu0
      %v2063 = vpop.trf.xlu0
      %v2064 = vpop.trf.xlu0
      %v2065 = vpop.trf.xlu0
      %v2074 = vunpack.c.l.b16 %v1946
      %v2075 = vunpack.c.l.b16 %v1962
      %v2076 = vunpack.c.l.b16 %v1978
      %v2077 = vunpack.c.l.b16 %v1994
      %v2078 = vunpack.c.l.b16 %v2010
      %v2079 = vunpack.c.l.b16 %v2026
      %v2080 = vunpack.c.l.b16 %v2042
      %v2081 = vunpack.c.l.b16 %v2058
      %v2082 = vpack.c.b16 %v2075, %v2074
      %v2083 = vpack.c.b16 %v2077, %v2076
      %v2084 = vpack.c.b16 %v2079, %v2078
      %v2085 = vpack.c.b16 %v2081, %v2080
      %v2087 = vsel %vm281, %v2082, 0
      %v2090 = vsel %vm281, %v2083, 0
      %v2093 = vsel %vm281, %v2084, 0
      %v2096 = vsel %vm281, %v2085, 0
      %v2099 = vsel %vm281, %v1874, 0
      %2101 = vmatpush.bf16.xpose.msra.mxu0 0
      %2102 = vmatpush.bf16.xpose.msra.mxu0 0
      %2103 = vmatpush.bf16.xpose.msra.mxu0 0
      %2104 = vmatpush.bf16.xpose.msra.mxu0 0
      %2105 = vmatpush.bf16.xpose.msra.mxu0 0
      %2106 = vmatpush.bf16.xpose.msra.mxu0 0
      %2107 = vmatpush.bf16.xpose.msra.mxu0 0
      %2108 = vmatpush.bf16.xpose.msra.mxu0 %v2099
      %2109 = vmatmul.bf16.gmra.mxu0 %v2087
      %v2110 = vpop.f32.mrf.mxu0
      %v2111 = vadd.f32 0.0, %v2110
      %v2112 = vpop.f32.mrf.mxu0
      %v2113 = vadd.f32 0.0, %v2112
      %2114 = vmatmul.bf16.gmra.mxu0 %v2090
      %v2115 = vpop.f32.mrf.mxu0
      %v2116 = vadd.f32 0.0, %v2115
      %v2117 = vpop.f32.mrf.mxu0
      %v2118 = vadd.f32 0.0, %v2117
      %2119 = vmatmul.bf16.gmra.mxu0 %v2093
      %v2120 = vpop.f32.mrf.mxu0
      %v2121 = vadd.f32 0.0, %v2120
      %v2122 = vpop.f32.mrf.mxu0
      %v2123 = vadd.f32 0.0, %v2122
      %2124 = vmatmul.bf16.gmra.mxu0 %v2096
      %v2125 = vpop.f32.mrf.mxu0
      %v2126 = vadd.f32 0.0, %v2125
      %v2127 = vpop.f32.mrf.mxu0
      %v2128 = vadd.f32 0.0, %v2127
      %2129 = vdwg.mxu0
      %2130 = vxpose.xlu0.b32.start [1/16] %v2111, 128
      %2131 = vxpose.xlu0.b32.cont [2/16] 0.0, 128
      %2132 = vxpose.xlu0.b32.cont [3/16] 0.0, 128
      %2133 = vxpose.xlu0.b32.cont [4/16] 0.0, 128
      %2134 = vxpose.xlu0.b32.cont [5/16] 0.0, 128
      %2135 = vxpose.xlu0.b32.cont [6/16] 0.0, 128
      %2136 = vxpose.xlu0.b32.cont [7/16] 0.0, 128
      %2137 = vxpose.xlu0.b32.cont [8/16] 0.0, 128
      %2138 = vxpose.xlu0.b32.cont [9/16] 0.0, 128
      %2139 = vxpose.xlu0.b32.cont [10/16] 0.0, 128
      %2140 = vxpose.xlu0.b32.cont [11/16] 0.0, 128
      %2141 = vxpose.xlu0.b32.cont [12/16] 0.0, 128
      %2142 = vxpose.xlu0.b32.cont [13/16] 0.0, 128
      %2143 = vxpose.xlu0.b32.cont [14/16] 0.0, 128
      %2144 = vxpose.xlu0.b32.cont [15/16] 0.0, 128
      %2145 = vxpose.xlu0.b32.end [16/16] 0.0, 128
      %v2146 = vpop.trf.xlu0
      %v2147 = vpop.trf.xlu0
      %v2148 = vpop.trf.xlu0
      %v2149 = vpop.trf.xlu0
      %v2150 = vpop.trf.xlu0
      %v2151 = vpop.trf.xlu0
      %v2152 = vpop.trf.xlu0
      %v2153 = vpop.trf.xlu0
      %v2154 = vpop.trf.xlu0
      %v2155 = vpop.trf.xlu0
      %v2156 = vpop.trf.xlu0
      %v2157 = vpop.trf.xlu0
      %v2158 = vpop.trf.xlu0
      %v2159 = vpop.trf.xlu0
      %v2160 = vpop.trf.xlu0
      %v2161 = vpop.trf.xlu0
      %2162 = vxpose.xlu0.b32.start [1/16] %v2113, 128
      %2163 = vxpose.xlu0.b32.cont [2/16] 0.0, 128
      %2164 = vxpose.xlu0.b32.cont [3/16] 0.0, 128
      %2165 = vxpose.xlu0.b32.cont [4/16] 0.0, 128
      %2166 = vxpose.xlu0.b32.cont [5/16] 0.0, 128
      %2167 = vxpose.xlu0.b32.cont [6/16] 0.0, 128
      %2168 = vxpose.xlu0.b32.cont [7/16] 0.0, 128
      %2169 = vxpose.xlu0.b32.cont [8/16] 0.0, 128
      %2170 = vxpose.xlu0.b32.cont [9/16] 0.0, 128
      %2171 = vxpose.xlu0.b32.cont [10/16] 0.0, 128
      %2172 = vxpose.xlu0.b32.cont [11/16] 0.0, 128
      %2173 = vxpose.xlu0.b32.cont [12/16] 0.0, 128
      %2174 = vxpose.xlu0.b32.cont [13/16] 0.0, 128
      %2175 = vxpose.xlu0.b32.cont [14/16] 0.0, 128
      %2176 = vxpose.xlu0.b32.cont [15/16] 0.0, 128
      %2177 = vxpose.xlu0.b32.end [16/16] 0.0, 128
      %v2178 = vpop.trf.xlu0
      %v2179 = vpop.trf.xlu0
      %v2180 = vpop.trf.xlu0
      %v2181 = vpop.trf.xlu0
      %v2182 = vpop.trf.xlu0
      %v2183 = vpop.trf.xlu0
      %v2184 = vpop.trf.xlu0
      %v2185 = vpop.trf.xlu0
      %v2186 = vpop.trf.xlu0
      %v2187 = vpop.trf.xlu0
      %v2188 = vpop.trf.xlu0
      %v2189 = vpop.trf.xlu0
      %v2190 = vpop.trf.xlu0
      %v2191 = vpop.trf.xlu0
      %v2192 = vpop.trf.xlu0
      %v2193 = vpop.trf.xlu0
      %2194 = vxpose.xlu0.b32.start [1/16] %v2116, 128
      %2195 = vxpose.xlu0.b32.cont [2/16] 0.0, 128
      %2196 = vxpose.xlu0.b32.cont [3/16] 0.0, 128
      %2197 = vxpose.xlu0.b32.cont [4/16] 0.0, 128
      %2198 = vxpose.xlu0.b32.cont [5/16] 0.0, 128
      %2199 = vxpose.xlu0.b32.cont [6/16] 0.0, 128
      %2200 = vxpose.xlu0.b32.cont [7/16] 0.0, 128
      %2201 = vxpose.xlu0.b32.cont [8/16] 0.0, 128
      %2202 = vxpose.xlu0.b32.cont [9/16] 0.0, 128
      %2203 = vxpose.xlu0.b32.cont [10/16] 0.0, 128
      %2204 = vxpose.xlu0.b32.cont [11/16] 0.0, 128
      %2205 = vxpose.xlu0.b32.cont [12/16] 0.0, 128
      %2206 = vxpose.xlu0.b32.cont [13/16] 0.0, 128
      %2207 = vxpose.xlu0.b32.cont [14/16] 0.0, 128
      %2208 = vxpose.xlu0.b32.cont [15/16] 0.0, 128
      %2209 = vxpose.xlu0.b32.end [16/16] 0.0, 128
      %v2210 = vpop.trf.xlu0
      %v2211 = vpop.trf.xlu0
      %v2212 = vpop.trf.xlu0
      %v2213 = vpop.trf.xlu0
      %v2214 = vpop.trf.xlu0
      %v2215 = vpop.trf.xlu0
      %v2216 = vpop.trf.xlu0
      %v2217 = vpop.trf.xlu0
      %v2218 = vpop.trf.xlu0
      %v2219 = vpop.trf.xlu0
      %v2220 = vpop.trf.xlu0
      %v2221 = vpop.trf.xlu0
      %v2222 = vpop.trf.xlu0
      %v2223 = vpop.trf.xlu0
      %v2224 = vpop.trf.xlu0
      %v2225 = vpop.trf.xlu0
      %2226 = vxpose.xlu0.b32.start [1/16] %v2118, 128
      %2227 = vxpose.xlu0.b32.cont [2/16] 0.0, 128
      %2228 = vxpose.xlu0.b32.cont [3/16] 0.0, 128
      %2229 = vxpose.xlu0.b32.cont [4/16] 0.0, 128
      %2230 = vxpose.xlu0.b32.cont [5/16] 0.0, 128
      %2231 = vxpose.xlu0.b32.cont [6/16] 0.0, 128
      %2232 = vxpose.xlu0.b32.cont [7/16] 0.0, 128
      %2233 = vxpose.xlu0.b32.cont [8/16] 0.0, 128
      %2234 = vxpose.xlu0.b32.cont [9/16] 0.0, 128
      %2235 = vxpose.xlu0.b32.cont [10/16] 0.0, 128
      %2236 = vxpose.xlu0.b32.cont [11/16] 0.0, 128
      %2237 = vxpose.xlu0.b32.cont [12/16] 0.0, 128
      %2238 = vxpose.xlu0.b32.cont [13/16] 0.0, 128
      %2239 = vxpose.xlu0.b32.cont [14/16] 0.0, 128
      %2240 = vxpose.xlu0.b32.cont [15/16] 0.0, 128
      %2241 = vxpose.xlu0.b32.end [16/16] 0.0, 128
      %v2242 = vpop.trf.xlu0
      %v2243 = vpop.trf.xlu0
      %v2244 = vpop.trf.xlu0
      %v2245 = vpop.trf.xlu0
      %v2246 = vpop.trf.xlu0
      %v2247 = vpop.trf.xlu0
      %v2248 = vpop.trf.xlu0
      %v2249 = vpop.trf.xlu0
      %v2250 = vpop.trf.xlu0
      %v2251 = vpop.trf.xlu0
      %v2252 = vpop.trf.xlu0
      %v2253 = vpop.trf.xlu0
      %v2254 = vpop.trf.xlu0
      %v2255 = vpop.trf.xlu0
      %v2256 = vpop.trf.xlu0
      %v2257 = vpop.trf.xlu0
      %2258 = vxpose.xlu0.b32.start [1/16] %v2121, 128
      %2259 = vxpose.xlu0.b32.cont [2/16] 0.0, 128
      %2260 = vxpose.xlu0.b32.cont [3/16] 0.0, 128
      %2261 = vxpose.xlu0.b32.cont [4/16] 0.0, 128
      %2262 = vxpose.xlu0.b32.cont [5/16] 0.0, 128
      %2263 = vxpose.xlu0.b32.cont [6/16] 0.0, 128
      %2264 = vxpose.xlu0.b32.cont [7/16] 0.0, 128
      %2265 = vxpose.xlu0.b32.cont [8/16] 0.0, 128
      %2266 = vxpose.xlu0.b32.cont [9/16] 0.0, 128
      %2267 = vxpose.xlu0.b32.cont [10/16] 0.0, 128
      %2268 = vxpose.xlu0.b32.cont [11/16] 0.0, 128
      %2269 = vxpose.xlu0.b32.cont [12/16] 0.0, 128
      %2270 = vxpose.xlu0.b32.cont [13/16] 0.0, 128
      %2271 = vxpose.xlu0.b32.cont [14/16] 0.0, 128
      %2272 = vxpose.xlu0.b32.cont [15/16] 0.0, 128
      %2273 = vxpose.xlu0.b32.end [16/16] 0.0, 128
      %v2274 = vpop.trf.xlu0
      %v2275 = vpop.trf.xlu0
      %v2276 = vpop.trf.xlu0
      %v2277 = vpop.trf.xlu0
      %v2278 = vpop.trf.xlu0
      %v2279 = vpop.trf.xlu0
      %v2280 = vpop.trf.xlu0
      %v2281 = vpop.trf.xlu0
      %v2282 = vpop.trf.xlu0
      %v2283 = vpop.trf.xlu0
      %v2284 = vpop.trf.xlu0
      %v2285 = vpop.trf.xlu0
      %v2286 = vpop.trf.xlu0
      %v2287 = vpop.trf.xlu0
      %v2288 = vpop.trf.xlu0
      %v2289 = vpop.trf.xlu0
      %2290 = vxpose.xlu0.b32.start [1/16] %v2123, 128
      %2291 = vxpose.xlu0.b32.cont [2/16] 0.0, 128
      %2292 = vxpose.xlu0.b32.cont [3/16] 0.0, 128
      %2293 = vxpose.xlu0.b32.cont [4/16] 0.0, 128
      %2294 = vxpose.xlu0.b32.cont [5/16] 0.0, 128
      %2295 = vxpose.xlu0.b32.cont [6/16] 0.0, 128
      %2296 = vxpose.xlu0.b32.cont [7/16] 0.0, 128
      %2297 = vxpose.xlu0.b32.cont [8/16] 0.0, 128
      %2298 = vxpose.xlu0.b32.cont [9/16] 0.0, 128
      %2299 = vxpose.xlu0.b32.cont [10/16] 0.0, 128
      %2300 = vxpose.xlu0.b32.cont [11/16] 0.0, 128
      %2301 = vxpose.xlu0.b32.cont [12/16] 0.0, 128
      %2302 = vxpose.xlu0.b32.cont [13/16] 0.0, 128
      %2303 = vxpose.xlu0.b32.cont [14/16] 0.0, 128
      %2304 = vxpose.xlu0.b32.cont [15/16] 0.0, 128
      %2305 = vxpose.xlu0.b32.end [16/16] 0.0, 128
      %v2306 = vpop.trf.xlu0
      %v2307 = vpop.trf.xlu0
      %v2308 = vpop.trf.xlu0
      %v2309 = vpop.trf.xlu0
      %v2310 = vpop.trf.xlu0
      %v2311 = vpop.trf.xlu0
      %v2312 = vpop.trf.xlu0
      %v2313 = vpop.trf.xlu0
      %v2314 = vpop.trf.xlu0
      %v2315 = vpop.trf.xlu0
      %v2316 = vpop.trf.xlu0
      %v2317 = vpop.trf.xlu0
      %v2318 = vpop.trf.xlu0
      %v2319 = vpop.trf.xlu0
      %v2320 = vpop.trf.xlu0
      %v2321 = vpop.trf.xlu0
      %2322 = vxpose.xlu0.b32.start [1/16] %v2126, 128
      %2323 = vxpose.xlu0.b32.cont [2/16] 0.0, 128
      %2324 = vxpose.xlu0.b32.cont [3/16] 0.0, 128
      %2325 = vxpose.xlu0.b32.cont [4/16] 0.0, 128
      %2326 = vxpose.xlu0.b32.cont [5/16] 0.0, 128
      %2327 = vxpose.xlu0.b32.cont [6/16] 0.0, 128
      %2328 = vxpose.xlu0.b32.cont [7/16] 0.0, 128
      %2329 = vxpose.xlu0.b32.cont [8/16] 0.0, 128
      %2330 = vxpose.xlu0.b32.cont [9/16] 0.0, 128
      %2331 = vxpose.xlu0.b32.cont [10/16] 0.0, 128
      %2332 = vxpose.xlu0.b32.cont [11/16] 0.0, 128
      %2333 = vxpose.xlu0.b32.cont [12/16] 0.0, 128
      %2334 = vxpose.xlu0.b32.cont [13/16] 0.0, 128
      %2335 = vxpose.xlu0.b32.cont [14/16] 0.0, 128
      %2336 = vxpose.xlu0.b32.cont [15/16] 0.0, 128
      %2337 = vxpose.xlu0.b32.end [16/16] 0.0, 128
      %v2338 = vpop.trf.xlu0
      %v2339 = vpop.trf.xlu0
      %v2340 = vpop.trf.xlu0
      %v2341 = vpop.trf.xlu0
      %v2342 = vpop.trf.xlu0
      %v2343 = vpop.trf.xlu0
      %v2344 = vpop.trf.xlu0
      %v2345 = vpop.trf.xlu0
      %v2346 = vpop.trf.xlu0
      %v2347 = vpop.trf.xlu0
      %v2348 = vpop.trf.xlu0
      %v2349 = vpop.trf.xlu0
      %v2350 = vpop.trf.xlu0
      %v2351 = vpop.trf.xlu0
      %v2352 = vpop.trf.xlu0
      %v2353 = vpop.trf.xlu0
      %2354 = vxpose.xlu0.b32.start [1/16] %v2128, 128
      %2355 = vxpose.xlu0.b32.cont [2/16] 0.0, 128
      %2356 = vxpose.xlu0.b32.cont [3/16] 0.0, 128
      %2357 = vxpose.xlu0.b32.cont [4/16] 0.0, 128
      %2358 = vxpose.xlu0.b32.cont [5/16] 0.0, 128
      %2359 = vxpose.xlu0.b32.cont [6/16] 0.0, 128
      %2360 = vxpose.xlu0.b32.cont [7/16] 0.0, 128
      %2361 = vxpose.xlu0.b32.cont [8/16] 0.0, 128
      %2362 = vxpose.xlu0.b32.cont [9/16] 0.0, 128
      %2363 = vxpose.xlu0.b32.cont [10/16] 0.0, 128
      %2364 = vxpose.xlu0.b32.cont [11/16] 0.0, 128
      %2365 = vxpose.xlu0.b32.cont [12/16] 0.0, 128
      %2366 = vxpose.xlu0.b32.cont [13/16] 0.0, 128
      %2367 = vxpose.xlu0.b32.cont [14/16] 0.0, 128
      %2368 = vxpose.xlu0.b32.cont [15/16] 0.0, 128
      %2369 = vxpose.xlu0.b32.end [16/16] 0.0, 128
      %v2370 = vpop.trf.xlu0
      %v2371 = vpop.trf.xlu0
      %v2372 = vpop.trf.xlu0
      %v2373 = vpop.trf.xlu0
      %v2374 = vpop.trf.xlu0
      %v2375 = vpop.trf.xlu0
      %v2376 = vpop.trf.xlu0
      %v2377 = vpop.trf.xlu0
      %v2378 = vpop.trf.xlu0
      %v2379 = vpop.trf.xlu0
      %v2380 = vpop.trf.xlu0
      %v2381 = vpop.trf.xlu0
      %v2382 = vpop.trf.xlu0
      %v2383 = vpop.trf.xlu0
      %v2384 = vpop.trf.xlu0
      %v2385 = vpop.trf.xlu0
      %s2386 = scalar_lea.vmem %s173, 192
      %2387 = vst.msk [vmem:[%s2386] sm:$0xff] %vm811, %v2146
      %2388 = vst.msk [vmem:[%s2386 + $0x8] sm:$0xff] %vm811, %v2178
      %2389 = vst.msk [vmem:[%s2386 + $0x10] sm:$0xff] %vm811, %v2210
      %2390 = vst.msk [vmem:[%s2386 + $0x18] sm:$0xff] %vm811, %v2242
      %2391 = vst.msk [vmem:[%s2386 + $0x20] sm:$0xff] %vm811, %v2274
      %2392 = vst.msk [vmem:[%s2386 + $0x28] sm:$0xff] %vm811, %v2306
      %2393 = vst.msk [vmem:[%s2386 + $0x30] sm:$0xff] %vm811, %v2338
      %2394 = vst.msk [vmem:[%s2386 + $0x38] sm:$0xff] %vm811, %v2370
      %s2395 = scalar_lea.vmem %s166, 32
      %v2396 = vld [vmem:[%s2395] sm:$0xf]
      %v2397 = vld [vmem:[%s2395 + $0x4] sm:$0xf]
      %s2398 = scalar_lea.vmem %s159, 16
      %v2399 = vld [vmem:[%s2398] sm:$0xf]
      %v2402 = vunpack.c.l.b16 %v2396
      %v2403 = vunpack.c.l.b16 %v2397
      %v2404 = vpack.c.b16 %v2403, %v2402
      %2406 = vmatpush.bf16.msra.mxu0 0
      %2407 = vmatpush.bf16.msra.mxu0 0
      %2408 = vmatpush.bf16.msra.mxu0 0
      %2409 = vmatpush.bf16.msra.mxu0 0
      %2410 = vmatpush.bf16.msra.mxu0 0
      %2411 = vmatpush.bf16.msra.mxu0 0
      %2412 = vmatpush.bf16.msra.mxu0 0
      %2413 = vmatpush.bf16.msra.mxu0 %v2404
      %2414 = vmatmul.bf16.gmra.mxu0 %v283
      %v2415 = vpop.f32.mrf.mxu0
      %v2416 = vadd.f32 0.0, %v2415
      %v2417 = vpop.f32.mrf.mxu0
      %v2418 = vadd.f32 0.0, %v2417
      %2419 = vmatmul.bf16.gmra.mxu0 %v286
      %v2420 = vpop.f32.mrf.mxu0
      %v2421 = vadd.f32 0.0, %v2420
      %v2422 = vpop.f32.mrf.mxu0
      %v2423 = vadd.f32 0.0, %v2422
      %2424 = vmatmul.bf16.gmra.mxu0 %v289
      %v2425 = vpop.f32.mrf.mxu0
      %v2426 = vadd.f32 0.0, %v2425
      %v2427 = vpop.f32.mrf.mxu0
      %v2428 = vadd.f32 0.0, %v2427
      %2429 = vmatmul.bf16.gmra.mxu0 %v292
      %v2430 = vpop.f32.mrf.mxu0
      %v2431 = vadd.f32 0.0, %v2430
      %v2432 = vpop.f32.mrf.mxu0
      %v2433 = vadd.f32 0.0, %v2432
      %2434 = vmatmul.bf16.gmra.mxu0 %v295
      %v2435 = vpop.f32.mrf.mxu0
      %v2436 = vadd.f32 0.0, %v2435
      %v2437 = vpop.f32.mrf.mxu0
      %v2438 = vadd.f32 0.0, %v2437
      %2439 = vmatmul.bf16.gmra.mxu0 %v298
      %v2440 = vpop.f32.mrf.mxu0
      %v2441 = vadd.f32 0.0, %v2440
      %v2442 = vpop.f32.mrf.mxu0
      %v2443 = vadd.f32 0.0, %v2442
      %2444 = vmatmul.bf16.gmra.mxu0 %v301
      %v2445 = vpop.f32.mrf.mxu0
      %v2446 = vadd.f32 0.0, %v2445
      %v2447 = vpop.f32.mrf.mxu0
      %v2448 = vadd.f32 0.0, %v2447
      %2449 = vmatmul.bf16.gmra.mxu0 %v304
      %v2450 = vpop.f32.mrf.mxu0
      %v2451 = vadd.f32 0.0, %v2450
      %v2452 = vpop.f32.mrf.mxu0
      %v2453 = vadd.f32 0.0, %v2452
      %2454 = vdwg.mxu0
      %v2455 = vpack.c.bf16 %v2418, %v2416
      %v2456 = vpack.c.bf16 %v2423, %v2421
      %v2457 = vpack.c.bf16 %v2428, %v2426
      %v2458 = vpack.c.bf16 %v2433, %v2431
      %v2459 = vpack.c.bf16 %v2438, %v2436
      %v2460 = vpack.c.bf16 %v2443, %v2441
      %v2461 = vpack.c.bf16 %v2448, %v2446
      %v2462 = vpack.c.bf16 %v2453, %v2451
      %2463 = vxpose.xlu0.c.b16.start [1/8] %v2455, 128
      %2464 = vxpose.xlu0.c.b16.cont [2/8] 0, 128
      %2465 = vxpose.xlu0.c.b16.cont [3/8] 0, 128
      %2466 = vxpose.xlu0.c.b16.cont [4/8] 0, 128
      %2467 = vxpose.xlu0.c.b16.cont [5/8] 0, 128
      %2468 = vxpose.xlu0.c.b16.cont [6/8] 0, 128
      %2469 = vxpose.xlu0.c.b16.cont [7/8] 0, 128
      %2470 = vxpose.xlu0.c.b16.end [8/8] 0, 128
      %v2471 = vpop.trf.xlu0
      %v2472 = vpop.trf.xlu0
      %v2473 = vpop.trf.xlu0
      %v2474 = vpop.trf.xlu0
      %v2475 = vpop.trf.xlu0
      %v2476 = vpop.trf.xlu0
      %v2477 = vpop.trf.xlu0
      %v2478 = vpop.trf.xlu0
      %2479 = vxpose.xlu0.c.b16.start [1/8] %v2456, 128
      %2480 = vxpose.xlu0.c.b16.cont [2/8] 0, 128
      %2481 = vxpose.xlu0.c.b16.cont [3/8] 0, 128
      %2482 = vxpose.xlu0.c.b16.cont [4/8] 0, 128
      %2483 = vxpose.xlu0.c.b16.cont [5/8] 0, 128
      %2484 = vxpose.xlu0.c.b16.cont [6/8] 0, 128
      %2485 = vxpose.xlu0.c.b16.cont [7/8] 0, 128
      %2486 = vxpose.xlu0.c.b16.end [8/8] 0, 128
      %v2487 = vpop.trf.xlu0
      %v2488 = vpop.trf.xlu0
      %v2489 = vpop.trf.xlu0
      %v2490 = vpop.trf.xlu0
      %v2491 = vpop.trf.xlu0
      %v2492 = vpop.trf.xlu0
      %v2493 = vpop.trf.xlu0
      %v2494 = vpop.trf.xlu0
      %2495 = vxpose.xlu0.c.b16.start [1/8] %v2457, 128
      %2496 = vxpose.xlu0.c.b16.cont [2/8] 0, 128
      %2497 = vxpose.xlu0.c.b16.cont [3/8] 0, 128
      %2498 = vxpose.xlu0.c.b16.cont [4/8] 0, 128
      %2499 = vxpose.xlu0.c.b16.cont [5/8] 0, 128
      %2500 = vxpose.xlu0.c.b16.cont [6/8] 0, 128
      %2501 = vxpose.xlu0.c.b16.cont [7/8] 0, 128
      %2502 = vxpose.xlu0.c.b16.end [8/8] 0, 128
      %v2503 = vpop.trf.xlu0
      %v2504 = vpop.trf.xlu0
      %v2505 = vpop.trf.xlu0
      %v2506 = vpop.trf.xlu0
      %v2507 = vpop.trf.xlu0
      %v2508 = vpop.trf.xlu0
      %v2509 = vpop.trf.xlu0
      %v2510 = vpop.trf.xlu0
      %2511 = vxpose.xlu0.c.b16.start [1/8] %v2458, 128
      %2512 = vxpose.xlu0.c.b16.cont [2/8] 0, 128
      %2513 = vxpose.xlu0.c.b16.cont [3/8] 0, 128
      %2514 = vxpose.xlu0.c.b16.cont [4/8] 0, 128
      %2515 = vxpose.xlu0.c.b16.cont [5/8] 0, 128
      %2516 = vxpose.xlu0.c.b16.cont [6/8] 0, 128
      %2517 = vxpose.xlu0.c.b16.cont [7/8] 0, 128
      %2518 = vxpose.xlu0.c.b16.end [8/8] 0, 128
      %v2519 = vpop.trf.xlu0
      %v2520 = vpop.trf.xlu0
      %v2521 = vpop.trf.xlu0
      %v2522 = vpop.trf.xlu0
      %v2523 = vpop.trf.xlu0
      %v2524 = vpop.trf.xlu0
      %v2525 = vpop.trf.xlu0
      %v2526 = vpop.trf.xlu0
      %2527 = vxpose.xlu0.c.b16.start [1/8] %v2459, 128
      %2528 = vxpose.xlu0.c.b16.cont [2/8] 0, 128
      %2529 = vxpose.xlu0.c.b16.cont [3/8] 0, 128
      %2530 = vxpose.xlu0.c.b16.cont [4/8] 0, 128
      %2531 = vxpose.xlu0.c.b16.cont [5/8] 0, 128
      %2532 = vxpose.xlu0.c.b16.cont [6/8] 0, 128
      %2533 = vxpose.xlu0.c.b16.cont [7/8] 0, 128
      %2534 = vxpose.xlu0.c.b16.end [8/8] 0, 128
      %v2535 = vpop.trf.xlu0
      %v2536 = vpop.trf.xlu0
      %v2537 = vpop.trf.xlu0
      %v2538 = vpop.trf.xlu0
      %v2539 = vpop.trf.xlu0
      %v2540 = vpop.trf.xlu0
      %v2541 = vpop.trf.xlu0
      %v2542 = vpop.trf.xlu0
      %2543 = vxpose.xlu0.c.b16.start [1/8] %v2460, 128
      %2544 = vxpose.xlu0.c.b16.cont [2/8] 0, 128
      %2545 = vxpose.xlu0.c.b16.cont [3/8] 0, 128
      %2546 = vxpose.xlu0.c.b16.cont [4/8] 0, 128
      %2547 = vxpose.xlu0.c.b16.cont [5/8] 0, 128
      %2548 = vxpose.xlu0.c.b16.cont [6/8] 0, 128
      %2549 = vxpose.xlu0.c.b16.cont [7/8] 0, 128
      %2550 = vxpose.xlu0.c.b16.end [8/8] 0, 128
      %v2551 = vpop.trf.xlu0
      %v2552 = vpop.trf.xlu0
      %v2553 = vpop.trf.xlu0
      %v2554 = vpop.trf.xlu0
      %v2555 = vpop.trf.xlu0
      %v2556 = vpop.trf.xlu0
      %v2557 = vpop.trf.xlu0
      %v2558 = vpop.trf.xlu0
      %2559 = vxpose.xlu0.c.b16.start [1/8] %v2461, 128
      %2560 = vxpose.xlu0.c.b16.cont [2/8] 0, 128
      %2561 = vxpose.xlu0.c.b16.cont [3/8] 0, 128
      %2562 = vxpose.xlu0.c.b16.cont [4/8] 0, 128
      %2563 = vxpose.xlu0.c.b16.cont [5/8] 0, 128
      %2564 = vxpose.xlu0.c.b16.cont [6/8] 0, 128
      %2565 = vxpose.xlu0.c.b16.cont [7/8] 0, 128
      %2566 = vxpose.xlu0.c.b16.end [8/8] 0, 128
      %v2567 = vpop.trf.xlu0
      %v2568 = vpop.trf.xlu0
      %v2569 = vpop.trf.xlu0
      %v2570 = vpop.trf.xlu0
      %v2571 = vpop.trf.xlu0
      %v2572 = vpop.trf.xlu0
      %v2573 = vpop.trf.xlu0
      %v2574 = vpop.trf.xlu0
      %2575 = vxpose.xlu0.c.b16.start [1/8] %v2462, 128
      %2576 = vxpose.xlu0.c.b16.cont [2/8] 0, 128
      %2577 = vxpose.xlu0.c.b16.cont [3/8] 0, 128
      %2578 = vxpose.xlu0.c.b16.cont [4/8] 0, 128
      %2579 = vxpose.xlu0.c.b16.cont [5/8] 0, 128
      %2580 = vxpose.xlu0.c.b16.cont [6/8] 0, 128
      %2581 = vxpose.xlu0.c.b16.cont [7/8] 0, 128
      %2582 = vxpose.xlu0.c.b16.end [8/8] 0, 128
      %v2583 = vpop.trf.xlu0
      %v2584 = vpop.trf.xlu0
      %v2585 = vpop.trf.xlu0
      %v2586 = vpop.trf.xlu0
      %v2587 = vpop.trf.xlu0
      %v2588 = vpop.trf.xlu0
      %v2589 = vpop.trf.xlu0
      %v2590 = vpop.trf.xlu0
      %v2599 = vunpack.c.l.b16 %v2471
      %v2600 = vunpack.c.l.b16 %v2487
      %v2601 = vunpack.c.l.b16 %v2503
      %v2602 = vunpack.c.l.b16 %v2519
      %v2603 = vunpack.c.l.b16 %v2535
      %v2604 = vunpack.c.l.b16 %v2551
      %v2605 = vunpack.c.l.b16 %v2567
      %v2606 = vunpack.c.l.b16 %v2583
      %v2607 = vpack.c.b16 %v2600, %v2599
      %v2608 = vpack.c.b16 %v2602, %v2601
      %v2609 = vpack.c.b16 %v2604, %v2603
      %v2610 = vpack.c.b16 %v2606, %v2605
      %v2612 = vsel %vm281, %v2607, 0
      %v2615 = vsel %vm281, %v2608, 0
      %v2618 = vsel %vm281, %v2609, 0
      %v2621 = vsel %vm281, %v2610, 0
      %v2624 = vsel %vm281, %v2399, 0
      %2626 = vmatpush.bf16.xpose.msra.mxu0 0
      %2627 = vmatpush.bf16.xpose.msra.mxu0 0
      %2628 = vmatpush.bf16.xpose.msra.mxu0 0
      %2629 = vmatpush.bf16.xpose.msra.mxu0 0
      %2630 = vmatpush.bf16.xpose.msra.mxu0 0
      %2631 = vmatpush.bf16.xpose.msra.mxu0 0
      %2632 = vmatpush.bf16.xpose.msra.mxu0 0
      %2633 = vmatpush.bf16.xpose.msra.mxu0 %v2624
      %2634 = vmatmul.bf16.gmra.mxu0 %v2612
      %v2635 = vpop.f32.mrf.mxu0
      %v2636 = vadd.f32 0.0, %v2635
      %v2637 = vpop.f32.mrf.mxu0
      %v2638 = vadd.f32 0.0, %v2637
      %2639 = vmatmul.bf16.gmra.mxu0 %v2615
      %v2640 = vpop.f32.mrf.mxu0
      %v2641 = vadd.f32 0.0, %v2640
      %v2642 = vpop.f32.mrf.mxu0
      %v2643 = vadd.f32 0.0, %v2642
      %2644 = vmatmul.bf16.gmra.mxu0 %v2618
      %v2645 = vpop.f32.mrf.mxu0
      %v2646 = vadd.f32 0.0, %v2645
      %v2647 = vpop.f32.mrf.mxu0
      %v2648 = vadd.f32 0.0, %v2647
      %2649 = vmatmul.bf16.gmra.mxu0 %v2621
      %v2650 = vpop.f32.mrf.mxu0
      %v2651 = vadd.f32 0.0, %v2650
      %v2652 = vpop.f32.mrf.mxu0
      %v2653 = vadd.f32 0.0, %v2652
      %2654 = vdwg.mxu0
      %2655 = vxpose.xlu0.b32.start [1/16] %v2636, 128
      %2656 = vxpose.xlu0.b32.cont [2/16] 0.0, 128
      %2657 = vxpose.xlu0.b32.cont [3/16] 0.0, 128
      %2658 = vxpose.xlu0.b32.cont [4/16] 0.0, 128
      %2659 = vxpose.xlu0.b32.cont [5/16] 0.0, 128
      %2660 = vxpose.xlu0.b32.cont [6/16] 0.0, 128
      %2661 = vxpose.xlu0.b32.cont [7/16] 0.0, 128
      %2662 = vxpose.xlu0.b32.cont [8/16] 0.0, 128
      %2663 = vxpose.xlu0.b32.cont [9/16] 0.0, 128
      %2664 = vxpose.xlu0.b32.cont [10/16] 0.0, 128
      %2665 = vxpose.xlu0.b32.cont [11/16] 0.0, 128
      %2666 = vxpose.xlu0.b32.cont [12/16] 0.0, 128
      %2667 = vxpose.xlu0.b32.cont [13/16] 0.0, 128
      %2668 = vxpose.xlu0.b32.cont [14/16] 0.0, 128
      %2669 = vxpose.xlu0.b32.cont [15/16] 0.0, 128
      %2670 = vxpose.xlu0.b32.end [16/16] 0.0, 128
      %v2671 = vpop.trf.xlu0
      %v2672 = vpop.trf.xlu0
      %v2673 = vpop.trf.xlu0
      %v2674 = vpop.trf.xlu0
      %v2675 = vpop.trf.xlu0
      %v2676 = vpop.trf.xlu0
      %v2677 = vpop.trf.xlu0
      %v2678 = vpop.trf.xlu0
      %v2679 = vpop.trf.xlu0
      %v2680 = vpop.trf.xlu0
      %v2681 = vpop.trf.xlu0
      %v2682 = vpop.trf.xlu0
      %v2683 = vpop.trf.xlu0
      %v2684 = vpop.trf.xlu0
      %v2685 = vpop.trf.xlu0
      %v2686 = vpop.trf.xlu0
      %2687 = vxpose.xlu0.b32.start [1/16] %v2638, 128
      %2688 = vxpose.xlu0.b32.cont [2/16] 0.0, 128
      %2689 = vxpose.xlu0.b32.cont [3/16] 0.0, 128
      %2690 = vxpose.xlu0.b32.cont [4/16] 0.0, 128
      %2691 = vxpose.xlu0.b32.cont [5/16] 0.0, 128
      %2692 = vxpose.xlu0.b32.cont [6/16] 0.0, 128
      %2693 = vxpose.xlu0.b32.cont [7/16] 0.0, 128
      %2694 = vxpose.xlu0.b32.cont [8/16] 0.0, 128
      %2695 = vxpose.xlu0.b32.cont [9/16] 0.0, 128
      %2696 = vxpose.xlu0.b32.cont [10/16] 0.0, 128
      %2697 = vxpose.xlu0.b32.cont [11/16] 0.0, 128
      %2698 = vxpose.xlu0.b32.cont [12/16] 0.0, 128
      %2699 = vxpose.xlu0.b32.cont [13/16] 0.0, 128
      %2700 = vxpose.xlu0.b32.cont [14/16] 0.0, 128
      %2701 = vxpose.xlu0.b32.cont [15/16] 0.0, 128
      %2702 = vxpose.xlu0.b32.end [16/16] 0.0, 128
      %v2703 = vpop.trf.xlu0
      %v2704 = vpop.trf.xlu0
      %v2705 = vpop.trf.xlu0
      %v2706 = vpop.trf.xlu0
      %v2707 = vpop.trf.xlu0
      %v2708 = vpop.trf.xlu0
      %v2709 = vpop.trf.xlu0
      %v2710 = vpop.trf.xlu0
      %v2711 = vpop.trf.xlu0
      %v2712 = vpop.trf.xlu0
      %v2713 = vpop.trf.xlu0
      %v2714 = vpop.trf.xlu0
      %v2715 = vpop.trf.xlu0
      %v2716 = vpop.trf.xlu0
      %v2717 = vpop.trf.xlu0
      %v2718 = vpop.trf.xlu0
      %2719 = vxpose.xlu0.b32.start [1/16] %v2641, 128
      %2720 = vxpose.xlu0.b32.cont [2/16] 0.0, 128
      %2721 = vxpose.xlu0.b32.cont [3/16] 0.0, 128
      %2722 = vxpose.xlu0.b32.cont [4/16] 0.0, 128
      %2723 = vxpose.xlu0.b32.cont [5/16] 0.0, 128
      %2724 = vxpose.xlu0.b32.cont [6/16] 0.0, 128
      %2725 = vxpose.xlu0.b32.cont [7/16] 0.0, 128
      %2726 = vxpose.xlu0.b32.cont [8/16] 0.0, 128
      %2727 = vxpose.xlu0.b32.cont [9/16] 0.0, 128
      %2728 = vxpose.xlu0.b32.cont [10/16] 0.0, 128
      %2729 = vxpose.xlu0.b32.cont [11/16] 0.0, 128
      %2730 = vxpose.xlu0.b32.cont [12/16] 0.0, 128
      %2731 = vxpose.xlu0.b32.cont [13/16] 0.0, 128
      %2732 = vxpose.xlu0.b32.cont [14/16] 0.0, 128
      %2733 = vxpose.xlu0.b32.cont [15/16] 0.0, 128
      %2734 = vxpose.xlu0.b32.end [16/16] 0.0, 128
      %v2735 = vpop.trf.xlu0
      %v2736 = vpop.trf.xlu0
      %v2737 = vpop.trf.xlu0
      %v2738 = vpop.trf.xlu0
      %v2739 = vpop.trf.xlu0
      %v2740 = vpop.trf.xlu0
      %v2741 = vpop.trf.xlu0
      %v2742 = vpop.trf.xlu0
      %v2743 = vpop.trf.xlu0
      %v2744 = vpop.trf.xlu0
      %v2745 = vpop.trf.xlu0
      %v2746 = vpop.trf.xlu0
      %v2747 = vpop.trf.xlu0
      %v2748 = vpop.trf.xlu0
      %v2749 = vpop.trf.xlu0
      %v2750 = vpop.trf.xlu0
      %2751 = vxpose.xlu0.b32.start [1/16] %v2643, 128
      %2752 = vxpose.xlu0.b32.cont [2/16] 0.0, 128
      %2753 = vxpose.xlu0.b32.cont [3/16] 0.0, 128
      %2754 = vxpose.xlu0.b32.cont [4/16] 0.0, 128
      %2755 = vxpose.xlu0.b32.cont [5/16] 0.0, 128
      %2756 = vxpose.xlu0.b32.cont [6/16] 0.0, 128
      %2757 = vxpose.xlu0.b32.cont [7/16] 0.0, 128
      %2758 = vxpose.xlu0.b32.cont [8/16] 0.0, 128
      %2759 = vxpose.xlu0.b32.cont [9/16] 0.0, 128
      %2760 = vxpose.xlu0.b32.cont [10/16] 0.0, 128
      %2761 = vxpose.xlu0.b32.cont [11/16] 0.0, 128
      %2762 = vxpose.xlu0.b32.cont [12/16] 0.0, 128
      %2763 = vxpose.xlu0.b32.cont [13/16] 0.0, 128
      %2764 = vxpose.xlu0.b32.cont [14/16] 0.0, 128
      %2765 = vxpose.xlu0.b32.cont [15/16] 0.0, 128
      %2766 = vxpose.xlu0.b32.end [16/16] 0.0, 128
      %v2767 = vpop.trf.xlu0
      %v2768 = vpop.trf.xlu0
      %v2769 = vpop.trf.xlu0
      %v2770 = vpop.trf.xlu0
      %v2771 = vpop.trf.xlu0
      %v2772 = vpop.trf.xlu0
      %v2773 = vpop.trf.xlu0
      %v2774 = vpop.trf.xlu0
      %v2775 = vpop.trf.xlu0
      %v2776 = vpop.trf.xlu0
      %v2777 = vpop.trf.xlu0
      %v2778 = vpop.trf.xlu0
      %v2779 = vpop.trf.xlu0
      %v2780 = vpop.trf.xlu0
      %v2781 = vpop.trf.xlu0
      %v2782 = vpop.trf.xlu0
      %2783 = vxpose.xlu0.b32.start [1/16] %v2646, 128
      %2784 = vxpose.xlu0.b32.cont [2/16] 0.0, 128
      %2785 = vxpose.xlu0.b32.cont [3/16] 0.0, 128
      %2786 = vxpose.xlu0.b32.cont [4/16] 0.0, 128
      %2787 = vxpose.xlu0.b32.cont [5/16] 0.0, 128
      %2788 = vxpose.xlu0.b32.cont [6/16] 0.0, 128
      %2789 = vxpose.xlu0.b32.cont [7/16] 0.0, 128
      %2790 = vxpose.xlu0.b32.cont [8/16] 0.0, 128
      %2791 = vxpose.xlu0.b32.cont [9/16] 0.0, 128
      %2792 = vxpose.xlu0.b32.cont [10/16] 0.0, 128
      %2793 = vxpose.xlu0.b32.cont [11/16] 0.0, 128
      %2794 = vxpose.xlu0.b32.cont [12/16] 0.0, 128
      %2795 = vxpose.xlu0.b32.cont [13/16] 0.0, 128
      %2796 = vxpose.xlu0.b32.cont [14/16] 0.0, 128
      %2797 = vxpose.xlu0.b32.cont [15/16] 0.0, 128
      %2798 = vxpose.xlu0.b32.end [16/16] 0.0, 128
      %v2799 = vpop.trf.xlu0
      %v2800 = vpop.trf.xlu0
      %v2801 = vpop.trf.xlu0
      %v2802 = vpop.trf.xlu0
      %v2803 = vpop.trf.xlu0
      %v2804 = vpop.trf.xlu0
      %v2805 = vpop.trf.xlu0
      %v2806 = vpop.trf.xlu0
      %v2807 = vpop.trf.xlu0
      %v2808 = vpop.trf.xlu0
      %v2809 = vpop.trf.xlu0
      %v2810 = vpop.trf.xlu0
      %v2811 = vpop.trf.xlu0
      %v2812 = vpop.trf.xlu0
      %v2813 = vpop.trf.xlu0
      %v2814 = vpop.trf.xlu0
      %2815 = vxpose.xlu0.b32.start [1/16] %v2648, 128
      %2816 = vxpose.xlu0.b32.cont [2/16] 0.0, 128
      %2817 = vxpose.xlu0.b32.cont [3/16] 0.0, 128
      %2818 = vxpose.xlu0.b32.cont [4/16] 0.0, 128
      %2819 = vxpose.xlu0.b32.cont [5/16] 0.0, 128
      %2820 = vxpose.xlu0.b32.cont [6/16] 0.0, 128
      %2821 = vxpose.xlu0.b32.cont [7/16] 0.0, 128
      %2822 = vxpose.xlu0.b32.cont [8/16] 0.0, 128
      %2823 = vxpose.xlu0.b32.cont [9/16] 0.0, 128
      %2824 = vxpose.xlu0.b32.cont [10/16] 0.0, 128
      %2825 = vxpose.xlu0.b32.cont [11/16] 0.0, 128
      %2826 = vxpose.xlu0.b32.cont [12/16] 0.0, 128
      %2827 = vxpose.xlu0.b32.cont [13/16] 0.0, 128
      %2828 = vxpose.xlu0.b32.cont [14/16] 0.0, 128
      %2829 = vxpose.xlu0.b32.cont [15/16] 0.0, 128
      %2830 = vxpose.xlu0.b32.end [16/16] 0.0, 128
      %v2831 = vpop.trf.xlu0
      %v2832 = vpop.trf.xlu0
      %v2833 = vpop.trf.xlu0
      %v2834 = vpop.trf.xlu0
      %v2835 = vpop.trf.xlu0
      %v2836 = vpop.trf.xlu0
      %v2837 = vpop.trf.xlu0
      %v2838 = vpop.trf.xlu0
      %v2839 = vpop.trf.xlu0
      %v2840 = vpop.trf.xlu0
      %v2841 = vpop.trf.xlu0
      %v2842 = vpop.trf.xlu0
      %v2843 = vpop.trf.xlu0
      %v2844 = vpop.trf.xlu0
      %v2845 = vpop.trf.xlu0
      %v2846 = vpop.trf.xlu0
      %2847 = vxpose.xlu0.b32.start [1/16] %v2651, 128
      %2848 = vxpose.xlu0.b32.cont [2/16] 0.0, 128
      %2849 = vxpose.xlu0.b32.cont [3/16] 0.0, 128
      %2850 = vxpose.xlu0.b32.cont [4/16] 0.0, 128
      %2851 = vxpose.xlu0.b32.cont [5/16] 0.0, 128
      %2852 = vxpose.xlu0.b32.cont [6/16] 0.0, 128
      %2853 = vxpose.xlu0.b32.cont [7/16] 0.0, 128
      %2854 = vxpose.xlu0.b32.cont [8/16] 0.0, 128
      %2855 = vxpose.xlu0.b32.cont [9/16] 0.0, 128
      %2856 = vxpose.xlu0.b32.cont [10/16] 0.0, 128
      %2857 = vxpose.xlu0.b32.cont [11/16] 0.0, 128
      %2858 = vxpose.xlu0.b32.cont [12/16] 0.0, 128
      %2859 = vxpose.xlu0.b32.cont [13/16] 0.0, 128
      %2860 = vxpose.xlu0.b32.cont [14/16] 0.0, 128
      %2861 = vxpose.xlu0.b32.cont [15/16] 0.0, 128
      %2862 = vxpose.xlu0.b32.end [16/16] 0.0, 128
      %v2863 = vpop.trf.xlu0
      %v2864 = vpop.trf.xlu0
      %v2865 = vpop.trf.xlu0
      %v2866 = vpop.trf.xlu0
      %v2867 = vpop.trf.xlu0
      %v2868 = vpop.trf.xlu0
      %v2869 = vpop.trf.xlu0
      %v2870 = vpop.trf.xlu0
      %v2871 = vpop.trf.xlu0
      %v2872 = vpop.trf.xlu0
      %v2873 = vpop.trf.xlu0
      %v2874 = vpop.trf.xlu0
      %v2875 = vpop.trf.xlu0
      %v2876 = vpop.trf.xlu0
      %v2877 = vpop.trf.xlu0
      %v2878 = vpop.trf.xlu0
      %2879 = vxpose.xlu0.b32.start [1/16] %v2653, 128
      %2880 = vxpose.xlu0.b32.cont [2/16] 0.0, 128
      %2881 = vxpose.xlu0.b32.cont [3/16] 0.0, 128
      %2882 = vxpose.xlu0.b32.cont [4/16] 0.0, 128
      %2883 = vxpose.xlu0.b32.cont [5/16] 0.0, 128
      %2884 = vxpose.xlu0.b32.cont [6/16] 0.0, 128
      %2885 = vxpose.xlu0.b32.cont [7/16] 0.0, 128
      %2886 = vxpose.xlu0.b32.cont [8/16] 0.0, 128
      %2887 = vxpose.xlu0.b32.cont [9/16] 0.0, 128
      %2888 = vxpose.xlu0.b32.cont [10/16] 0.0, 128
      %2889 = vxpose.xlu0.b32.cont [11/16] 0.0, 128
      %2890 = vxpose.xlu0.b32.cont [12/16] 0.0, 128
      %2891 = vxpose.xlu0.b32.cont [13/16] 0.0, 128
      %2892 = vxpose.xlu0.b32.cont [14/16] 0.0, 128
      %2893 = vxpose.xlu0.b32.cont [15/16] 0.0, 128
      %2894 = vxpose.xlu0.b32.end [16/16] 0.0, 128
      %v2895 = vpop.trf.xlu0
      %v2896 = vpop.trf.xlu0
      %v2897 = vpop.trf.xlu0
      %v2898 = vpop.trf.xlu0
      %v2899 = vpop.trf.xlu0
      %v2900 = vpop.trf.xlu0
      %v2901 = vpop.trf.xlu0
      %v2902 = vpop.trf.xlu0
      %v2903 = vpop.trf.xlu0
      %v2904 = vpop.trf.xlu0
      %v2905 = vpop.trf.xlu0
      %v2906 = vpop.trf.xlu0
      %v2907 = vpop.trf.xlu0
      %v2908 = vpop.trf.xlu0
      %v2909 = vpop.trf.xlu0
      %v2910 = vpop.trf.xlu0
      %s2911 = scalar_lea.vmem %s173, 256
      %2912 = vst.msk [vmem:[%s2911] sm:$0xff] %vm811, %v2671
      %2913 = vst.msk [vmem:[%s2911 + $0x8] sm:$0xff] %vm811, %v2703
      %2914 = vst.msk [vmem:[%s2911 + $0x10] sm:$0xff] %vm811, %v2735
      %2915 = vst.msk [vmem:[%s2911 + $0x18] sm:$0xff] %vm811, %v2767
      %2916 = vst.msk [vmem:[%s2911 + $0x20] sm:$0xff] %vm811, %v2799
      %2917 = vst.msk [vmem:[%s2911 + $0x28] sm:$0xff] %vm811, %v2831
      %2918 = vst.msk [vmem:[%s2911 + $0x30] sm:$0xff] %vm811, %v2863
      %2919 = vst.msk [vmem:[%s2911 + $0x38] sm:$0xff] %vm811, %v2895
      %s2920 = smul.u32 5, %s14
      %p2921 = scmp.lt.s32.totalorder %s2920, 9
      %s2922 = scalar_select %p2921, %s2920, 9
      %s2923 = smul.addr %s2922, 8
      %s2924 = smul.addr %s2923, 8
      %s2925 = scalar_lea.vmem %s3, %s2924
      // Predicated region
      $region52: #{tpu_custom_call.1} parent=27 // pred_check
        %p2926 = pneg %p84
      $region53: #{tpu_custom_call.1} parent=27 // pred_check_branch
        %2928 = sbr.rel (%p2926) target = $region55
      $region54: #{tpu_custom_call.1} parent=27 // pred_region
        %s2929 = smul.u32 5, %s14
      $region55: #{tpu_custom_call.1} parent=27 // pred_fallthru
        _
    $region28: #{tpu_custom_call.1} parent=5 // pred_fallthru
      _
    %p2930 = scmp.le.s32.totalorder 2, %s9
    // Predicated region
    $region56: #{tpu_custom_call.1} parent=5 // pred_check
      %p2931 = pneg %p2930
    $region57: #{tpu_custom_call.1} parent=5 // pred_check_branch
      %2933 = sbr.rel (%p2931) target = $region59
    $region58: #{tpu_custom_call.1} parent=5 // pred_region
      %s2934 = ssub.s32 %s9, 2
      // Predicated region
      $region60: #{tpu_custom_call.1} parent=58 // pred_check
        %p2935 = pneg %p90
      $region61: #{tpu_custom_call.1} parent=58 // pred_check_branch
        %2937 = sbr.rel (%p2935) target = $region63
      $region62: #{tpu_custom_call.1} parent=58 // pred_region
        %s2938 = smul.u32 5, %s15
        %p2939 = scmp.lt.s32.totalorder %s2938, 9
        %s2940 = scalar_select %p2939, %s2938, 9
        %s2941 = smul.addr %s2940, 8
        %s2942 = smul.addr %s2941, 8
        %s2943 = scalar_lea.vmem %s3, %s2942
      $region63: #{tpu_custom_call.1} parent=58 // pred_fallthru
        _
    $region59: #{tpu_custom_call.1} parent=5 // pred_fallthru
      _
  $region6: #{tpu_custom_call.1} parent=0 // loop_footer
    %s13 = sadd.s32 1, %s9
  $region7: #{tpu_custom_call.1} parent=0 // loop_footer_branch
    %8 = sbr.rel target = $region3
  $region8: #{tpu_custom_call.1} parent=0 // loop_exit
    _
  %2944 = vsyncmov [#allocation3]
  %s2945 = vpop.sfrf %2944
  %p2946 = scmp.eq.s32.totalorder %s2945, 0
  %p2947 = pneg %p2946
  %2949 = shalt.err (%p2947)

</llo_original>
